<compile_context>
chip_gen: v6e
topology: v6e:2x2x1
jax: 0.10.0
libtpu: 0.0.40
codegen_flags: <defaults>
</compile_context>

<pallas_src>
import functools
import jax
import jax.numpy as jnp
from jax.experimental import pallas as pl
from jax.experimental.pallas import tpu as pltpu


def _round_up(x, m):
    return -(-x // m) * m


# ----------------------------------------------------------------------------
# Pallas kernels
# ----------------------------------------------------------------------------
def _mm_kernel(a_ref, b_ref, bias_ref, o_ref, *, relu):
    r = jnp.dot(a_ref[...], b_ref[...], preferred_element_type=jnp.float32)
    r = r + bias_ref[...]
    if relu:
        r = jnp.maximum(r, 0.0)
    o_ref[...] = r.astype(o_ref.dtype)


def _mm_res_kernel(a_ref, b_ref, bias_ref, res_ref, o_ref, *, relu):
    r = jnp.dot(a_ref[...], b_ref[...], preferred_element_type=jnp.float32)
    r = r + bias_ref[...] + res_ref[...]
    if relu:
        r = jnp.maximum(r, 0.0)
    o_ref[...] = r.astype(o_ref.dtype)


def _max3_kernel(a_ref, b_ref, c_ref, o_ref):
    o_ref[...] = jnp.maximum(jnp.maximum(a_ref[...], b_ref[...]), c_ref[...])


def _bilerp_kernel(v00_ref, v01_ref, v10_ref, v11_ref, wh_ref, ww_ref, o_ref):
    wh = wh_ref[...]          # (tr, 1)  - broadcast over lanes
    ww = ww_ref[...]          # (1, L)   - broadcast over sublanes
    v00 = v00_ref[...]
    v01 = v01_ref[...]
    v10 = v10_ref[...]
    v11 = v11_ref[...]
    top = v00 + ww * (v01 - v00)
    bot = v10 + ww * (v11 - v10)
    o_ref[...] = top + wh * (bot - top)


# ----------------------------------------------------------------------------
# Matmul wrapper: o = act(a @ w + bias [+ residual]) on the MXU
# ----------------------------------------------------------------------------
def _choose_tiles(M, Np):
    tn = 256 if Np % 256 == 0 else 128
    n_tiles_n = Np // tn
    if n_tiles_n == 1 and M > 16:
        tm = _round_up(-(-M // 2), 16)   # split M so >=2 parallel tiles (v7x dual TC)
    else:
        tm = _round_up(max(M, 16), 16)
    tm = min(tm, 256)
    return tm, tn


def matmul_bias_act(a, wm_p, bias_p, n_valid, residual=None, relu=False):
    """a: (M, K) f32 activations; wm_p: (Kp, Np) bf16 prepared weights;
    bias_p: (1, Np) f32. Returns (M, n_valid) f32."""
    M, K = a.shape
    Kp, Np = wm_p.shape
    tm, tn = _choose_tiles(M, Np)
    Mp = _round_up(M, tm)

    a_p = jnp.pad(a, ((0, Mp - M), (0, Kp - K))).astype(jnp.bfloat16)

    in_specs = [
        pl.BlockSpec((tm, Kp), lambda i, j: (i, 0)),
        pl.BlockSpec((Kp, tn), lambda i, j: (0, j)),
        pl.BlockSpec((1, tn), lambda i, j: (0, j)),
    ]
    args = [a_p, wm_p, bias_p]
    if residual is not None:
        res_p = jnp.pad(residual.astype(jnp.float32),
                        ((0, Mp - M), (0, Np - residual.shape[1])))
        in_specs.append(pl.BlockSpec((tm, tn), lambda i, j: (i, j)))
        args.append(res_p)
        kernel = functools.partial(_mm_res_kernel, relu=relu)
    else:
        kernel = functools.partial(_mm_kernel, relu=relu)

    out = pl.pallas_call(
        kernel,
        out_shape=jax.ShapeDtypeStruct((Mp, Np), jnp.float32),
        grid=(Mp // tm, Np // tn),
        in_specs=in_specs,
        out_specs=pl.BlockSpec((tm, tn), lambda i, j: (i, j)),
        compiler_params=pltpu.CompilerParams(
            dimension_semantics=("parallel", "parallel")),
    )(*args)
    return out[:M, :n_valid]


# ----------------------------------------------------------------------------
# Convolution = im2col (glue) + fused MXU matmul
# ----------------------------------------------------------------------------
# TODO(synk): for kh*kw > 1 the patch matrix is still materialized in HBM by the
# glue below (9x / 49x blowup at large resolutions); fusing the tap loop into the
# matmul kernel (shifted in-VMEM dots) would remove it.
def _extract_patches(x, kh, kw, stride, pad):
    B, H, W, C = x.shape
    xp = jnp.pad(x, ((0, 0), (pad, pad), (pad, pad), (0, 0)))
    Ho = (H + 2 * pad - kh) // stride + 1
    Wo = (W + 2 * pad - kw) // stride + 1
    cols = []
    for i in range(kh):
        for j in range(kw):
            cols.append(xp[:, i:i + stride * Ho:stride,
                           j:j + stride * Wo:stride, :])
    patches = jnp.concatenate(cols, axis=-1)
    return patches.reshape(B * Ho * Wo, kh * kw * C), (B, Ho, Wo)


def conv_prepared(x, wm_p, bias_p, n_out, kh, kw, stride, pad,
                  relu=False, residual=None):
    B, H, W, C = x.shape
    if kh == 1 and kw == 1 and stride == 1 and pad == 0:
        a = x.reshape(B * H * W, C)
        Ho, Wo = H, W
    else:
        a, (B, Ho, Wo) = _extract_patches(x, kh, kw, stride, pad)
    res_flat = None
    if residual is not None:
        res_flat = residual.reshape(B * Ho * Wo, n_out)
    out = matmul_bias_act(a, wm_p, bias_p, n_out, residual=res_flat, relu=relu)
    return out.reshape(B, Ho, Wo, n_out)


# ----------------------------------------------------------------------------
# Elementwise helpers (tiled, lane-dense)
# ----------------------------------------------------------------------------
def _ew_tile_rows(M, L):
    te = _round_up(max(-(-M // 2), 8), 8)         # >=2 row tiles when possible
    cap = max(8, ((1 << 18) // (4 * L)) // 8 * 8)  # ~256 KiB per input block
    return max(8, min(te, cap, 512))


def _max3_2d(a, b, c):
    M, L = a.shape
    Lp = _round_up(L, 128)
    te = _ew_tile_rows(M, Lp)
    Mp = _round_up(M, te)

    def prep(t):
        return jnp.pad(t, ((0, Mp - M), (0, Lp - L)))

    out = pl.pallas_call(
        _max3_kernel,
        out_shape=jax.ShapeDtypeStruct((Mp, Lp), jnp.float32),
        grid=(Mp // te,),
        in_specs=[pl.BlockSpec((te, Lp), lambda i: (i, 0))] * 3,
        out_specs=pl.BlockSpec((te, Lp), lambda i: (i, 0)),
        compiler_params=pltpu.CompilerParams(dimension_semantics=("parallel",)),
    )(prep(a), prep(b), prep(c))
    return out[:M, :L]


def maxpool3x3_s2(x):
    """MaxPool2d(kernel=3, stride=2, padding=1), separable (W pass then H pass)."""
    B, H, W, C = x.shape
    Ho = (H + 2 - 3) // 2 + 1
    Wo = (W + 2 - 3) // 2 + 1
    xp = jnp.pad(x, ((0, 0), (1, 1), (1, 1), (0, 0)), constant_values=-jnp.inf)
    # W pass: max over the 3 taps along W (stride 2); lane-dense (rows, Wo*C)
    ws = [xp[:, :, j:j + 2 * Wo:2, :].reshape(B * (H + 2), Wo * C)
          for j in range(3)]
    m1 = _max3_2d(ws[0], ws[1], ws[2]).reshape(B, H + 2, Wo, C)
    # H pass: max over the 3 taps along H (stride 2)
    hs = [m1[:, i:i + 2 * Ho:2, :, :].reshape(B * Ho, Wo * C) for i in range(3)]
    out = _max3_2d(hs[0], hs[1], hs[2]).reshape(B, Ho, Wo, C)
    return out


def bilinear_upsample(x, out_size):
    """F.interpolate(mode='bilinear', align_corners=False).
    Corner gathers in glue; 3-mix lerp in a tiled Pallas kernel with small
    per-row / per-lane weight vectors (no full-size weight arrays)."""
    B, H, W, C = x.shape
    OH, OW = out_size

    def src_idx(osz, isz):
        scale = isz / osz
        o = jnp.arange(osz, dtype=jnp.float32)
        src = jnp.maximum((o + 0.5) * scale - 0.5, 0.0)
        i0 = jnp.minimum(jnp.floor(src).astype(jnp.int32), isz - 1)
        i1 = jnp.minimum(i0 + 1, isz - 1)
        lam = src - i0.astype(jnp.float32)
        return i0, i1, lam

    h0, h1, lh = src_idx(OH, H)
    w0, w1, lw = src_idx(OW, W)

    x_h0 = x[:, h0]
    x_h1 = x[:, h1]
    v00 = x_h0[:, :, w0]
    v01 = x_h0[:, :, w1]
    v10 = x_h1[:, :, w0]
    v11 = x_h1[:, :, w1]

    # lane-dense layout: rows = (b, oh), lanes = (ow, c)
    M = B * OH
    L = OW * C
    Lp = _round_up(L, 128)
    te = _ew_tile_rows(M, Lp)
    Mp = _round_up(M, te)

    def prep(t):
        return jnp.pad(t.reshape(M, L), ((0, Mp - M), (0, Lp - L)))

    wh_col = jnp.pad(jnp.broadcast_to(lh[None, :], (B, OH)).reshape(M, 1),
                     ((0, Mp - M), (0, 0)))
    ww_row = jnp.pad(jnp.broadcast_to(lw[:, None], (OW, C)).reshape(1, L),
                     ((0, 0), (0, Lp - L)))

    out = pl.pallas_call(
        _bilerp_kernel,
        out_shape=jax.ShapeDtypeStruct((Mp, Lp), jnp.float32),
        grid=(Mp // te,),
        in_specs=[pl.BlockSpec((te, Lp), lambda i: (i, 0))] * 4
                 + [pl.BlockSpec((te, 1), lambda i: (i, 0)),
                    pl.BlockSpec((1, Lp), lambda i: (0, 0))],
        out_specs=pl.BlockSpec((te, Lp), lambda i: (i, 0)),
        compiler_params=pltpu.CompilerParams(dimension_semantics=("parallel",)),
    )(prep(v00), prep(v01), prep(v10), prep(v11), wh_col, ww_row)
    return out[:M, :L].reshape(B, OH, OW, C)


# ----------------------------------------------------------------------------
# One-time parameter preparation (BN fold, transpose, pad, bf16 cast)
# ----------------------------------------------------------------------------
def fold_bn(bn, eps=1e-5):
    gamma, beta, mean, var = bn
    scale = gamma / jnp.sqrt(var + eps)
    bias = beta - mean * scale
    return scale, bias


def _prep_conv(w, scale, bias):
    O, I, kh, kw = w.shape
    w_eff = w * scale.reshape(O, 1, 1, 1)
    wm = jnp.transpose(w_eff, (2, 3, 1, 0)).reshape(kh * kw * I, O)
    K = kh * kw * I
    Kp = _round_up(K, 128)
    Np = _round_up(O, 128)
    wm_p = jnp.pad(wm, ((0, Kp - K), (0, Np - O))).astype(jnp.bfloat16)
    bias_p = jnp.pad(bias.reshape(1, O),
                     ((0, 0), (0, Np - O))).astype(jnp.float32)
    return (wm_p, bias_p)


def prepare_params(params):
    prep = {}
    s, b = fold_bn(params['bn1'])
    prep['conv1'] = _prep_conv(params['conv1_w'], s, b)
    blocks = []
    for bp in params['layer1']:
        d = {}
        for wname, bnname in (('w1', 'bn1'), ('w2', 'bn2'), ('w3', 'bn3')):
            s, b = fold_bn(bp[bnname])
            d[wname] = _prep_conv(bp[wname], s, b)
        if 'wd' in bp:
            s, b = fold_bn(bp['bnd'])
            d['wd'] = _prep_conv(bp['wd'], s, b)
        blocks.append(d)
    prep['layer1'] = blocks
    ones = jnp.ones((params['cls_w'].shape[0],), jnp.float32)
    prep['cls'] = _prep_conv(params['cls_w'], ones, params['cls_b'])
    return prep


# ----------------------------------------------------------------------------
# Deterministic parameter construction (synthetic, no checkpoint)
# ----------------------------------------------------------------------------
def make_params(seed=0):
    key = [jax.random.PRNGKey(seed)]

    def nk():
        key[0], sub = jax.random.split(key[0])
        return sub

    def conv_w(o, i, kh, kw, std=0.05):
        return std * jax.random.normal(nk(), (o, i, kh, kw), jnp.float32)

    def bn(c):
        gamma = 1.0 + 0.1 * jax.random.normal(nk(), (c,), jnp.float32)
        beta = 0.1 * jax.random.normal(nk(), (c,), jnp.float32)
        mean = 0.1 * jax.random.normal(nk(), (c,), jnp.float32)
        var = 1.0 + 0.1 * jnp.abs(jax.random.normal(nk(), (c,), jnp.float32))
        return (gamma, beta, mean, var)

    def bottleneck_params(cin, cmid, cout, downsample):
        p = {
            'w1': conv_w(cmid, cin, 1, 1), 'bn1': bn(cmid),
            'w2': conv_w(cmid, cmid, 3, 3), 'bn2': bn(cmid),
            'w3': conv_w(cout, cmid, 1, 1), 'bn3': bn(cout),
        }
        if downsample:
            p['wd'] = conv_w(cout, cin, 1, 1)
            p['bnd'] = bn(cout)
        return p

    params = {
        'conv1_w': conv_w(64, 3, 7, 7),
        'bn1': bn(64),
        'layer1': [
            bottleneck_params(64, 64, 256, downsample=True),
            bottleneck_params(256, 64, 256, downsample=False),
            bottleneck_params(256, 64, 256, downsample=False),
        ],
        'cls_w': conv_w(2, 256, 3, 3),
        'cls_b': 0.05 * jax.random.normal(nk(), (2,), jnp.float32),
    }
    return params


# ----------------------------------------------------------------------------
# Forward pass (= Net.forward)
# ----------------------------------------------------------------------------
def bottleneck(x, d):
    identity = x
    out = conv_prepared(x, *d['w1'], n_out=64, kh=1, kw=1, stride=1, pad=0,
                        relu=True)
    out = conv_prepared(out, *d['w2'], n_out=64, kh=3, kw=3, stride=1, pad=1,
                        relu=True)
    if 'wd' in d:
        identity = conv_prepared(x, *d['wd'], n_out=256, kh=1, kw=1, stride=1,
                                 pad=0, relu=False)
    out = conv_prepared(out, *d['w3'], n_out=256, kh=1, kw=1, stride=1, pad=0,
                        relu=True, residual=identity)
    return out


def net_forward(x_nchw, prep):
    B, C, H, W = x_nchw.shape
    x = jnp.transpose(x_nchw, (0, 2, 3, 1)).astype(jnp.float32)  # NHWC

    # stage1 = conv1 + bn1 + relu + maxpool + layer1
    x = conv_prepared(x, *prep['conv1'], n_out=64, kh=7, kw=7, stride=2, pad=3,
                      relu=True)
    x = maxpool3x3_s2(x)
    for d in prep['layer1']:
        x = bottleneck(x, d)

    # classifier (PosENet): 3x3 conv, 256 -> 2, padding 1, with bias
    x = conv_prepared(x, *prep['cls'], n_out=2, kh=3, kw=3, stride=1, pad=1,
                      relu=False)

    # F.interpolate to input spatial size, bilinear, align_corners=False
    out = bilinear_upsample(x, (H, W))
    return jnp.transpose(out, (0, 3, 1, 2))  # back to NCHW


if __name__ == "__main__":
    params = make_params(seed=0)
    prep = prepare_params(params)   # one-time weight prep, not in the hot path
    x = jax.random.normal(jax.random.PRNGKey(0), (2, 3, 16, 16), jnp.float32)

    fwd = jax.jit(net_forward)
    out = fwd(x, prep)
    jax.block_until_ready(out)

    assert out.shape == (2, 2, 16, 16), out.shape
    assert out.dtype == jnp.float32
    assert bool(jnp.all(jnp.isfinite(out)))
    print("KERNEL_OK")
</pallas_src>

<mosaic_0001>
module attributes {stable_mosaic.version = 11 : i64} {
  func.func @_mm_kernel(%arg0: i32, %arg1: i32, %arg2: memref<64x256xbf16, #tpu.memory_space<vmem>>, %arg3: memref<256x128xbf16, #tpu.memory_space<vmem>>, %arg4: memref<1x128xf32, #tpu.memory_space<vmem>>, %arg5: memref<64x128xf32, #tpu.memory_space<vmem>>) attributes {dimension_semantics = [#tpu.dimension_semantics<parallel>, #tpu.dimension_semantics<parallel>], iteration_bounds = array<i64: 2, 1>, scalar_prefetch = 0 : i64, scratch_operands = 0 : i64, tpu.core_type = #tpu.core_type<tc>, window_params = [{transform_indices = @transform_0, window_bounds = array<i64: 64, 256>}, {transform_indices = @transform_1, window_bounds = array<i64: 256, 128>}, {transform_indices = @transform_2, window_bounds = array<i64: 1, 128>}, {transform_indices = @transform_3, window_bounds = array<i64: 64, 128>}]} {
    %c0 = arith.constant 0 : index
    %c0_0 = arith.constant 0 : index
    %0 = vector.load %arg2[%c0, %c0_0] : memref<64x256xbf16, #tpu.memory_space<vmem>>, vector<64x256xbf16>
    %c0_1 = arith.constant 0 : index
    %c0_2 = arith.constant 0 : index
    %1 = vector.load %arg3[%c0_1, %c0_2] : memref<256x128xbf16, #tpu.memory_space<vmem>>, vector<256x128xbf16>
    %cst = arith.constant dense<0.000000e+00> : vector<64x128xf32>
    %2 = tpu.matmul %0, %1, %cst {dimension_numbers = #tpu.dot_dimension_numbers<[1], [0], [0], [1], [0, 0, 1, 1], [], []>} : vector<64x256xbf16>, vector<256x128xbf16>, vector<64x128xf32> -> vector<64x128xf32>
    %c0_3 = arith.constant 0 : index
    %c0_4 = arith.constant 0 : index
    %3 = vector.load %arg4[%c0_3, %c0_4] : memref<1x128xf32, #tpu.memory_space<vmem>>, vector<1x128xf32>
    %4 = vector.broadcast %3 : vector<1x128xf32> to vector<64x128xf32>
    %5 = arith.addf %2, %4 : vector<64x128xf32>
    %cst_5 = arith.constant 0.000000e+00 : f32
    %6 = vector.broadcast %cst_5 : f32 to vector<64x128xf32>
    %7 = arith.maximumf %5, %6 : vector<64x128xf32>
    %c0_6 = arith.constant 0 : index
    %c0_7 = arith.constant 0 : index
    %8 = vector.load %arg5[%c0_6, %c0_7] : memref<64x128xf32, #tpu.memory_space<vmem>>, vector<64x128xf32>
    tpu.vector_store %arg5[%c0_6, %c0_7], %7 {strides = array<i32>} : memref<64x128xf32, #tpu.memory_space<vmem>>, vector<64x128xf32>,
    return
  }
  func.func @transform_0(%arg0: i32, %arg1: i32) -> (i32, i32) {
    %c0_i32 = arith.constant 0 : i32
    %c0_i32_0 = arith.constant 0 : i32
    return %arg0, %c0_i32 : i32, i32
  }
  func.func @transform_1(%arg0: i32, %arg1: i32) -> (i32, i32) {
    %c0_i32 = arith.constant 0 : i32
    %c0_i32_0 = arith.constant 0 : i32
    return %c0_i32, %arg1 : i32, i32
  }
  func.func @transform_2(%arg0: i32, %arg1: i32) -> (i32, i32) {
    %c0_i32 = arith.constant 0 : i32
    %c0_i32_0 = arith.constant 0 : i32
    return %c0_i32, %arg1 : i32, i32
  }
  func.func @transform_3(%arg0: i32, %arg1: i32) -> (i32, i32) {
    %c0_i32 = arith.constant 0 : i32
    return %arg0, %arg1 : i32, i32
  }
}

module attributes {stable_mosaic.version = 11 : i64} {
  func.func @_max3_kernel(%arg0: i32, %arg1: memref<16x256xf32, #tpu.memory_space<vmem>>, %arg2: memref<16x256xf32, #tpu.memory_space<vmem>>, %arg3: memref<16x256xf32, #tpu.memory_space<vmem>>, %arg4: memref<16x256xf32, #tpu.memory_space<vmem>>) attributes {dimension_semantics = [#tpu.dimension_semantics<parallel>], iteration_bounds = array<i64: 2>, scalar_prefetch = 0 : i64, scratch_operands = 0 : i64, tpu.core_type = #tpu.core_type<tc>, window_params = [{transform_indices = @transform_0, window_bounds = array<i64: 16, 256>}, {transform_indices = @transform_1, window_bounds = array<i64: 16, 256>}, {transform_indices = @transform_2, window_bounds = array<i64: 16, 256>}, {transform_indices = @transform_3, window_bounds = array<i64: 16, 256>}]} {
    %c0 = arith.constant 0 : index
    %c0_0 = arith.constant 0 : index
    %0 = vector.load %arg1[%c0, %c0_0] : memref<16x256xf32, #tpu.memory_space<vmem>>, vector<16x256xf32>
    %c0_1 = arith.constant 0 : index
    %c0_2 = arith.constant 0 : index
    %1 = vector.load %arg2[%c0_1, %c0_2] : memref<16x256xf32, #tpu.memory_space<vmem>>, vector<16x256xf32>
    %2 = arith.maximumf %0, %1 : vector<16x256xf32>
    %c0_3 = arith.constant 0 : index
    %c0_4 = arith.constant 0 : index
    %3 = vector.load %arg3[%c0_3, %c0_4] : memref<16x256xf32, #tpu.memory_space<vmem>>, vector<16x256xf32>
    %4 = arith.maximumf %2, %3 : vector<16x256xf32>
    %c0_5 = arith.constant 0 : index
    %c0_6 = arith.constant 0 : index
    %5 = vector.load %arg4[%c0_5, %c0_6] : memref<16x256xf32, #tpu.memory_space<vmem>>, vector<16x256xf32>
    tpu.vector_store %arg4[%c0_5, %c0_6], %4 {strides = array<i32>} : memref<16x256xf32, #tpu.memory_space<vmem>>, vector<16x256xf32>,
    return
  }
  func.func @transform_0(%arg0: i32) -> (i32, i32) {
    %c0_i32 = arith.constant 0 : i32
    %c0_i32_0 = arith.constant 0 : i32
    return %arg0, %c0_i32 : i32, i32
  }
  func.func @transform_1(%arg0: i32) -> (i32, i32) {
    %c0_i32 = arith.constant 0 : i32
    %c0_i32_0 = arith.constant 0 : i32
    return %arg0, %c0_i32 : i32, i32
  }
  func.func @transform_2(%arg0: i32) -> (i32, i32) {
    %c0_i32 = arith.constant 0 : i32
    %c0_i32_0 = arith.constant 0 : i32
    return %arg0, %c0_i32 : i32, i32
  }
  func.func @transform_3(%arg0: i32) -> (i32, i32) {
    %c0_i32 = arith.constant 0 : i32
    %c0_i32_0 = arith.constant 0 : i32
    return %arg0, %c0_i32 : i32, i32
  }
}

module attributes {stable_mosaic.version = 11 : i64} {
  func.func @_max3_kernel(%arg0: i32, %arg1: memref<8x256xf32, #tpu.memory_space<vmem>>, %arg2: memref<8x256xf32, #tpu.memory_space<vmem>>, %arg3: memref<8x256xf32, #tpu.memory_space<vmem>>, %arg4: memref<8x256xf32, #tpu.memory_space<vmem>>) attributes {dimension_semantics = [#tpu.dimension_semantics<parallel>], iteration_bounds = array<i64: 1>, scalar_prefetch = 0 : i64, scratch_operands = 0 : i64, tpu.core_type = #tpu.core_type<tc>, window_params = [{transform_indices = @transform_0, window_bounds = array<i64: 8, 256>}, {transform_indices = @transform_1, window_bounds = array<i64: 8, 256>}, {transform_indices = @transform_2, window_bounds = array<i64: 8, 256>}, {transform_indices = @transform_3, window_bounds = array<i64: 8, 256>}]} {
    %c0 = arith.constant 0 : index
    %c0_0 = arith.constant 0 : index
    %0 = vector.load %arg1[%c0, %c0_0] : memref<8x256xf32, #tpu.memory_space<vmem>>, vector<8x256xf32>
    %c0_1 = arith.constant 0 : index
    %c0_2 = arith.constant 0 : index
    %1 = vector.load %arg2[%c0_1, %c0_2] : memref<8x256xf32, #tpu.memory_space<vmem>>, vector<8x256xf32>
    %2 = arith.maximumf %0, %1 : vector<8x256xf32>
    %c0_3 = arith.constant 0 : index
    %c0_4 = arith.constant 0 : index
    %3 = vector.load %arg3[%c0_3, %c0_4] : memref<8x256xf32, #tpu.memory_space<vmem>>, vector<8x256xf32>
    %4 = arith.maximumf %2, %3 : vector<8x256xf32>
    %c0_5 = arith.constant 0 : index
    %c0_6 = arith.constant 0 : index
    %5 = vector.load %arg4[%c0_5, %c0_6] : memref<8x256xf32, #tpu.memory_space<vmem>>, vector<8x256xf32>
    tpu.vector_store %arg4[%c0_5, %c0_6], %4 {strides = array<i32>} : memref<8x256xf32, #tpu.memory_space<vmem>>, vector<8x256xf32>,
    return
  }
  func.func @transform_0(%arg0: i32) -> (i32, i32) {
    %c0_i32 = arith.constant 0 : i32
    %c0_i32_0 = arith.constant 0 : i32
    return %arg0, %c0_i32 : i32, i32
  }
  func.func @transform_1(%arg0: i32) -> (i32, i32) {
    %c0_i32 = arith.constant 0 : i32
    %c0_i32_0 = arith.constant 0 : i32
    return %arg0, %c0_i32 : i32, i32
  }
  func.func @transform_2(%arg0: i32) -> (i32, i32) {
    %c0_i32 = arith.constant 0 : i32
    %c0_i32_0 = arith.constant 0 : i32
    return %arg0, %c0_i32 : i32, i32
  }
  func.func @transform_3(%arg0: i32) -> (i32, i32) {
    %c0_i32 = arith.constant 0 : i32
    %c0_i32_0 = arith.constant 0 : i32
    return %arg0, %c0_i32 : i32, i32
  }
}

module attributes {stable_mosaic.version = 11 : i64} {
  func.func @_mm_kernel(%arg0: i32, %arg1: i32, %arg2: memref<16x128xbf16, #tpu.memory_space<vmem>>, %arg3: memref<128x128xbf16, #tpu.memory_space<vmem>>, %arg4: memref<1x128xf32, #tpu.memory_space<vmem>>, %arg5: memref<16x128xf32, #tpu.memory_space<vmem>>) attributes {dimension_semantics = [#tpu.dimension_semantics<parallel>, #tpu.dimension_semantics<parallel>], iteration_bounds = array<i64: 2, 1>, scalar_prefetch = 0 : i64, scratch_operands = 0 : i64, tpu.core_type = #tpu.core_type<tc>, window_params = [{transform_indices = @transform_0, window_bounds = array<i64: 16, 128>}, {transform_indices = @transform_1, window_bounds = array<i64: 128, 128>}, {transform_indices = @transform_2, window_bounds = array<i64: 1, 128>}, {transform_indices = @transform_3, window_bounds = array<i64: 16, 128>}]} {
    %c0 = arith.constant 0 : index
    %c0_0 = arith.constant 0 : index
    %0 = vector.load %arg2[%c0, %c0_0] : memref<16x128xbf16, #tpu.memory_space<vmem>>, vector<16x128xbf16>
    %c0_1 = arith.constant 0 : index
    %c0_2 = arith.constant 0 : index
    %1 = vector.load %arg3[%c0_1, %c0_2] : memref<128x128xbf16, #tpu.memory_space<vmem>>, vector<128x128xbf16>
    %cst = arith.constant dense<0.000000e+00> : vector<16x128xf32>
    %2 = tpu.matmul %0, %1, %cst {dimension_numbers = #tpu.dot_dimension_numbers<[1], [0], [0], [1], [0, 0, 1, 1], [], []>} : vector<16x128xbf16>, vector<128x128xbf16>, vector<16x128xf32> -> vector<16x128xf32>
    %c0_3 = arith.constant 0 : index
    %c0_4 = arith.constant 0 : index
    %3 = vector.load %arg4[%c0_3, %c0_4] : memref<1x128xf32, #tpu.memory_space<vmem>>, vector<1x128xf32>
    %4 = vector.broadcast %3 : vector<1x128xf32> to vector<16x128xf32>
    %5 = arith.addf %2, %4 : vector<16x128xf32>
    %cst_5 = arith.constant 0.000000e+00 : f32
    %6 = vector.broadcast %cst_5 : f32 to vector<16x128xf32>
    %7 = arith.maximumf %5, %6 : vector<16x128xf32>
    %c0_6 = arith.constant 0 : index
    %c0_7 = arith.constant 0 : index
    %8 = vector.load %arg5[%c0_6, %c0_7] : memref<16x128xf32, #tpu.memory_space<vmem>>, vector<16x128xf32>
    tpu.vector_store %arg5[%c0_6, %c0_7], %7 {strides = array<i32>} : memref<16x128xf32, #tpu.memory_space<vmem>>, vector<16x128xf32>,
    return
  }
  func.func @transform_0(%arg0: i32, %arg1: i32) -> (i32, i32) {
    %c0_i32 = arith.constant 0 : i32
    %c0_i32_0 = arith.constant 0 : i32
    return %arg0, %c0_i32 : i32, i32
  }
  func.func @transform_1(%arg0: i32, %arg1: i32) -> (i32, i32) {
    %c0_i32 = arith.constant 0 : i32
    %c0_i32_0 = arith.constant 0 : i32
    return %c0_i32, %arg1 : i32, i32
  }
  func.func @transform_2(%arg0: i32, %arg1: i32) -> (i32, i32) {
    %c0_i32 = arith.constant 0 : i32
    %c0_i32_0 = arith.constant 0 : i32
    return %c0_i32, %arg1 : i32, i32
  }
  func.func @transform_3(%arg0: i32, %arg1: i32) -> (i32, i32) {
    %c0_i32 = arith.constant 0 : i32
    return %arg0, %arg1 : i32, i32
  }
}

module attributes {stable_mosaic.version = 11 : i64} {
  func.func @_mm_kernel(%arg0: i32, %arg1: i32, %arg2: memref<16x640xbf16, #tpu.memory_space<vmem>>, %arg3: memref<640x128xbf16, #tpu.memory_space<vmem>>, %arg4: memref<1x128xf32, #tpu.memory_space<vmem>>, %arg5: memref<16x128xf32, #tpu.memory_space<vmem>>) attributes {dimension_semantics = [#tpu.dimension_semantics<parallel>, #tpu.dimension_semantics<parallel>], iteration_bounds = array<i64: 2, 1>, scalar_prefetch = 0 : i64, scratch_operands = 0 : i64, tpu.core_type = #tpu.core_type<tc>, window_params = [{transform_indices = @transform_0, window_bounds = array<i64: 16, 640>}, {transform_indices = @transform_1, window_bounds = array<i64: 640, 128>}, {transform_indices = @transform_2, window_bounds = array<i64: 1, 128>}, {transform_indices = @transform_3, window_bounds = array<i64: 16, 128>}]} {
    %c0 = arith.constant 0 : index
    %c0_0 = arith.constant 0 : index
    %0 = vector.load %arg2[%c0, %c0_0] : memref<16x640xbf16, #tpu.memory_space<vmem>>, vector<16x640xbf16>
    %c0_1 = arith.constant 0 : index
    %c0_2 = arith.constant 0 : index
    %1 = vector.load %arg3[%c0_1, %c0_2] : memref<640x128xbf16, #tpu.memory_space<vmem>>, vector<640x128xbf16>
    %cst = arith.constant dense<0.000000e+00> : vector<16x128xf32>
    %2 = tpu.matmul %0, %1, %cst {dimension_numbers = #tpu.dot_dimension_numbers<[1], [0], [0], [1], [0, 0, 1, 1], [], []>} : vector<16x640xbf16>, vector<640x128xbf16>, vector<16x128xf32> -> vector<16x128xf32>
    %c0_3 = arith.constant 0 : index
    %c0_4 = arith.constant 0 : index
    %3 = vector.load %arg4[%c0_3, %c0_4] : memref<1x128xf32, #tpu.memory_space<vmem>>, vector<1x128xf32>
    %4 = vector.broadcast %3 : vector<1x128xf32> to vector<16x128xf32>
    %5 = arith.addf %2, %4 : vector<16x128xf32>
    %cst_5 = arith.constant 0.000000e+00 : f32
    %6 = vector.broadcast %cst_5 : f32 to vector<16x128xf32>
    %7 = arith.maximumf %5, %6 : vector<16x128xf32>
    %c0_6 = arith.constant 0 : index
    %c0_7 = arith.constant 0 : index
    %8 = vector.load %arg5[%c0_6, %c0_7] : memref<16x128xf32, #tpu.memory_space<vmem>>, vector<16x128xf32>
    tpu.vector_store %arg5[%c0_6, %c0_7], %7 {strides = array<i32>} : memref<16x128xf32, #tpu.memory_space<vmem>>, vector<16x128xf32>,
    return
  }
  func.func @transform_0(%arg0: i32, %arg1: i32) -> (i32, i32) {
    %c0_i32 = arith.constant 0 : i32
    %c0_i32_0 = arith.constant 0 : i32
    return %arg0, %c0_i32 : i32, i32
  }
  func.func @transform_1(%arg0: i32, %arg1: i32) -> (i32, i32) {
    %c0_i32 = arith.constant 0 : i32
    %c0_i32_0 = arith.constant 0 : i32
    return %c0_i32, %arg1 : i32, i32
  }
  func.func @transform_2(%arg0: i32, %arg1: i32) -> (i32, i32) {
    %c0_i32 = arith.constant 0 : i32
    %c0_i32_0 = arith.constant 0 : i32
    return %c0_i32, %arg1 : i32, i32
  }
  func.func @transform_3(%arg0: i32, %arg1: i32) -> (i32, i32) {
    %c0_i32 = arith.constant 0 : i32
    return %arg0, %arg1 : i32, i32
  }
}

module attributes {stable_mosaic.version = 11 : i64} {
  func.func @_mm_res_kernel(%arg0: i32, %arg1: i32, %arg2: memref<16x128xbf16, #tpu.memory_space<vmem>>, %arg3: memref<128x256xbf16, #tpu.memory_space<vmem>>, %arg4: memref<1x256xf32, #tpu.memory_space<vmem>>, %arg5: memref<16x256xf32, #tpu.memory_space<vmem>>, %arg6: memref<16x256xf32, #tpu.memory_space<vmem>>) attributes {dimension_semantics = [#tpu.dimension_semantics<parallel>, #tpu.dimension_semantics<parallel>], iteration_bounds = array<i64: 2, 1>, scalar_prefetch = 0 : i64, scratch_operands = 0 : i64, tpu.core_type = #tpu.core_type<tc>, window_params = [{transform_indices = @transform_0, window_bounds = array<i64: 16, 128>}, {transform_indices = @transform_1, window_bounds = array<i64: 128, 256>}, {transform_indices = @transform_2, window_bounds = array<i64: 1, 256>}, {transform_indices = @transform_3, window_bounds = array<i64: 16, 256>}, {transform_indices = @transform_4, window_bounds = array<i64: 16, 256>}]} {
    %c0 = arith.constant 0 : index
    %c0_0 = arith.constant 0 : index
    %0 = vector.load %arg2[%c0, %c0_0] : memref<16x128xbf16, #tpu.memory_space<vmem>>, vector<16x128xbf16>
    %c0_1 = arith.constant 0 : index
    %c0_2 = arith.constant 0 : index
    %1 = vector.load %arg3[%c0_1, %c0_2] : memref<128x256xbf16, #tpu.memory_space<vmem>>, vector<128x256xbf16>
    %cst = arith.constant dense<0.000000e+00> : vector<16x256xf32>
    %2 = tpu.matmul %0, %1, %cst {dimension_numbers = #tpu.dot_dimension_numbers<[1], [0], [0], [1], [0, 0, 1, 1], [], []>} : vector<16x128xbf16>, vector<128x256xbf16>, vector<16x256xf32> -> vector<16x256xf32>
    %c0_3 = arith.constant 0 : index
    %c0_4 = arith.constant 0 : index
    %3 = vector.load %arg4[%c0_3, %c0_4] : memref<1x256xf32, #tpu.memory_space<vmem>>, vector<1x256xf32>
    %4 = vector.broadcast %3 : vector<1x256xf32> to vector<16x256xf32>
    %5 = arith.addf %2, %4 : vector<16x256xf32>
    %c0_5 = arith.constant 0 : index
    %c0_6 = arith.constant 0 : index
    %6 = vector.load %arg5[%c0_5, %c0_6] : memref<16x256xf32, #tpu.memory_space<vmem>>, vector<16x256xf32>
    %7 = arith.addf %5, %6 : vector<16x256xf32>
    %cst_7 = arith.constant 0.000000e+00 : f32
    %8 = vector.broadcast %cst_7 : f32 to vector<16x256xf32>
    %9 = arith.maximumf %7, %8 : vector<16x256xf32>
    %c0_8 = arith.constant 0 : index
    %c0_9 = arith.constant 0 : index
    %10 = vector.load %arg6[%c0_8, %c0_9] : memref<16x256xf32, #tpu.memory_space<vmem>>, vector<16x256xf32>
    tpu.vector_store %arg6[%c0_8, %c0_9], %9 {strides = array<i32>} : memref<16x256xf32, #tpu.memory_space<vmem>>, vector<16x256xf32>,
    return
  }
  func.func @transform_0(%arg0: i32, %arg1: i32) -> (i32, i32) {
    %c0_i32 = arith.constant 0 : i32
    %c0_i32_0 = arith.constant 0 : i32
    return %arg0, %c0_i32 : i32, i32
  }
  func.func @transform_1(%arg0: i32, %arg1: i32) -> (i32, i32) {
    %c0_i32 = arith.constant 0 : i32
    %c0_i32_0 = arith.constant 0 : i32
    return %c0_i32, %arg1 : i32, i32
  }
  func.func @transform_2(%arg0: i32, %arg1: i32) -> (i32, i32) {
    %c0_i32 = arith.constant 0 : i32
    %c0_i32_0 = arith.constant 0 : i32
    return %c0_i32, %arg1 : i32, i32
  }
  func.func @transform_3(%arg0: i32, %arg1: i32) -> (i32, i32) {
    %c0_i32 = arith.constant 0 : i32
    return %arg0, %arg1 : i32, i32
  }
  func.func @transform_4(%arg0: i32, %arg1: i32) -> (i32, i32) {
    %c0_i32 = arith.constant 0 : i32
    return %arg0, %arg1 : i32, i32
  }
}

module attributes {stable_mosaic.version = 11 : i64} {
  func.func @_mm_kernel(%arg0: i32, %arg1: i32, %arg2: memref<16x128xbf16, #tpu.memory_space<vmem>>, %arg3: memref<128x256xbf16, #tpu.memory_space<vmem>>, %arg4: memref<1x256xf32, #tpu.memory_space<vmem>>, %arg5: memref<16x256xf32, #tpu.memory_space<vmem>>) attributes {dimension_semantics = [#tpu.dimension_semantics<parallel>, #tpu.dimension_semantics<parallel>], iteration_bounds = array<i64: 2, 1>, scalar_prefetch = 0 : i64, scratch_operands = 0 : i64, tpu.core_type = #tpu.core_type<tc>, window_params = [{transform_indices = @transform_0, window_bounds = array<i64: 16, 128>}, {transform_indices = @transform_1, window_bounds = array<i64: 128, 256>}, {transform_indices = @transform_2, window_bounds = array<i64: 1, 256>}, {transform_indices = @transform_3, window_bounds = array<i64: 16, 256>}]} {
    %c0 = arith.constant 0 : index
    %c0_0 = arith.constant 0 : index
    %0 = vector.load %arg2[%c0, %c0_0] : memref<16x128xbf16, #tpu.memory_space<vmem>>, vector<16x128xbf16>
    %c0_1 = arith.constant 0 : index
    %c0_2 = arith.constant 0 : index
    %1 = vector.load %arg3[%c0_1, %c0_2] : memref<128x256xbf16, #tpu.memory_space<vmem>>, vector<128x256xbf16>
    %cst = arith.constant dense<0.000000e+00> : vector<16x256xf32>
    %2 = tpu.matmul %0, %1, %cst {dimension_numbers = #tpu.dot_dimension_numbers<[1], [0], [0], [1], [0, 0, 1, 1], [], []>} : vector<16x128xbf16>, vector<128x256xbf16>, vector<16x256xf32> -> vector<16x256xf32>
    %c0_3 = arith.constant 0 : index
    %c0_4 = arith.constant 0 : index
    %3 = vector.load %arg4[%c0_3, %c0_4] : memref<1x256xf32, #tpu.memory_space<vmem>>, vector<1x256xf32>
    %4 = vector.broadcast %3 : vector<1x256xf32> to vector<16x256xf32>
    %5 = arith.addf %2, %4 : vector<16x256xf32>
    %c0_5 = arith.constant 0 : index
    %c0_6 = arith.constant 0 : index
    %6 = vector.load %arg5[%c0_5, %c0_6] : memref<16x256xf32, #tpu.memory_space<vmem>>, vector<16x256xf32>
    tpu.vector_store %arg5[%c0_5, %c0_6], %5 {strides = array<i32>} : memref<16x256xf32, #tpu.memory_space<vmem>>, vector<16x256xf32>,
    return
  }
  func.func @transform_0(%arg0: i32, %arg1: i32) -> (i32, i32) {
    %c0_i32 = arith.constant 0 : i32
    %c0_i32_0 = arith.constant 0 : i32
    return %arg0, %c0_i32 : i32, i32
  }
  func.func @transform_1(%arg0: i32, %arg1: i32) -> (i32, i32) {
    %c0_i32 = arith.constant 0 : i32
    %c0_i32_0 = arith.constant 0 : i32
    return %c0_i32, %arg1 : i32, i32
  }
  func.func @transform_2(%arg0: i32, %arg1: i32) -> (i32, i32) {
    %c0_i32 = arith.constant 0 : i32
    %c0_i32_0 = arith.constant 0 : i32
    return %c0_i32, %arg1 : i32, i32
  }
  func.func @transform_3(%arg0: i32, %arg1: i32) -> (i32, i32) {
    %c0_i32 = arith.constant 0 : i32
    return %arg0, %arg1 : i32, i32
  }
}

module attributes {stable_mosaic.version = 11 : i64} {
  func.func @_mm_kernel(%arg0: i32, %arg1: i32, %arg2: memref<16x256xbf16, #tpu.memory_space<vmem>>, %arg3: memref<256x128xbf16, #tpu.memory_space<vmem>>, %arg4: memref<1x128xf32, #tpu.memory_space<vmem>>, %arg5: memref<16x128xf32, #tpu.memory_space<vmem>>) attributes {dimension_semantics = [#tpu.dimension_semantics<parallel>, #tpu.dimension_semantics<parallel>], iteration_bounds = array<i64: 2, 1>, scalar_prefetch = 0 : i64, scratch_operands = 0 : i64, tpu.core_type = #tpu.core_type<tc>, window_params = [{transform_indices = @transform_0, window_bounds = array<i64: 16, 256>}, {transform_indices = @transform_1, window_bounds = array<i64: 256, 128>}, {transform_indices = @transform_2, window_bounds = array<i64: 1, 128>}, {transform_indices = @transform_3, window_bounds = array<i64: 16, 128>}]} {
    %c0 = arith.constant 0 : index
    %c0_0 = arith.constant 0 : index
    %0 = vector.load %arg2[%c0, %c0_0] : memref<16x256xbf16, #tpu.memory_space<vmem>>, vector<16x256xbf16>
    %c0_1 = arith.constant 0 : index
    %c0_2 = arith.constant 0 : index
    %1 = vector.load %arg3[%c0_1, %c0_2] : memref<256x128xbf16, #tpu.memory_space<vmem>>, vector<256x128xbf16>
    %cst = arith.constant dense<0.000000e+00> : vector<16x128xf32>
    %2 = tpu.matmul %0, %1, %cst {dimension_numbers = #tpu.dot_dimension_numbers<[1], [0], [0], [1], [0, 0, 1, 1], [], []>} : vector<16x256xbf16>, vector<256x128xbf16>, vector<16x128xf32> -> vector<16x128xf32>
    %c0_3 = arith.constant 0 : index
    %c0_4 = arith.constant 0 : index
    %3 = vector.load %arg4[%c0_3, %c0_4] : memref<1x128xf32, #tpu.memory_space<vmem>>, vector<1x128xf32>
    %4 = vector.broadcast %3 : vector<1x128xf32> to vector<16x128xf32>
    %5 = arith.addf %2, %4 : vector<16x128xf32>
    %cst_5 = arith.constant 0.000000e+00 : f32
    %6 = vector.broadcast %cst_5 : f32 to vector<16x128xf32>
    %7 = arith.maximumf %5, %6 : vector<16x128xf32>
    %c0_6 = arith.constant 0 : index
    %c0_7 = arith.constant 0 : index
    %8 = vector.load %arg5[%c0_6, %c0_7] : memref<16x128xf32, #tpu.memory_space<vmem>>, vector<16x128xf32>
    tpu.vector_store %arg5[%c0_6, %c0_7], %7 {strides = array<i32>} : memref<16x128xf32, #tpu.memory_space<vmem>>, vector<16x128xf32>,
    return
  }
  func.func @transform_0(%arg0: i32, %arg1: i32) -> (i32, i32) {
    %c0_i32 = arith.constant 0 : i32
    %c0_i32_0 = arith.constant 0 : i32
    return %arg0, %c0_i32 : i32, i32
  }
  func.func @transform_1(%arg0: i32, %arg1: i32) -> (i32, i32) {
    %c0_i32 = arith.constant 0 : i32
    %c0_i32_0 = arith.constant 0 : i32
    return %c0_i32, %arg1 : i32, i32
  }
  func.func @transform_2(%arg0: i32, %arg1: i32) -> (i32, i32) {
    %c0_i32 = arith.constant 0 : i32
    %c0_i32_0 = arith.constant 0 : i32
    return %c0_i32, %arg1 : i32, i32
  }
  func.func @transform_3(%arg0: i32, %arg1: i32) -> (i32, i32) {
    %c0_i32 = arith.constant 0 : i32
    return %arg0, %arg1 : i32, i32
  }
}

module attributes {stable_mosaic.version = 11 : i64} {
  func.func @_mm_kernel(%arg0: i32, %arg1: i32, %arg2: memref<16x2304xbf16, #tpu.memory_space<vmem>>, %arg3: memref<2304x128xbf16, #tpu.memory_space<vmem>>, %arg4: memref<1x128xf32, #tpu.memory_space<vmem>>, %arg5: memref<16x128xf32, #tpu.memory_space<vmem>>) attributes {dimension_semantics = [#tpu.dimension_semantics<parallel>, #tpu.dimension_semantics<parallel>], iteration_bounds = array<i64: 2, 1>, scalar_prefetch = 0 : i64, scratch_operands = 0 : i64, tpu.core_type = #tpu.core_type<tc>, window_params = [{transform_indices = @transform_0, window_bounds = array<i64: 16, 2304>}, {transform_indices = @transform_1, window_bounds = array<i64: 2304, 128>}, {transform_indices = @transform_2, window_bounds = array<i64: 1, 128>}, {transform_indices = @transform_3, window_bounds = array<i64: 16, 128>}]} {
    %c0 = arith.constant 0 : index
    %c0_0 = arith.constant 0 : index
    %0 = vector.load %arg2[%c0, %c0_0] : memref<16x2304xbf16, #tpu.memory_space<vmem>>, vector<16x2304xbf16>
    %c0_1 = arith.constant 0 : index
    %c0_2 = arith.constant 0 : index
    %1 = vector.load %arg3[%c0_1, %c0_2] : memref<2304x128xbf16, #tpu.memory_space<vmem>>, vector<2304x128xbf16>
    %cst = arith.constant dense<0.000000e+00> : vector<16x128xf32>
    %2 = tpu.matmul %0, %1, %cst {dimension_numbers = #tpu.dot_dimension_numbers<[1], [0], [0], [1], [0, 0, 1, 1], [], []>} : vector<16x2304xbf16>, vector<2304x128xbf16>, vector<16x128xf32> -> vector<16x128xf32>
    %c0_3 = arith.constant 0 : index
    %c0_4 = arith.constant 0 : index
    %3 = vector.load %arg4[%c0_3, %c0_4] : memref<1x128xf32, #tpu.memory_space<vmem>>, vector<1x128xf32>
    %4 = vector.broadcast %3 : vector<1x128xf32> to vector<16x128xf32>
    %5 = arith.addf %2, %4 : vector<16x128xf32>
    %c0_5 = arith.constant 0 : index
    %c0_6 = arith.constant 0 : index
    %6 = vector.load %arg5[%c0_5, %c0_6] : memref<16x128xf32, #tpu.memory_space<vmem>>, vector<16x128xf32>
    tpu.vector_store %arg5[%c0_5, %c0_6], %5 {strides = array<i32>} : memref<16x128xf32, #tpu.memory_space<vmem>>, vector<16x128xf32>,
    return
  }
  func.func @transform_0(%arg0: i32, %arg1: i32) -> (i32, i32) {
    %c0_i32 = arith.constant 0 : i32
    %c0_i32_0 = arith.constant 0 : i32
    return %arg0, %c0_i32 : i32, i32
  }
  func.func @transform_1(%arg0: i32, %arg1: i32) -> (i32, i32) {
    %c0_i32 = arith.constant 0 : i32
    %c0_i32_0 = arith.constant 0 : i32
    return %c0_i32, %arg1 : i32, i32
  }
  func.func @transform_2(%arg0: i32, %arg1: i32) -> (i32, i32) {
    %c0_i32 = arith.constant 0 : i32
    %c0_i32_0 = arith.constant 0 : i32
    return %c0_i32, %arg1 : i32, i32
  }
  func.func @transform_3(%arg0: i32, %arg1: i32) -> (i32, i32) {
    %c0_i32 = arith.constant 0 : i32
    return %arg0, %arg1 : i32, i32
  }
}

module attributes {stable_mosaic.version = 11 : i64} {
  func.func @_bilerp_kernel(%arg0: i32, %arg1: memref<16x128xf32, #tpu.memory_space<vmem>>, %arg2: memref<16x128xf32, #tpu.memory_space<vmem>>, %arg3: memref<16x128xf32, #tpu.memory_space<vmem>>, %arg4: memref<16x128xf32, #tpu.memory_space<vmem>>, %arg5: memref<16x1xf32, #tpu.memory_space<vmem>>, %arg6: memref<1x128xf32, #tpu.memory_space<vmem>>, %arg7: memref<16x128xf32, #tpu.memory_space<vmem>>) attributes {dimension_semantics = [#tpu.dimension_semantics<parallel>], iteration_bounds = array<i64: 2>, scalar_prefetch = 0 : i64, scratch_operands = 0 : i64, tpu.core_type = #tpu.core_type<tc>, window_params = [{transform_indices = @transform_0, window_bounds = array<i64: 16, 128>}, {transform_indices = @transform_1, window_bounds = array<i64: 16, 128>}, {transform_indices = @transform_2, window_bounds = array<i64: 16, 128>}, {transform_indices = @transform_3, window_bounds = array<i64: 16, 128>}, {transform_indices = @transform_4, window_bounds = array<i64: 16, 1>}, {pipeline_mode = #tpu.pipeline_mode<synchronous>, transform_indices = @transform_5, window_bounds = array<i64: 1, 128>}, {transform_indices = @transform_6, window_bounds = array<i64: 16, 128>}]} {
    %c0 = arith.constant 0 : index
    %c0_0 = arith.constant 0 : index
    %0 = vector.load %arg5[%c0, %c0_0] : memref<16x1xf32, #tpu.memory_space<vmem>>, vector<16x1xf32>
    %c0_1 = arith.constant 0 : index
    %c0_2 = arith.constant 0 : index
    %1 = vector.load %arg6[%c0_1, %c0_2] : memref<1x128xf32, #tpu.memory_space<vmem>>, vector<1x128xf32>
    %c0_3 = arith.constant 0 : index
    %c0_4 = arith.constant 0 : index
    %2 = vector.load %arg1[%c0_3, %c0_4] : memref<16x128xf32, #tpu.memory_space<vmem>>, vector<16x128xf32>
    %c0_5 = arith.constant 0 : index
    %c0_6 = arith.constant 0 : index
    %3 = vector.load %arg2[%c0_5, %c0_6] : memref<16x128xf32, #tpu.memory_space<vmem>>, vector<16x128xf32>
    %c0_7 = arith.constant 0 : index
    %c0_8 = arith.constant 0 : index
    %4 = vector.load %arg3[%c0_7, %c0_8] : memref<16x128xf32, #tpu.memory_space<vmem>>, vector<16x128xf32>
    %c0_9 = arith.constant 0 : index
    %c0_10 = arith.constant 0 : index
    %5 = vector.load %arg4[%c0_9, %c0_10] : memref<16x128xf32, #tpu.memory_space<vmem>>, vector<16x128xf32>
    %6 = arith.subf %3, %2 : vector<16x128xf32>
    %7 = vector.broadcast %1 : vector<1x128xf32> to vector<16x128xf32>
    %8 = arith.mulf %7, %6 : vector<16x128xf32>
    %9 = arith.addf %2, %8 : vector<16x128xf32>
    %10 = arith.subf %5, %4 : vector<16x128xf32>
    %11 = vector.broadcast %1 : vector<1x128xf32> to vector<16x128xf32>
    %12 = arith.mulf %11, %10 : vector<16x128xf32>
    %13 = arith.addf %4, %12 : vector<16x128xf32>
    %14 = arith.subf %13, %9 : vector<16x128xf32>
    %15 = vector.broadcast %0 : vector<16x1xf32> to vector<16x128xf32>
    %16 = arith.mulf %15, %14 : vector<16x128xf32>
    %17 = arith.addf %9, %16 : vector<16x128xf32>
    %c0_11 = arith.constant 0 : index
    %c0_12 = arith.constant 0 : index
    %18 = vector.load %arg7[%c0_11, %c0_12] : memref<16x128xf32, #tpu.memory_space<vmem>>, vector<16x128xf32>
    tpu.vector_store %arg7[%c0_11, %c0_12], %17 {strides = array<i32>} : memref<16x128xf32, #tpu.memory_space<vmem>>, vector<16x128xf32>,
    return
  }
  func.func @transform_0(%arg0: i32) -> (i32, i32) {
    %c0_i32 = arith.constant 0 : i32
    %c0_i32_0 = arith.constant 0 : i32
    return %arg0, %c0_i32 : i32, i32
  }
  func.func @transform_1(%arg0: i32) -> (i32, i32) {
    %c0_i32 = arith.constant 0 : i32
    %c0_i32_0 = arith.constant 0 : i32
    return %arg0, %c0_i32 : i32, i32
  }
  func.func @transform_2(%arg0: i32) -> (i32, i32) {
    %c0_i32 = arith.constant 0 : i32
    %c0_i32_0 = arith.constant 0 : i32
    return %arg0, %c0_i32 : i32, i32
  }
  func.func @transform_3(%arg0: i32) -> (i32, i32) {
    %c0_i32 = arith.constant 0 : i32
    %c0_i32_0 = arith.constant 0 : i32
    return %arg0, %c0_i32 : i32, i32
  }
  func.func @transform_4(%arg0: i32) -> (i32, i32) {
    %c0_i32 = arith.constant 0 : i32
    %c0_i32_0 = arith.constant 0 : i32
    return %arg0, %c0_i32 : i32, i32
  }
  func.func @transform_5(%arg0: i32) -> (i32, i32) {
    %c0_i32 = arith.constant 0 : i32
    %c0_i32_0 = arith.constant 0 : i32
    %c0_i32_1 = arith.constant 0 : i32
    return %c0_i32, %c0_i32_0 : i32, i32
  }
  func.func @transform_6(%arg0: i32) -> (i32, i32) {
    %c0_i32 = arith.constant 0 : i32
    %c0_i32_0 = arith.constant 0 : i32
    return %arg0, %c0_i32 : i32, i32
  }
}

</mosaic_0001>

<llo_original>
// kernel: net_forward.16
$region0: #{net_forward.16}
  #allocation0 [shape = 'u32[]', space=smem, size = 0x4, offset = 0x4, fixed_abs, tag = 'smem constant byte address 0x4 - core index']
  #allocation1 [shape = 'u32[144,128]{1,0:T(1,128)}', space=vmem, size = 0x12000, scoped, tag = 'internal scratch']
  %s0 = inlined_call_operand.vmem [shape: f32[32,256], index: 0, kind: input, shape index: {}]
  %s1 = inlined_call_operand.vmem [shape: f32[32,256], index: 1, kind: input, shape index: {}]
  %s2 = inlined_call_operand.vmem [shape: f32[32,256], index: 2, kind: input, shape index: {}]
  %s3 = inlined_call_operand.vmem [shape: f32[32,256], index: 3, kind: output, shape index: {}]
  %s4 = sld [smem:[#allocation0]]
  $region45: #{net_forward.16} parent=0
    _
  %s6 = ssub.s32 1, %s4
  %s7 = scalar_select 0, %s6, %s4
  loop: start=0, step=1, limit=4
  $region2: #{net_forward.16} parent=0 // loop_pre_header
    _
  $region3: #{net_forward.16} parent=0 // loop_header
    %s9 = sphi 0, %s13
    %p10 = scmp.ge.s32.totalorder %s9, 4
    %s19 = sphi 0, %s21
    %s22 = sphi 0, %s19
    %s23 = sphi 0, %s22
    %s39 = sphi 0, %s23
    %s45 = sphi 0, %s47
    %s48 = sphi 0, %s45
    %s49 = sphi 0, %s48
    %s65 = sphi 0, %s49
    %s71 = sphi 0, %s73
    %s74 = sphi 0, %s71
    %s75 = sphi 0, %s74
    %s91 = sphi 0, %s75
    %s97 = sphi 0, %s99
    %s100 = sphi 0, %s97
    %s101 = sphi 0, %s100
    %s117 = sphi 0, %s101
  $region4: #{net_forward.16} parent=0 // loop_header_branch
    %12 = sbr.rel (%p10) target = $region8
  $region5: #{net_forward.16} parent=0 // loop_body
    %s14 = ssub.s32 %s9, 1
    %s15 = ssub.s32 %s9, 2
    %s16 = sadd.s32 %s9, 1
    %s17 = ssub.s32 %s9, %s16
    %p18 = scmp.eq.s32.totalorder %s17, 0
    %s20 = sadd.s32 %s19, 1
    %s21 = scalar_select %p18, %s19, %s20
    %p24 = pneg %p18
    %p25 = scmp.eq.s32.totalorder %s9, 1
    %p26 = por %p24, %p25
    %p27 = scmp.ne.s32.totalorder %s19, %s22
    %p28 = scmp.eq.s32.totalorder %s9, 0
    %p29 = por %p27, %p28
    %p30 = scmp.ne.s32.totalorder %s19, %s22
    %p31 = scmp.eq.s32.totalorder %s14, 1
    %p32 = por %p30, %p31
    %p33 = scmp.ne.s32.totalorder %s22, %s23
    %p34 = scmp.eq.s32.totalorder %s14, 0
    %p35 = por %p33, %p34
    %p36 = scmp.ne.s32.totalorder %s22, %s23
    %p37 = scmp.eq.s32.totalorder %s15, 1
    %p38 = por %p36, %p37
    %p40 = scmp.ne.s32.totalorder %s23, %s39
    %p41 = scmp.eq.s32.totalorder %s15, 0
    %p42 = por %p40, %p41
    %s43 = ssub.s32 %s9, %s16
    %p44 = scmp.eq.s32.totalorder %s43, 0
    %s46 = sadd.s32 %s45, 1
    %s47 = scalar_select %p44, %s45, %s46
    %p50 = pneg %p44
    %p51 = scmp.eq.s32.totalorder %s9, 1
    %p52 = por %p50, %p51
    %p53 = scmp.ne.s32.totalorder %s45, %s48
    %p54 = scmp.eq.s32.totalorder %s9, 0
    %p55 = por %p53, %p54
    %p56 = scmp.ne.s32.totalorder %s45, %s48
    %p57 = scmp.eq.s32.totalorder %s14, 1
    %p58 = por %p56, %p57
    %p59 = scmp.ne.s32.totalorder %s48, %s49
    %p60 = scmp.eq.s32.totalorder %s14, 0
    %p61 = por %p59, %p60
    %p62 = scmp.ne.s32.totalorder %s48, %s49
    %p63 = scmp.eq.s32.totalorder %s15, 1
    %p64 = por %p62, %p63
    %p66 = scmp.ne.s32.totalorder %s49, %s65
    %p67 = scmp.eq.s32.totalorder %s15, 0
    %p68 = por %p66, %p67
    %s69 = ssub.s32 %s9, %s16
    %p70 = scmp.eq.s32.totalorder %s69, 0
    %s72 = sadd.s32 %s71, 1
    %s73 = scalar_select %p70, %s71, %s72
    %p76 = pneg %p70
    %p77 = scmp.eq.s32.totalorder %s9, 1
    %p78 = por %p76, %p77
    %p79 = scmp.ne.s32.totalorder %s71, %s74
    %p80 = scmp.eq.s32.totalorder %s9, 0
    %p81 = por %p79, %p80
    %p82 = scmp.ne.s32.totalorder %s71, %s74
    %p83 = scmp.eq.s32.totalorder %s14, 1
    %p84 = por %p82, %p83
    %p85 = scmp.ne.s32.totalorder %s74, %s75
    %p86 = scmp.eq.s32.totalorder %s14, 0
    %p87 = por %p85, %p86
    %p88 = scmp.ne.s32.totalorder %s74, %s75
    %p89 = scmp.eq.s32.totalorder %s15, 1
    %p90 = por %p88, %p89
    %p92 = scmp.ne.s32.totalorder %s75, %s91
    %p93 = scmp.eq.s32.totalorder %s15, 0
    %p94 = por %p92, %p93
    %s95 = ssub.s32 %s9, %s16
    %p96 = scmp.eq.s32.totalorder %s95, 0
    %s98 = sadd.s32 %s97, 1
    %s99 = scalar_select %p96, %s97, %s98
    %p102 = pneg %p96
    %p103 = scmp.eq.s32.totalorder %s9, 1
    %p104 = por %p102, %p103
    %p105 = scmp.ne.s32.totalorder %s97, %s100
    %p106 = scmp.eq.s32.totalorder %s9, 0
    %p107 = por %p105, %p106
    %p108 = scmp.ne.s32.totalorder %s97, %s100
    %p109 = scmp.eq.s32.totalorder %s14, 1
    %p110 = por %p108, %p109
    %p111 = scmp.ne.s32.totalorder %s100, %s101
    %p112 = scmp.eq.s32.totalorder %s14, 0
    %p113 = por %p111, %p112
    %p114 = scmp.ne.s32.totalorder %s100, %s101
    %p115 = scmp.eq.s32.totalorder %s15, 1
    %p116 = por %p114, %p115
    %p118 = scmp.ne.s32.totalorder %s101, %s117
    %p119 = scmp.eq.s32.totalorder %s15, 0
    %p120 = por %p118, %p119
    %p121 = scmp.le.s32.totalorder 1, %s9
    %p122 = scmp.lt.s32.totalorder %s9, 3
    %p123 = pnand %p121, %p122
    %p124 = pneg %p123
    // Predicated region
    $region9: #{net_forward.16} parent=5 // pred_check
      _
    $region10: #{net_forward.16} parent=5 // pred_check_branch
      %126 = sbr.rel (%p123) target = $region12
    $region11: #{net_forward.16} parent=5 // pred_region
      %s127 = ssub.s32 %s9, 1
    $region12: #{net_forward.16} parent=5 // pred_fallthru
      _
    %p128 = scmp.lt.s32.totalorder %s9, 2
    // Predicated region
    $region13: #{net_forward.16} parent=5 // pred_check
      %p129 = pneg %p128
    $region14: #{net_forward.16} parent=5 // pred_check_branch
      %131 = sbr.rel (%p129) target = $region16
    $region15: #{net_forward.16} parent=5 // pred_region
      // Predicated region
      $region17: #{net_forward.16} parent=15 // pred_check
        %p132 = pneg %p29
      $region18: #{net_forward.16} parent=15 // pred_check_branch
        %134 = sbr.rel (%p132) target = $region20
      $region19: #{net_forward.16} parent=15 // pred_region
        %s135 = smul.u32 2, %s9
        %p136 = scmp.lt.s32.totalorder %s135, 3
        %s137 = scalar_select %p136, %s135, 3
        %s138 = smul.addr %s137, 2
        %s139 = smul.addr %s138, 8
        %s140 = scalar_lea.vmem %s0, %s139
        %s141 = smul.u32 2, %s9
      $region20: #{net_forward.16} parent=15 // pred_fallthru
        _
      // Predicated region
      $region21: #{net_forward.16} parent=15 // pred_check
        %p142 = pneg %p55
      $region22: #{net_forward.16} parent=15 // pred_check_branch
        %144 = sbr.rel (%p142) target = $region24
      $region23: #{net_forward.16} parent=15 // pred_region
        %s145 = smul.u32 2, %s9
        %p146 = scmp.lt.s32.totalorder %s145, 3
        %s147 = scalar_select %p146, %s145, 3
        %s148 = smul.addr %s147, 2
        %s149 = smul.addr %s148, 8
        %s150 = scalar_lea.vmem %s1, %s149
        %s151 = smul.u32 2, %s9
      $region24: #{net_forward.16} parent=15 // pred_fallthru
        _
      // Predicated region
      $region25: #{net_forward.16} parent=15 // pred_check
        %p152 = pneg %p81
      $region26: #{net_forward.16} parent=15 // pred_check_branch
        %154 = sbr.rel (%p152) target = $region28
      $region27: #{net_forward.16} parent=15 // pred_region
        %s155 = smul.u32 2, %s9
        %p156 = scmp.lt.s32.totalorder %s155, 3
        %s157 = scalar_select %p156, %s155, 3
        %s158 = smul.addr %s157, 2
        %s159 = smul.addr %s158, 8
        %s160 = scalar_lea.vmem %s2, %s159
        %s161 = smul.u32 2, %s9
      $region28: #{net_forward.16} parent=15 // pred_fallthru
        _
    $region16: #{net_forward.16} parent=5 // pred_fallthru
      _
    %p162 = scmp.le.s32.totalorder 1, %s9
    %p163 = scmp.lt.s32.totalorder %s9, 3
    %p164 = pnand %p162, %p163
    %p165 = pneg %p164
    // Predicated region
    $region29: #{net_forward.16} parent=5 // pred_check
      _
    $region30: #{net_forward.16} parent=5 // pred_check_branch
      %167 = sbr.rel (%p164) target = $region32
    $region31: #{net_forward.16} parent=5 // pred_region
      %s168 = ssub.s32 %s9, 1
      %s169 = smul.u32 2, %s14
      %p170 = scmp.lt.s32.totalorder %s169, 3
      %s171 = scalar_select %p170, %s169, 3
      %s172 = smul.addr %s171, 2
      %s173 = smul.addr %s172, 8
      %s174 = scalar_lea.vmem %s0, %s173
      %p175 = pneg %p35
      %p176 = pneg %p32
      %s177 = smul.u32 2, %s14
      %p178 = scmp.lt.s32.totalorder %s177, 3
      %s179 = scalar_select %p178, %s177, 3
      %s180 = smul.addr %s179, 2
      %s181 = smul.addr %s180, 8
      %s182 = scalar_lea.vmem %s1, %s181
      %p183 = pneg %p61
      %p184 = pneg %p58
      %s185 = smul.u32 2, %s14
      %p186 = scmp.lt.s32.totalorder %s185, 3
      %s187 = scalar_select %p186, %s185, 3
      %s188 = smul.addr %s187, 2
      %s189 = smul.addr %s188, 8
      %s190 = scalar_lea.vmem %s2, %s189
      %p191 = pneg %p87
      %p192 = pneg %p84
      %p193 = pneg %p113
      %p194 = pneg %p110
      %s195 = smul.u32 2, %s14
      %p196 = scmp.lt.s32.totalorder %s195, 3
      %s197 = scalar_select %p196, %s195, 3
      %s198 = smul.addr %s197, 2
      %s199 = smul.addr %s198, 8
      %s200 = scalar_lea.vmem %s3, %s199
      %s201 = smul.u32 2, %s14
      %p202 = scmp.lt.s32.totalorder %s201, 3
      %s203 = scalar_select %p202, %s201, 3
      %s204 = smul.addr %s203, 2
      %s205 = smul.addr %s204, 8
      %s206 = scalar_lea.vmem %s0, %s205
      %s207 = smul.u32 2, %s14
      %s208 = smul.u32 2, %s14
      %p209 = scmp.lt.s32.totalorder %s208, 3
      %s210 = scalar_select %p209, %s208, 3
      %s211 = smul.addr %s210, 2
      %s212 = smul.addr %s211, 8
      %s213 = scalar_lea.vmem %s1, %s212
      %s214 = smul.u32 2, %s14
      %s215 = smul.u32 2, %s14
      %p216 = scmp.lt.s32.totalorder %s215, 3
      %s217 = scalar_select %p216, %s215, 3
      %s218 = smul.addr %s217, 2
      %s219 = smul.addr %s218, 8
      %s220 = scalar_lea.vmem %s2, %s219
      %s221 = smul.u32 2, %s14
      %s222 = smul.u32 2, %s14
      %p223 = scmp.lt.s32.totalorder %s222, 3
      %s224 = scalar_select %p223, %s222, 3
      %s225 = smul.addr %s224, 2
      %s226 = smul.addr %s225, 8
      %s227 = scalar_lea.vmem %s3, %s226
      %s228 = smul.u32 2, %s14
      %v229 = vld [vmem:[%s206] sm:$0xff]
      %v230 = vld [vmem:[%s206 + $0x8] sm:$0xff]
      %v231 = vld [vmem:[%s206 + $0x10] sm:$0xff]
      %v232 = vld [vmem:[%s206 + $0x18] sm:$0xff]
      %v233 = vld [vmem:[%s213] sm:$0xff]
      %v234 = vld [vmem:[%s213 + $0x8] sm:$0xff]
      %v235 = vld [vmem:[%s213 + $0x10] sm:$0xff]
      %v236 = vld [vmem:[%s213 + $0x18] sm:$0xff]
      %v237 = vmax.f32 %v229, %v233
      %v238 = vmax.f32 %v230, %v234
      %v239 = vmax.f32 %v231, %v235
      %v240 = vmax.f32 %v232, %v236
      %v241 = vld [vmem:[%s220] sm:$0xff]
      %v242 = vld [vmem:[%s220 + $0x8] sm:$0xff]
      %v243 = vld [vmem:[%s220 + $0x10] sm:$0xff]
      %v244 = vld [vmem:[%s220 + $0x18] sm:$0xff]
      %v245 = vmax.f32 %v237, %v241
      %v246 = vmax.f32 %v238, %v242
      %v247 = vmax.f32 %v239, %v243
      %v248 = vmax.f32 %v240, %v244
      %249 = vst [vmem:[%s227] sm:$0xff] %v245
      %250 = vst [vmem:[%s227 + $0x8] sm:$0xff] %v246
      %251 = vst [vmem:[%s227 + $0x10] sm:$0xff] %v247
      %252 = vst [vmem:[%s227 + $0x18] sm:$0xff] %v248
      %s253 = smul.u32 2, %s14
      %p254 = scmp.lt.s32.totalorder %s253, 3
      %s255 = scalar_select %p254, %s253, 3
      %s256 = smul.addr %s255, 2
      %s257 = smul.addr %s256, 8
      %s258 = scalar_lea.vmem %s3, %s257
      // Predicated region
      $region33: #{net_forward.16} parent=31 // pred_check
        %p259 = pneg %p110
      $region34: #{net_forward.16} parent=31 // pred_check_branch
        %261 = sbr.rel (%p259) target = $region36
      $region35: #{net_forward.16} parent=31 // pred_region
        %s262 = smul.u32 2, %s14
      $region36: #{net_forward.16} parent=31 // pred_fallthru
        _
    $region32: #{net_forward.16} parent=5 // pred_fallthru
      _
    %p263 = scmp.le.s32.totalorder 2, %s9
    // Predicated region
    $region37: #{net_forward.16} parent=5 // pred_check
      %p264 = pneg %p263
    $region38: #{net_forward.16} parent=5 // pred_check_branch
      %266 = sbr.rel (%p264) target = $region40
    $region39: #{net_forward.16} parent=5 // pred_region
      %s267 = ssub.s32 %s9, 2
      // Predicated region
      $region41: #{net_forward.16} parent=39 // pred_check
        %p268 = pneg %p116
      $region42: #{net_forward.16} parent=39 // pred_check_branch
        %270 = sbr.rel (%p268) target = $region44
      $region43: #{net_forward.16} parent=39 // pred_region
        %s271 = smul.u32 2, %s15
        %p272 = scmp.lt.s32.totalorder %s271, 3
        %s273 = scalar_select %p272, %s271, 3
        %s274 = smul.addr %s273, 2
        %s275 = smul.addr %s274, 8
        %s276 = scalar_lea.vmem %s3, %s275
      $region44: #{net_forward.16} parent=39 // pred_fallthru
        _
    $region40: #{net_forward.16} parent=5 // pred_fallthru
      _
  $region6: #{net_forward.16} parent=0 // loop_footer
    %s13 = sadd.s32 1, %s9
  $region7: #{net_forward.16} parent=0 // loop_footer_branch
    %8 = sbr.rel target = $region3
  $region8: #{net_forward.16} parent=0 // loop_exit
    _

// kernel: net_forward.15
$region0: #{net_forward.15}
  #allocation0 [shape = 'u32[]', space=smem, size = 0x4, offset = 0x4, fixed_abs, tag = 'smem constant byte address 0x4 - core index']
  #allocation1 [shape = 'u32[144,128]{1,0:T(1,128)}', space=vmem, size = 0x12000, scoped, tag = 'internal scratch']
  %s0 = inlined_call_operand.vmem [shape: bf16[128,256], index: 0, kind: input, shape index: {}]
  %s1 = inlined_call_operand.vmem [shape: bf16[256,128], index: 1, kind: input, shape index: {}]
  %s2 = inlined_call_operand.vmem [shape: f32[1,128], index: 2, kind: input, shape index: {}]
  %s3 = inlined_call_operand.vmem [shape: f32[128,128], index: 3, kind: output, shape index: {}]
  %s4 = sld [smem:[#allocation0]]
  $region45: #{net_forward.15} parent=0
    _
  %s6 = ssub.s32 1, %s4
  %s7 = scalar_select 0, %s6, %s4
  loop: start=0, step=1, limit=4
  $region2: #{net_forward.15} parent=0 // loop_pre_header
    _
  $region3: #{net_forward.15} parent=0 // loop_header
    %s9 = sphi 0, %s13
    %p10 = scmp.ge.s32.totalorder %s9, 4
    %s16 = sphi 0, %s28
    %s17 = sphi 0, %s24
    %s18 = sphi 0, %s16
    %s19 = sphi 0, %s17
    %s20 = sphi 0, %s18
    %s21 = sphi 0, %s19
    %s31 = sphi 0, %s33
    %s34 = sphi 0, %s31
    %s35 = sphi 0, %s34
    %s51 = sphi 0, %s35
    %s57 = sphi 0, %s59
    %s60 = sphi 0, %s57
    %s61 = sphi 0, %s60
    %s77 = sphi 0, %s61
    %s83 = sphi 0, %s85
    %s86 = sphi 0, %s83
    %s87 = sphi 0, %s86
    %s103 = sphi 0, %s87
    %s111 = sphi 0, %s113
    %s114 = sphi 0, %s111
    %s115 = sphi 0, %s114
    %s131 = sphi 0, %s115
  $region4: #{net_forward.15} parent=0 // loop_header_branch
    %12 = sbr.rel (%p10) target = $region8
  $region5: #{net_forward.15} parent=0 // loop_body
    %s14 = ssub.s32 %s9, 1
    %s15 = ssub.s32 %s9, 2
    %s22 = sadd.s32 1, %s17
    %p23 = scmp.ge.s32.totalorder %s22, 1
    %s24 = scalar_select %p23, 0, %s22
    %s25 = sadd.s32 1, %s16
    %s26 = scalar_select %p23, %s25, %s16
    %p27 = scmp.ge.s32.totalorder %s26, 2
    %s28 = scalar_select %p27, 0, %s26
    %s29 = ssub.s32 %s16, %s28
    %p30 = scmp.eq.s32.totalorder %s29, 0
    %s32 = sadd.s32 %s31, 1
    %s33 = scalar_select %p30, %s31, %s32
    %p36 = pneg %p30
    %p37 = scmp.eq.s32.totalorder %s9, 1
    %p38 = por %p36, %p37
    %p39 = scmp.ne.s32.totalorder %s31, %s34
    %p40 = scmp.eq.s32.totalorder %s9, 0
    %p41 = por %p39, %p40
    %p42 = scmp.ne.s32.totalorder %s31, %s34
    %p43 = scmp.eq.s32.totalorder %s14, 1
    %p44 = por %p42, %p43
    %p45 = scmp.ne.s32.totalorder %s34, %s35
    %p46 = scmp.eq.s32.totalorder %s14, 0
    %p47 = por %p45, %p46
    %p48 = scmp.ne.s32.totalorder %s34, %s35
    %p49 = scmp.eq.s32.totalorder %s15, 1
    %p50 = por %p48, %p49
    %p52 = scmp.ne.s32.totalorder %s35, %s51
    %p53 = scmp.eq.s32.totalorder %s15, 0
    %p54 = por %p52, %p53
    %s55 = ssub.s32 %s17, %s24
    %p56 = scmp.eq.s32.totalorder %s55, 0
    %s58 = sadd.s32 %s57, 1
    %s59 = scalar_select %p56, %s57, %s58
    %p62 = pneg %p56
    %p63 = scmp.eq.s32.totalorder %s9, 1
    %p64 = por %p62, %p63
    %p65 = scmp.ne.s32.totalorder %s57, %s60
    %p66 = scmp.eq.s32.totalorder %s9, 0
    %p67 = por %p65, %p66
    %p68 = scmp.ne.s32.totalorder %s57, %s60
    %p69 = scmp.eq.s32.totalorder %s14, 1
    %p70 = por %p68, %p69
    %p71 = scmp.ne.s32.totalorder %s60, %s61
    %p72 = scmp.eq.s32.totalorder %s14, 0
    %p73 = por %p71, %p72
    %p74 = scmp.ne.s32.totalorder %s60, %s61
    %p75 = scmp.eq.s32.totalorder %s15, 1
    %p76 = por %p74, %p75
    %p78 = scmp.ne.s32.totalorder %s61, %s77
    %p79 = scmp.eq.s32.totalorder %s15, 0
    %p80 = por %p78, %p79
    %s81 = ssub.s32 %s17, %s24
    %p82 = scmp.eq.s32.totalorder %s81, 0
    %s84 = sadd.s32 %s83, 1
    %s85 = scalar_select %p82, %s83, %s84
    %p88 = pneg %p82
    %p89 = scmp.eq.s32.totalorder %s9, 1
    %p90 = por %p88, %p89
    %p91 = scmp.ne.s32.totalorder %s83, %s86
    %p92 = scmp.eq.s32.totalorder %s9, 0
    %p93 = por %p91, %p92
    %p94 = scmp.ne.s32.totalorder %s83, %s86
    %p95 = scmp.eq.s32.totalorder %s14, 1
    %p96 = por %p94, %p95
    %p97 = scmp.ne.s32.totalorder %s86, %s87
    %p98 = scmp.eq.s32.totalorder %s14, 0
    %p99 = por %p97, %p98
    %p100 = scmp.ne.s32.totalorder %s86, %s87
    %p101 = scmp.eq.s32.totalorder %s15, 1
    %p102 = por %p100, %p101
    %p104 = scmp.ne.s32.totalorder %s87, %s103
    %p105 = scmp.eq.s32.totalorder %s15, 0
    %p106 = por %p104, %p105
    %s107 = ssub.s32 %s16, %s28
    %s108 = ssub.s32 %s17, %s24
    %s109 = sor.u32 %s107, %s108
    %p110 = scmp.eq.s32.totalorder %s109, 0
    %s112 = sadd.s32 %s111, 1
    %s113 = scalar_select %p110, %s111, %s112
    %p116 = pneg %p110
    %p117 = scmp.eq.s32.totalorder %s9, 1
    %p118 = por %p116, %p117
    %p119 = scmp.ne.s32.totalorder %s111, %s114
    %p120 = scmp.eq.s32.totalorder %s9, 0
    %p121 = por %p119, %p120
    %p122 = scmp.ne.s32.totalorder %s111, %s114
    %p123 = scmp.eq.s32.totalorder %s14, 1
    %p124 = por %p122, %p123
    %p125 = scmp.ne.s32.totalorder %s114, %s115
    %p126 = scmp.eq.s32.totalorder %s14, 0
    %p127 = por %p125, %p126
    %p128 = scmp.ne.s32.totalorder %s114, %s115
    %p129 = scmp.eq.s32.totalorder %s15, 1
    %p130 = por %p128, %p129
    %p132 = scmp.ne.s32.totalorder %s115, %s131
    %p133 = scmp.eq.s32.totalorder %s15, 0
    %p134 = por %p132, %p133
    %p135 = scmp.le.s32.totalorder 1, %s9
    %p136 = scmp.lt.s32.totalorder %s9, 3
    %p137 = pnand %p135, %p136
    %p138 = pneg %p137
    // Predicated region
    $region9: #{net_forward.15} parent=5 // pred_check
      _
    $region10: #{net_forward.15} parent=5 // pred_check_branch
      %140 = sbr.rel (%p137) target = $region12
    $region11: #{net_forward.15} parent=5 // pred_region
      %s141 = ssub.s32 %s9, 1
      // Predicated region
      $region13: #{net_forward.15} parent=11 // pred_check
        %p142 = pneg %p73
      $region14: #{net_forward.15} parent=11 // pred_check_branch
        %144 = sbr.rel (%p142) target = $region16
      $region15: #{net_forward.15} parent=11 // pred_region
        %p145 = scmp.lt.s32.totalorder %s19, 0
        %s146 = scalar_select %p145, %s19, 0
        %s147 = smul.addr %s146, 4
        %s148 = scalar_lea.vmem %s1, %s147
      $region16: #{net_forward.15} parent=11 // pred_fallthru
        _
      // Predicated region
      $region17: #{net_forward.15} parent=11 // pred_check
        %p149 = pneg %p99
      $region18: #{net_forward.15} parent=11 // pred_check_branch
        %151 = sbr.rel (%p149) target = $region20
      $region19: #{net_forward.15} parent=11 // pred_region
        %p152 = scmp.lt.s32.totalorder %s19, 0
        %s153 = scalar_select %p152, %s19, 0
        %s154 = scalar_lea.vmem %s2, %s153
      $region20: #{net_forward.15} parent=11 // pred_fallthru
        _
    $region12: #{net_forward.15} parent=5 // pred_fallthru
      _
    %p155 = scmp.lt.s32.totalorder %s9, 2
    // Predicated region
    $region21: #{net_forward.15} parent=5 // pred_check
      %p156 = pneg %p155
    $region22: #{net_forward.15} parent=5 // pred_check_branch
      %158 = sbr.rel (%p156) target = $region24
    $region23: #{net_forward.15} parent=5 // pred_region
      // Predicated region
      $region25: #{net_forward.15} parent=23 // pred_check
        %p159 = pneg %p41
      $region26: #{net_forward.15} parent=23 // pred_check_branch
        %161 = sbr.rel (%p159) target = $region28
      $region27: #{net_forward.15} parent=23 // pred_region
        %s162 = smul.u32 8, %s16
        %p163 = scmp.lt.s32.totalorder %s162, 15
        %s164 = scalar_select %p163, %s162, 15
        %s165 = smul.addr %s164, 2
        %s166 = smul.addr %s165, 4
        %s167 = scalar_lea.vmem %s0, %s166
        %s168 = smul.u32 8, %s16
      $region28: #{net_forward.15} parent=23 // pred_fallthru
        _
    $region24: #{net_forward.15} parent=5 // pred_fallthru
      _
    %p169 = scmp.le.s32.totalorder 1, %s9
    %p170 = scmp.lt.s32.totalorder %s9, 3
    %p171 = pnand %p169, %p170
    %p172 = pneg %p171
    // Predicated region
    $region29: #{net_forward.15} parent=5 // pred_check
      _
    $region30: #{net_forward.15} parent=5 // pred_check_branch
      %174 = sbr.rel (%p171) target = $region32
    $region31: #{net_forward.15} parent=5 // pred_region
      %s175 = ssub.s32 %s9, 1
      %s176 = smul.u32 8, %s18
      %p177 = scmp.lt.s32.totalorder %s176, 15
      %s178 = scalar_select %p177, %s176, 15
      %s179 = smul.addr %s178, 2
      %s180 = smul.addr %s179, 4
      %s181 = scalar_lea.vmem %s0, %s180
      %p182 = pneg %p47
      %p183 = pneg %p44
      %p184 = scmp.lt.s32.totalorder %s19, 0
      %s185 = scalar_select %p184, %s19, 0
      %s186 = smul.addr %s185, 4
      %s187 = scalar_lea.vmem %s1, %s186
      %p188 = pneg %p73
      %p189 = pneg %p70
      %p190 = scmp.lt.s32.totalorder %s19, 0
      %s191 = scalar_select %p190, %s19, 0
      %s192 = scalar_lea.vmem %s2, %s191
      %p193 = pneg %p99
      %p194 = pneg %p96
      %p195 = pneg %p127
      %p196 = pneg %p124
      %s197 = smul.u32 8, %s18
      %p198 = scmp.lt.s32.totalorder %s197, 15
      %s199 = scalar_select %p198, %s197, 15
      %p200 = scmp.lt.s32.totalorder %s19, 0
      %s201 = scalar_select %p200, %s19, 0
      %s202 = sadd.s32 %s201, %s199
      %s203 = smul.addr %s202, 8
      %s204 = scalar_lea.vmem %s3, %s203
      %s205 = smul.u32 8, %s18
      %p206 = scmp.lt.s32.totalorder %s205, 15
      %s207 = scalar_select %p206, %s205, 15
      %s208 = smul.addr %s207, 2
      %s209 = smul.addr %s208, 4
      %s210 = scalar_lea.vmem %s0, %s209
      %s211 = smul.u32 8, %s18
      %p212 = scmp.lt.s32.totalorder %s19, 0
      %s213 = scalar_select %p212, %s19, 0
      %s214 = smul.addr %s213, 4
      %s215 = scalar_lea.vmem %s1, %s214
      %p216 = scmp.lt.s32.totalorder %s19, 0
      %s217 = scalar_select %p216, %s19, 0
      %s218 = scalar_lea.vmem %s2, %s217
      %s219 = smul.u32 8, %s18
      %p220 = scmp.lt.s32.totalorder %s219, 15
      %s221 = scalar_select %p220, %s219, 15
      %p222 = scmp.lt.s32.totalorder %s19, 0
      %s223 = scalar_select %p222, %s19, 0
      %s224 = sadd.s32 %s223, %s221
      %s225 = smul.addr %s224, 8
      %s226 = scalar_lea.vmem %s3, %s225
      %s227 = smul.u32 8, %s18
      %v229 = vld [vmem:[%s210] sm:$0xff]
      %v230 = vld [vmem:[%s210 + $0x8] sm:$0xff]
      %v231 = vld [vmem:[%s210 + $0x10] sm:$0xff]
      %v232 = vld [vmem:[%s210 + $0x18] sm:$0xff]
      %v233 = vld [vmem:[%s210 + $0x20] sm:$0xff]
      %v234 = vld [vmem:[%s210 + $0x28] sm:$0xff]
      %v235 = vld [vmem:[%s210 + $0x30] sm:$0xff]
      %v236 = vld [vmem:[%s210 + $0x38] sm:$0xff]
      %v237 = vld [vmem:[%s215] sm:$0xf]
      %v238 = vld [vmem:[%s215 + $0x4] sm:$0xf]
      %v239 = vld [vmem:[%s215 + $0x8] sm:$0xf]
      %v240 = vld [vmem:[%s215 + $0xc] sm:$0xf]
      %v241 = vld [vmem:[%s215 + $0x10] sm:$0xf]
      %v242 = vld [vmem:[%s215 + $0x14] sm:$0xf]
      %v243 = vld [vmem:[%s215 + $0x18] sm:$0xf]
      %v244 = vld [vmem:[%s215 + $0x1c] sm:$0xf]
      %v245 = vld [vmem:[%s215 + $0x20] sm:$0xf]
      %v246 = vld [vmem:[%s215 + $0x24] sm:$0xf]
      %v247 = vld [vmem:[%s215 + $0x28] sm:$0xf]
      %v248 = vld [vmem:[%s215 + $0x2c] sm:$0xf]
      %v249 = vld [vmem:[%s215 + $0x30] sm:$0xf]
      %v250 = vld [vmem:[%s215 + $0x34] sm:$0xf]
      %v251 = vld [vmem:[%s215 + $0x38] sm:$0xf]
      %v252 = vld [vmem:[%s215 + $0x3c] sm:$0xf]
      %v253 = vld [vmem:[%s215 + $0x40] sm:$0xf]
      %v254 = vld [vmem:[%s215 + $0x44] sm:$0xf]
      %v255 = vld [vmem:[%s215 + $0x48] sm:$0xf]
      %v256 = vld [vmem:[%s215 + $0x4c] sm:$0xf]
      %v257 = vld [vmem:[%s215 + $0x50] sm:$0xf]
      %v258 = vld [vmem:[%s215 + $0x54] sm:$0xf]
      %v259 = vld [vmem:[%s215 + $0x58] sm:$0xf]
      %v260 = vld [vmem:[%s215 + $0x5c] sm:$0xf]
      %v261 = vld [vmem:[%s215 + $0x60] sm:$0xf]
      %v262 = vld [vmem:[%s215 + $0x64] sm:$0xf]
      %v263 = vld [vmem:[%s215 + $0x68] sm:$0xf]
      %v264 = vld [vmem:[%s215 + $0x6c] sm:$0xf]
      %v265 = vld [vmem:[%s215 + $0x70] sm:$0xf]
      %v266 = vld [vmem:[%s215 + $0x74] sm:$0xf]
      %v267 = vld [vmem:[%s215 + $0x78] sm:$0xf]
      %v268 = vld [vmem:[%s215 + $0x7c] sm:$0xf]
      %v269 = vld [vmem:[%s218] sm:$0x1]
      %v271 = vlaneseq
      %v272 = vshrl.u32 %v271, 7
      %v273 = vsub.s32 0, %v272
      %v274 = vrot.slane %v269, %v273
      %v284 = vunpack.c.l.b16 %v229
      %v285 = vunpack.c.h.b16 %v229
      %v286 = vunpack.c.l.b16 %v230
      %v287 = vunpack.c.h.b16 %v230
      %v288 = vunpack.c.l.b16 %v231
      %v289 = vunpack.c.h.b16 %v231
      %v290 = vunpack.c.l.b16 %v232
      %v291 = vunpack.c.h.b16 %v232
      %v292 = vunpack.c.l.b16 %v233
      %v293 = vunpack.c.h.b16 %v233
      %v294 = vunpack.c.l.b16 %v234
      %v295 = vunpack.c.h.b16 %v234
      %v296 = vunpack.c.l.b16 %v235
      %v297 = vunpack.c.h.b16 %v235
      %v298 = vunpack.c.l.b16 %v236
      %v299 = vunpack.c.h.b16 %v236
      %v300 = vpack.c.b16 %v286, %v284
      %v301 = vpack.c.b16 %v287, %v285
      %v302 = vpack.c.b16 %v290, %v288
      %v303 = vpack.c.b16 %v291, %v289
      %v304 = vpack.c.b16 %v294, %v292
      %v305 = vpack.c.b16 %v295, %v293
      %v306 = vpack.c.b16 %v298, %v296
      %v307 = vpack.c.b16 %v299, %v297
      %v348 = vunpack.c.l.b16 %v237
      %v349 = vunpack.c.l.b16 %v238
      %v350 = vunpack.c.l.b16 %v239
      %v351 = vunpack.c.l.b16 %v240
      %v352 = vunpack.c.l.b16 %v241
      %v353 = vunpack.c.l.b16 %v242
      %v354 = vunpack.c.l.b16 %v243
      %v355 = vunpack.c.l.b16 %v244
      %v356 = vunpack.c.l.b16 %v245
      %v357 = vunpack.c.l.b16 %v246
      %v358 = vunpack.c.l.b16 %v247
      %v359 = vunpack.c.l.b16 %v248
      %v360 = vunpack.c.l.b16 %v249
      %v361 = vunpack.c.l.b16 %v250
      %v362 = vunpack.c.l.b16 %v251
      %v363 = vunpack.c.l.b16 %v252
      %v364 = vunpack.c.l.b16 %v253
      %v365 = vunpack.c.l.b16 %v254
      %v366 = vunpack.c.l.b16 %v255
      %v367 = vunpack.c.l.b16 %v256
      %v368 = vunpack.c.l.b16 %v257
      %v369 = vunpack.c.l.b16 %v258
      %v370 = vunpack.c.l.b16 %v259
      %v371 = vunpack.c.l.b16 %v260
      %v372 = vunpack.c.l.b16 %v261
      %v373 = vunpack.c.l.b16 %v262
      %v374 = vunpack.c.l.b16 %v263
      %v375 = vunpack.c.l.b16 %v264
      %v376 = vunpack.c.l.b16 %v265
      %v377 = vunpack.c.l.b16 %v266
      %v378 = vunpack.c.l.b16 %v267
      %v379 = vunpack.c.l.b16 %v268
      %v380 = vpack.c.b16 %v349, %v348
      %v381 = vpack.c.b16 %v351, %v350
      %v382 = vpack.c.b16 %v353, %v352
      %v383 = vpack.c.b16 %v355, %v354
      %v384 = vpack.c.b16 %v357, %v356
      %v385 = vpack.c.b16 %v359, %v358
      %v386 = vpack.c.b16 %v361, %v360
      %v387 = vpack.c.b16 %v363, %v362
      %v388 = vpack.c.b16 %v365, %v364
      %v389 = vpack.c.b16 %v367, %v366
      %v390 = vpack.c.b16 %v369, %v368
      %v391 = vpack.c.b16 %v371, %v370
      %v392 = vpack.c.b16 %v373, %v372
      %v393 = vpack.c.b16 %v375, %v374
      %v394 = vpack.c.b16 %v377, %v376
      %v395 = vpack.c.b16 %v379, %v378
      %412 = vmatprep.subr.bf16.mxu0 0
      %413 = vmatpush1.bf16.msra.mxu0 %v387
      %414 = vmatprep.subr.bf16.mxu0 0
      %415 = vmatpush1.bf16.msra.mxu0 %v386
      %416 = vmatprep.subr.bf16.mxu0 0
      %417 = vmatpush1.bf16.msra.mxu0 %v385
      %418 = vmatprep.subr.bf16.mxu0 0
      %419 = vmatpush1.bf16.msra.mxu0 %v384
      %420 = vmatprep.subr.bf16.mxu0 0
      %421 = vmatpush1.bf16.msra.mxu0 %v383
      %422 = vmatprep.subr.bf16.mxu0 0
      %423 = vmatpush1.bf16.msra.mxu0 %v382
      %424 = vmatprep.subr.bf16.mxu0 0
      %425 = vmatpush1.bf16.msra.mxu0 %v381
      %426 = vmatprep.subr.bf16.mxu0 0
      %427 = vmatpush1.bf16.msra.mxu0 %v380
      %428 = vmatprep.subr.bf16.mxu0 0
      %429 = vmatpush2.bf16.msra.mxu0 %v395
      %430 = vmatprep.subr.bf16.mxu0 0
      %431 = vmatpush2.bf16.msra.mxu0 %v394
      %432 = vmatprep.subr.bf16.mxu0 0
      %433 = vmatpush2.bf16.msra.mxu0 %v393
      %434 = vmatprep.subr.bf16.mxu0 0
      %435 = vmatpush2.bf16.msra.mxu0 %v392
      %436 = vmatprep.subr.bf16.mxu0 0
      %437 = vmatpush2.bf16.msra.mxu0 %v391
      %438 = vmatprep.subr.bf16.mxu0 0
      %439 = vmatpush2.bf16.msra.mxu0 %v390
      %440 = vmatprep.subr.bf16.mxu0 0
      %441 = vmatpush2.bf16.msra.mxu0 %v389
      %442 = vmatprep.subr.bf16.mxu0 0
      %443 = vmatpush2.bf16.msra.mxu0 %v388
      %444 = vmatprep.mubr.bf16.mxu0 %v301
      %445 = vmatmul.mubr.bf16.gmra.mxu0 %v300
      %v446 = vpop.f32.mrf.mxu0
      %v447 = vadd.f32 %v274, %v446
      %v448 = vpop.f32.mrf.mxu0
      %v449 = vpop.f32.mrf.mxu0
      %v450 = vadd.f32 %v274, %v449
      %v451 = vpop.f32.mrf.mxu0
      %452 = vmatprep.mubr.bf16.mxu0 %v303
      %453 = vmatmul.mubr.bf16.gmra.mxu0 %v302
      %v454 = vpop.f32.mrf.mxu0
      %v455 = vadd.f32 %v274, %v454
      %v456 = vpop.f32.mrf.mxu0
      %v457 = vpop.f32.mrf.mxu0
      %v458 = vadd.f32 %v274, %v457
      %v459 = vpop.f32.mrf.mxu0
      %460 = vmatprep.mubr.bf16.mxu0 %v305
      %461 = vmatmul.mubr.bf16.gmra.mxu0 %v304
      %v462 = vpop.f32.mrf.mxu0
      %v463 = vadd.f32 %v274, %v462
      %v464 = vpop.f32.mrf.mxu0
      %v465 = vpop.f32.mrf.mxu0
      %v466 = vadd.f32 %v274, %v465
      %v467 = vpop.f32.mrf.mxu0
      %468 = vmatprep.mubr.bf16.mxu0 %v307
      %469 = vmatmul.mubr.bf16.gmra.mxu0 %v306
      %v470 = vpop.f32.mrf.mxu0
      %v471 = vadd.f32 %v274, %v470
      %v472 = vpop.f32.mrf.mxu0
      %v473 = vpop.f32.mrf.mxu0
      %v474 = vadd.f32 %v274, %v473
      %v475 = vpop.f32.mrf.mxu0
      %476 = vdwg.mxu0
      %v477 = vmax.f32 %v447, 0.0
      %v478 = vmax.f32 %v450, 0.0
      %v479 = vmax.f32 %v455, 0.0
      %v480 = vmax.f32 %v458, 0.0
      %v481 = vmax.f32 %v463, 0.0
      %v482 = vmax.f32 %v466, 0.0
      %v483 = vmax.f32 %v471, 0.0
      %v484 = vmax.f32 %v474, 0.0
      %485 = vst [vmem:[%s226] sm:$0xff] %v477
      %486 = vst [vmem:[%s226 + $0x8] sm:$0xff] %v478
      %487 = vst [vmem:[%s226 + $0x10] sm:$0xff] %v479
      %488 = vst [vmem:[%s226 + $0x18] sm:$0xff] %v480
      %489 = vst [vmem:[%s226 + $0x20] sm:$0xff] %v481
      %490 = vst [vmem:[%s226 + $0x28] sm:$0xff] %v482
      %491 = vst [vmem:[%s226 + $0x30] sm:$0xff] %v483
      %492 = vst [vmem:[%s226 + $0x38] sm:$0xff] %v484
      %s493 = smul.u32 8, %s18
      %p494 = scmp.lt.s32.totalorder %s493, 15
      %s495 = scalar_select %p494, %s493, 15
      %p496 = scmp.lt.s32.totalorder %s19, 0
      %s497 = scalar_select %p496, %s19, 0
      %s498 = sadd.s32 %s497, %s495
      %s499 = smul.addr %s498, 8
      %s500 = scalar_lea.vmem %s3, %s499
      // Predicated region
      $region33: #{net_forward.15} parent=31 // pred_check
        %p501 = pneg %p124
      $region34: #{net_forward.15} parent=31 // pred_check_branch
        %503 = sbr.rel (%p501) target = $region36
      $region35: #{net_forward.15} parent=31 // pred_region
        %s504 = smul.u32 8, %s18
      $region36: #{net_forward.15} parent=31 // pred_fallthru
        _
    $region32: #{net_forward.15} parent=5 // pred_fallthru
      _
    %p505 = scmp.le.s32.totalorder 2, %s9
    // Predicated region
    $region37: #{net_forward.15} parent=5 // pred_check
      %p506 = pneg %p505
    $region38: #{net_forward.15} parent=5 // pred_check_branch
      %508 = sbr.rel (%p506) target = $region40
    $region39: #{net_forward.15} parent=5 // pred_region
      %s509 = ssub.s32 %s9, 2
      // Predicated region
      $region41: #{net_forward.15} parent=39 // pred_check
        %p510 = pneg %p130
      $region42: #{net_forward.15} parent=39 // pred_check_branch
        %512 = sbr.rel (%p510) target = $region44
      $region43: #{net_forward.15} parent=39 // pred_region
        %s513 = smul.u32 8, %s20
        %p514 = scmp.lt.s32.totalorder %s513, 15
        %s515 = scalar_select %p514, %s513, 15
        %p516 = scmp.lt.s32.totalorder %s21, 0
        %s517 = scalar_select %p516, %s21, 0
        %s518 = sadd.s32 %s517, %s515
        %s519 = smul.addr %s518, 8
        %s520 = scalar_lea.vmem %s3, %s519
      $region44: #{net_forward.15} parent=39 // pred_fallthru
        _
    $region40: #{net_forward.15} parent=5 // pred_fallthru
      _
  $region6: #{net_forward.15} parent=0 // loop_footer
    %s13 = sadd.s32 1, %s9
  $region7: #{net_forward.15} parent=0 // loop_footer_branch
    %8 = sbr.rel target = $region3
  $region8: #{net_forward.15} parent=0 // loop_exit
    _

// kernel: net_forward.17
$region0: #{net_forward.17}
  #allocation0 [shape = 'u32[]', space=smem, size = 0x4, offset = 0x4, fixed_abs, tag = 'smem constant byte address 0x4 - core index']
  #allocation1 [shape = 'u32[144,128]{1,0:T(1,128)}', space=vmem, size = 0x12000, scoped, tag = 'internal scratch']
  %s0 = inlined_call_operand.vmem [shape: f32[8,256], index: 0, kind: input, shape index: {}]
  %s1 = inlined_call_operand.vmem [shape: f32[8,256], index: 1, kind: input, shape index: {}]
  %s2 = inlined_call_operand.vmem [shape: f32[8,256], index: 2, kind: input, shape index: {}]
  %s3 = inlined_call_operand.vmem [shape: f32[8,256], index: 3, kind: output, shape index: {}]
  %s4 = sld [smem:[#allocation0]]
  $region22: #{net_forward.17} parent=0
    _
  %s6 = ssub.s32 1, %s4
  %s7 = scalar_select 0, %s6, %s4
  // Predicated region
  $region2: #{net_forward.17} parent=0 // pred_check
    _
  $region3: #{net_forward.17} parent=0 // pred_check_branch
    %9 = sbr.rel (0) target = $region5
  $region4: #{net_forward.17} parent=0 // pred_region
    _
  $region5: #{net_forward.17} parent=0 // pred_fallthru
    _
  // Predicated region
  $region6: #{net_forward.17} parent=0 // pred_check
    _
  $region7: #{net_forward.17} parent=0 // pred_check_branch
    %11 = sbr.rel (0) target = $region9
  $region8: #{net_forward.17} parent=0 // pred_region
    _
  $region9: #{net_forward.17} parent=0 // pred_fallthru
    _
  // Predicated region
  $region10: #{net_forward.17} parent=0 // pred_check
    _
  $region11: #{net_forward.17} parent=0 // pred_check_branch
    %13 = sbr.rel (0) target = $region13
  $region12: #{net_forward.17} parent=0 // pred_region
    _
  $region13: #{net_forward.17} parent=0 // pred_fallthru
    _
  %v14 = vld [vmem:[%s0] sm:$0xff]
  %v15 = vld [vmem:[%s0 + $0x8] sm:$0xff]
  %v16 = vld [vmem:[%s1] sm:$0xff]
  %v17 = vld [vmem:[%s1 + $0x8] sm:$0xff]
  %v18 = vmax.f32 %v14, %v16
  %v19 = vmax.f32 %v15, %v17
  %v20 = vld [vmem:[%s2] sm:$0xff]
  %v21 = vld [vmem:[%s2 + $0x8] sm:$0xff]
  %v22 = vmax.f32 %v18, %v20
  %v23 = vmax.f32 %v19, %v21
  %24 = vst [vmem:[%s3] sm:$0xff] %v22
  %25 = vst [vmem:[%s3 + $0x8] sm:$0xff] %v23
  // Predicated region
  $region14: #{net_forward.17} parent=0 // pred_check
    _
  $region15: #{net_forward.17} parent=0 // pred_check_branch
    %27 = sbr.rel (0) target = $region17
  $region16: #{net_forward.17} parent=0 // pred_region
    _
  $region17: #{net_forward.17} parent=0 // pred_fallthru
    _
  // Predicated region
  $region18: #{net_forward.17} parent=0 // pred_check
    _
  $region19: #{net_forward.17} parent=0 // pred_check_branch
    %29 = sbr.rel (0) target = $region21
  $region20: #{net_forward.17} parent=0 // pred_region
    _
  $region21: #{net_forward.17} parent=0 // pred_fallthru
    _

// kernel: net_forward.18
$region0: #{net_forward.18}
  #allocation0 [shape = 'u32[]', space=smem, size = 0x4, offset = 0x4, fixed_abs, tag = 'smem constant byte address 0x4 - core index']
  #allocation1 [shape = 'u32[144,128]{1,0:T(1,128)}', space=vmem, size = 0x12000, scoped, tag = 'internal scratch']
  %s0 = inlined_call_operand.vmem [shape: bf16[32,128], index: 0, kind: input, shape index: {}]
  %s1 = inlined_call_operand.vmem [shape: bf16[128,128], index: 1, kind: input, shape index: {}]
  %s2 = inlined_call_operand.vmem [shape: f32[1,128], index: 2, kind: input, shape index: {}]
  %s3 = inlined_call_operand.vmem [shape: f32[32,128], index: 3, kind: output, shape index: {}]
  %s4 = sld [smem:[#allocation0]]
  $region45: #{net_forward.18} parent=0
    _
  %s6 = ssub.s32 1, %s4
  %s7 = scalar_select 0, %s6, %s4
  loop: start=0, step=1, limit=4
  $region2: #{net_forward.18} parent=0 // loop_pre_header
    _
  $region3: #{net_forward.18} parent=0 // loop_header
    %s9 = sphi 0, %s13
    %p10 = scmp.ge.s32.totalorder %s9, 4
    %s16 = sphi 0, %s28
    %s17 = sphi 0, %s24
    %s18 = sphi 0, %s16
    %s19 = sphi 0, %s17
    %s20 = sphi 0, %s18
    %s21 = sphi 0, %s19
    %s31 = sphi 0, %s33
    %s34 = sphi 0, %s31
    %s35 = sphi 0, %s34
    %s51 = sphi 0, %s35
    %s57 = sphi 0, %s59
    %s60 = sphi 0, %s57
    %s61 = sphi 0, %s60
    %s77 = sphi 0, %s61
    %s83 = sphi 0, %s85
    %s86 = sphi 0, %s83
    %s87 = sphi 0, %s86
    %s103 = sphi 0, %s87
    %s111 = sphi 0, %s113
    %s114 = sphi 0, %s111
    %s115 = sphi 0, %s114
    %s131 = sphi 0, %s115
  $region4: #{net_forward.18} parent=0 // loop_header_branch
    %12 = sbr.rel (%p10) target = $region8
  $region5: #{net_forward.18} parent=0 // loop_body
    %s14 = ssub.s32 %s9, 1
    %s15 = ssub.s32 %s9, 2
    %s22 = sadd.s32 1, %s17
    %p23 = scmp.ge.s32.totalorder %s22, 1
    %s24 = scalar_select %p23, 0, %s22
    %s25 = sadd.s32 1, %s16
    %s26 = scalar_select %p23, %s25, %s16
    %p27 = scmp.ge.s32.totalorder %s26, 2
    %s28 = scalar_select %p27, 0, %s26
    %s29 = ssub.s32 %s16, %s28
    %p30 = scmp.eq.s32.totalorder %s29, 0
    %s32 = sadd.s32 %s31, 1
    %s33 = scalar_select %p30, %s31, %s32
    %p36 = pneg %p30
    %p37 = scmp.eq.s32.totalorder %s9, 1
    %p38 = por %p36, %p37
    %p39 = scmp.ne.s32.totalorder %s31, %s34
    %p40 = scmp.eq.s32.totalorder %s9, 0
    %p41 = por %p39, %p40
    %p42 = scmp.ne.s32.totalorder %s31, %s34
    %p43 = scmp.eq.s32.totalorder %s14, 1
    %p44 = por %p42, %p43
    %p45 = scmp.ne.s32.totalorder %s34, %s35
    %p46 = scmp.eq.s32.totalorder %s14, 0
    %p47 = por %p45, %p46
    %p48 = scmp.ne.s32.totalorder %s34, %s35
    %p49 = scmp.eq.s32.totalorder %s15, 1
    %p50 = por %p48, %p49
    %p52 = scmp.ne.s32.totalorder %s35, %s51
    %p53 = scmp.eq.s32.totalorder %s15, 0
    %p54 = por %p52, %p53
    %s55 = ssub.s32 %s17, %s24
    %p56 = scmp.eq.s32.totalorder %s55, 0
    %s58 = sadd.s32 %s57, 1
    %s59 = scalar_select %p56, %s57, %s58
    %p62 = pneg %p56
    %p63 = scmp.eq.s32.totalorder %s9, 1
    %p64 = por %p62, %p63
    %p65 = scmp.ne.s32.totalorder %s57, %s60
    %p66 = scmp.eq.s32.totalorder %s9, 0
    %p67 = por %p65, %p66
    %p68 = scmp.ne.s32.totalorder %s57, %s60
    %p69 = scmp.eq.s32.totalorder %s14, 1
    %p70 = por %p68, %p69
    %p71 = scmp.ne.s32.totalorder %s60, %s61
    %p72 = scmp.eq.s32.totalorder %s14, 0
    %p73 = por %p71, %p72
    %p74 = scmp.ne.s32.totalorder %s60, %s61
    %p75 = scmp.eq.s32.totalorder %s15, 1
    %p76 = por %p74, %p75
    %p78 = scmp.ne.s32.totalorder %s61, %s77
    %p79 = scmp.eq.s32.totalorder %s15, 0
    %p80 = por %p78, %p79
    %s81 = ssub.s32 %s17, %s24
    %p82 = scmp.eq.s32.totalorder %s81, 0
    %s84 = sadd.s32 %s83, 1
    %s85 = scalar_select %p82, %s83, %s84
    %p88 = pneg %p82
    %p89 = scmp.eq.s32.totalorder %s9, 1
    %p90 = por %p88, %p89
    %p91 = scmp.ne.s32.totalorder %s83, %s86
    %p92 = scmp.eq.s32.totalorder %s9, 0
    %p93 = por %p91, %p92
    %p94 = scmp.ne.s32.totalorder %s83, %s86
    %p95 = scmp.eq.s32.totalorder %s14, 1
    %p96 = por %p94, %p95
    %p97 = scmp.ne.s32.totalorder %s86, %s87
    %p98 = scmp.eq.s32.totalorder %s14, 0
    %p99 = por %p97, %p98
    %p100 = scmp.ne.s32.totalorder %s86, %s87
    %p101 = scmp.eq.s32.totalorder %s15, 1
    %p102 = por %p100, %p101
    %p104 = scmp.ne.s32.totalorder %s87, %s103
    %p105 = scmp.eq.s32.totalorder %s15, 0
    %p106 = por %p104, %p105
    %s107 = ssub.s32 %s16, %s28
    %s108 = ssub.s32 %s17, %s24
    %s109 = sor.u32 %s107, %s108
    %p110 = scmp.eq.s32.totalorder %s109, 0
    %s112 = sadd.s32 %s111, 1
    %s113 = scalar_select %p110, %s111, %s112
    %p116 = pneg %p110
    %p117 = scmp.eq.s32.totalorder %s9, 1
    %p118 = por %p116, %p117
    %p119 = scmp.ne.s32.totalorder %s111, %s114
    %p120 = scmp.eq.s32.totalorder %s9, 0
    %p121 = por %p119, %p120
    %p122 = scmp.ne.s32.totalorder %s111, %s114
    %p123 = scmp.eq.s32.totalorder %s14, 1
    %p124 = por %p122, %p123
    %p125 = scmp.ne.s32.totalorder %s114, %s115
    %p126 = scmp.eq.s32.totalorder %s14, 0
    %p127 = por %p125, %p126
    %p128 = scmp.ne.s32.totalorder %s114, %s115
    %p129 = scmp.eq.s32.totalorder %s15, 1
    %p130 = por %p128, %p129
    %p132 = scmp.ne.s32.totalorder %s115, %s131
    %p133 = scmp.eq.s32.totalorder %s15, 0
    %p134 = por %p132, %p133
    %p135 = scmp.le.s32.totalorder 1, %s9
    %p136 = scmp.lt.s32.totalorder %s9, 3
    %p137 = pnand %p135, %p136
    %p138 = pneg %p137
    // Predicated region
    $region9: #{net_forward.18} parent=5 // pred_check
      _
    $region10: #{net_forward.18} parent=5 // pred_check_branch
      %140 = sbr.rel (%p137) target = $region12
    $region11: #{net_forward.18} parent=5 // pred_region
      %s141 = ssub.s32 %s9, 1
      // Predicated region
      $region13: #{net_forward.18} parent=11 // pred_check
        %p142 = pneg %p73
      $region14: #{net_forward.18} parent=11 // pred_check_branch
        %144 = sbr.rel (%p142) target = $region16
      $region15: #{net_forward.18} parent=11 // pred_region
        %p145 = scmp.lt.s32.totalorder %s19, 0
        %s146 = scalar_select %p145, %s19, 0
        %s147 = smul.addr %s146, 4
        %s148 = scalar_lea.vmem %s1, %s147
      $region16: #{net_forward.18} parent=11 // pred_fallthru
        _
      // Predicated region
      $region17: #{net_forward.18} parent=11 // pred_check
        %p149 = pneg %p99
      $region18: #{net_forward.18} parent=11 // pred_check_branch
        %151 = sbr.rel (%p149) target = $region20
      $region19: #{net_forward.18} parent=11 // pred_region
        %p152 = scmp.lt.s32.totalorder %s19, 0
        %s153 = scalar_select %p152, %s19, 0
        %s154 = scalar_lea.vmem %s2, %s153
      $region20: #{net_forward.18} parent=11 // pred_fallthru
        _
    $region12: #{net_forward.18} parent=5 // pred_fallthru
      _
    %p155 = scmp.lt.s32.totalorder %s9, 2
    // Predicated region
    $region21: #{net_forward.18} parent=5 // pred_check
      %p156 = pneg %p155
    $region22: #{net_forward.18} parent=5 // pred_check_branch
      %158 = sbr.rel (%p156) target = $region24
    $region23: #{net_forward.18} parent=5 // pred_region
      // Predicated region
      $region25: #{net_forward.18} parent=23 // pred_check
        %p159 = pneg %p41
      $region26: #{net_forward.18} parent=23 // pred_check_branch
        %161 = sbr.rel (%p159) target = $region28
      $region27: #{net_forward.18} parent=23 // pred_region
        %s162 = smul.u32 2, %s16
        %p163 = scmp.lt.s32.totalorder %s162, 3
        %s164 = scalar_select %p163, %s162, 3
        %s165 = smul.addr %s164, 4
        %s166 = scalar_lea.vmem %s0, %s165
        %s167 = smul.u32 2, %s16
      $region28: #{net_forward.18} parent=23 // pred_fallthru
        _
    $region24: #{net_forward.18} parent=5 // pred_fallthru
      _
    %p168 = scmp.le.s32.totalorder 1, %s9
    %p169 = scmp.lt.s32.totalorder %s9, 3
    %p170 = pnand %p168, %p169
    %p171 = pneg %p170
    // Predicated region
    $region29: #{net_forward.18} parent=5 // pred_check
      _
    $region30: #{net_forward.18} parent=5 // pred_check_branch
      %173 = sbr.rel (%p170) target = $region32
    $region31: #{net_forward.18} parent=5 // pred_region
      %s174 = ssub.s32 %s9, 1
      %s175 = smul.u32 2, %s18
      %p176 = scmp.lt.s32.totalorder %s175, 3
      %s177 = scalar_select %p176, %s175, 3
      %s178 = smul.addr %s177, 4
      %s179 = scalar_lea.vmem %s0, %s178
      %p180 = pneg %p47
      %p181 = pneg %p44
      %p182 = scmp.lt.s32.totalorder %s19, 0
      %s183 = scalar_select %p182, %s19, 0
      %s184 = smul.addr %s183, 4
      %s185 = scalar_lea.vmem %s1, %s184
      %p186 = pneg %p73
      %p187 = pneg %p70
      %p188 = scmp.lt.s32.totalorder %s19, 0
      %s189 = scalar_select %p188, %s19, 0
      %s190 = scalar_lea.vmem %s2, %s189
      %p191 = pneg %p99
      %p192 = pneg %p96
      %p193 = pneg %p127
      %p194 = pneg %p124
      %s195 = smul.u32 2, %s18
      %p196 = scmp.lt.s32.totalorder %s195, 3
      %s197 = scalar_select %p196, %s195, 3
      %p198 = scmp.lt.s32.totalorder %s19, 0
      %s199 = scalar_select %p198, %s19, 0
      %s200 = sadd.s32 %s199, %s197
      %s201 = smul.addr %s200, 8
      %s202 = scalar_lea.vmem %s3, %s201
      %s203 = smul.u32 2, %s18
      %p204 = scmp.lt.s32.totalorder %s203, 3
      %s205 = scalar_select %p204, %s203, 3
      %s206 = smul.addr %s205, 4
      %s207 = scalar_lea.vmem %s0, %s206
      %s208 = smul.u32 2, %s18
      %p209 = scmp.lt.s32.totalorder %s19, 0
      %s210 = scalar_select %p209, %s19, 0
      %s211 = smul.addr %s210, 4
      %s212 = scalar_lea.vmem %s1, %s211
      %p213 = scmp.lt.s32.totalorder %s19, 0
      %s214 = scalar_select %p213, %s19, 0
      %s215 = scalar_lea.vmem %s2, %s214
      %s216 = smul.u32 2, %s18
      %p217 = scmp.lt.s32.totalorder %s216, 3
      %s218 = scalar_select %p217, %s216, 3
      %p219 = scmp.lt.s32.totalorder %s19, 0
      %s220 = scalar_select %p219, %s19, 0
      %s221 = sadd.s32 %s220, %s218
      %s222 = smul.addr %s221, 8
      %s223 = scalar_lea.vmem %s3, %s222
      %s224 = smul.u32 2, %s18
      %v226 = vld [vmem:[%s207] sm:$0xf]
      %v227 = vld [vmem:[%s207 + $0x4] sm:$0xf]
      %v228 = vld [vmem:[%s212] sm:$0xf]
      %v229 = vld [vmem:[%s212 + $0x4] sm:$0xf]
      %v230 = vld [vmem:[%s212 + $0x8] sm:$0xf]
      %v231 = vld [vmem:[%s212 + $0xc] sm:$0xf]
      %v232 = vld [vmem:[%s212 + $0x10] sm:$0xf]
      %v233 = vld [vmem:[%s212 + $0x14] sm:$0xf]
      %v234 = vld [vmem:[%s212 + $0x18] sm:$0xf]
      %v235 = vld [vmem:[%s212 + $0x1c] sm:$0xf]
      %v236 = vld [vmem:[%s212 + $0x20] sm:$0xf]
      %v237 = vld [vmem:[%s212 + $0x24] sm:$0xf]
      %v238 = vld [vmem:[%s212 + $0x28] sm:$0xf]
      %v239 = vld [vmem:[%s212 + $0x2c] sm:$0xf]
      %v240 = vld [vmem:[%s212 + $0x30] sm:$0xf]
      %v241 = vld [vmem:[%s212 + $0x34] sm:$0xf]
      %v242 = vld [vmem:[%s212 + $0x38] sm:$0xf]
      %v243 = vld [vmem:[%s212 + $0x3c] sm:$0xf]
      %v244 = vld [vmem:[%s215] sm:$0x1]
      %v246 = vlaneseq
      %v247 = vshrl.u32 %v246, 7
      %v248 = vsub.s32 0, %v247
      %v249 = vrot.slane %v244, %v248
      %v253 = vunpack.c.l.b16 %v226
      %v254 = vunpack.c.l.b16 %v227
      %v255 = vpack.c.b16 %v254, %v253
      %v273 = vunpack.c.l.b16 %v228
      %v274 = vunpack.c.l.b16 %v229
      %v275 = vunpack.c.l.b16 %v230
      %v276 = vunpack.c.l.b16 %v231
      %v277 = vunpack.c.l.b16 %v232
      %v278 = vunpack.c.l.b16 %v233
      %v279 = vunpack.c.l.b16 %v234
      %v280 = vunpack.c.l.b16 %v235
      %v281 = vunpack.c.l.b16 %v236
      %v282 = vunpack.c.l.b16 %v237
      %v283 = vunpack.c.l.b16 %v238
      %v284 = vunpack.c.l.b16 %v239
      %v285 = vunpack.c.l.b16 %v240
      %v286 = vunpack.c.l.b16 %v241
      %v287 = vunpack.c.l.b16 %v242
      %v288 = vunpack.c.l.b16 %v243
      %v289 = vpack.c.b16 %v274, %v273
      %v290 = vpack.c.b16 %v276, %v275
      %v291 = vpack.c.b16 %v278, %v277
      %v292 = vpack.c.b16 %v280, %v279
      %v293 = vpack.c.b16 %v282, %v281
      %v294 = vpack.c.b16 %v284, %v283
      %v295 = vpack.c.b16 %v286, %v285
      %v296 = vpack.c.b16 %v288, %v287
      %305 = vmatprep.subr.bf16.mxu0 0
      %306 = vmatpush1.bf16.msra.mxu0 %v296
      %307 = vmatprep.subr.bf16.mxu0 0
      %308 = vmatpush1.bf16.msra.mxu0 %v295
      %309 = vmatprep.subr.bf16.mxu0 0
      %310 = vmatpush1.bf16.msra.mxu0 %v294
      %311 = vmatprep.subr.bf16.mxu0 0
      %312 = vmatpush1.bf16.msra.mxu0 %v293
      %313 = vmatprep.subr.bf16.mxu0 0
      %314 = vmatpush1.bf16.msra.mxu0 %v292
      %315 = vmatprep.subr.bf16.mxu0 0
      %316 = vmatpush1.bf16.msra.mxu0 %v291
      %317 = vmatprep.subr.bf16.mxu0 0
      %318 = vmatpush1.bf16.msra.mxu0 %v290
      %319 = vmatprep.subr.bf16.mxu0 0
      %320 = vmatpush1.bf16.msra.mxu0 %v289
      %321 = vmatprep.subr.bf16.mxu0 0
      %322 = vmatpush2.bf16.msra.mxu0 0
      %323 = vmatprep.subr.bf16.mxu0 0
      %324 = vmatpush2.bf16.msra.mxu0 0
      %325 = vmatprep.subr.bf16.mxu0 0
      %326 = vmatpush2.bf16.msra.mxu0 0
      %327 = vmatprep.subr.bf16.mxu0 0
      %328 = vmatpush2.bf16.msra.mxu0 0
      %329 = vmatprep.subr.bf16.mxu0 0
      %330 = vmatpush2.bf16.msra.mxu0 0
      %331 = vmatprep.subr.bf16.mxu0 0
      %332 = vmatpush2.bf16.msra.mxu0 0
      %333 = vmatprep.subr.bf16.mxu0 0
      %334 = vmatpush2.bf16.msra.mxu0 0
      %335 = vmatprep.subr.bf16.mxu0 0
      %336 = vmatpush2.bf16.msra.mxu0 0
      %337 = vmatprep.mubr.bf16.mxu0 0
      %338 = vmatmul.mubr.bf16.gmra.mxu0 %v255
      %v339 = vpop.f32.mrf.mxu0
      %v340 = vadd.f32 %v249, %v339
      %v341 = vpop.f32.mrf.mxu0
      %v342 = vpop.f32.mrf.mxu0
      %v343 = vadd.f32 %v249, %v342
      %v344 = vpop.f32.mrf.mxu0
      %345 = vdwg.mxu0
      %v346 = vmax.f32 %v340, 0.0
      %v347 = vmax.f32 %v343, 0.0
      %348 = vst [vmem:[%s223] sm:$0xff] %v346
      %349 = vst [vmem:[%s223 + $0x8] sm:$0xff] %v347
      %s350 = smul.u32 2, %s18
      %p351 = scmp.lt.s32.totalorder %s350, 3
      %s352 = scalar_select %p351, %s350, 3
      %p353 = scmp.lt.s32.totalorder %s19, 0
      %s354 = scalar_select %p353, %s19, 0
      %s355 = sadd.s32 %s354, %s352
      %s356 = smul.addr %s355, 8
      %s357 = scalar_lea.vmem %s3, %s356
      // Predicated region
      $region33: #{net_forward.18} parent=31 // pred_check
        %p358 = pneg %p124
      $region34: #{net_forward.18} parent=31 // pred_check_branch
        %360 = sbr.rel (%p358) target = $region36
      $region35: #{net_forward.18} parent=31 // pred_region
        %s361 = smul.u32 2, %s18
      $region36: #{net_forward.18} parent=31 // pred_fallthru
        _
    $region32: #{net_forward.18} parent=5 // pred_fallthru
      _
    %p362 = scmp.le.s32.totalorder 2, %s9
    // Predicated region
    $region37: #{net_forward.18} parent=5 // pred_check
      %p363 = pneg %p362
    $region38: #{net_forward.18} parent=5 // pred_check_branch
      %365 = sbr.rel (%p363) target = $region40
    $region39: #{net_forward.18} parent=5 // pred_region
      %s366 = ssub.s32 %s9, 2
      // Predicated region
      $region41: #{net_forward.18} parent=39 // pred_check
        %p367 = pneg %p130
      $region42: #{net_forward.18} parent=39 // pred_check_branch
        %369 = sbr.rel (%p367) target = $region44
      $region43: #{net_forward.18} parent=39 // pred_region
        %s370 = smul.u32 2, %s20
        %p371 = scmp.lt.s32.totalorder %s370, 3
        %s372 = scalar_select %p371, %s370, 3
        %p373 = scmp.lt.s32.totalorder %s21, 0
        %s374 = scalar_select %p373, %s21, 0
        %s375 = sadd.s32 %s374, %s372
        %s376 = smul.addr %s375, 8
        %s377 = scalar_lea.vmem %s3, %s376
      $region44: #{net_forward.18} parent=39 // pred_fallthru
        _
    $region40: #{net_forward.18} parent=5 // pred_fallthru
      _
  $region6: #{net_forward.18} parent=0 // loop_footer
    %s13 = sadd.s32 1, %s9
  $region7: #{net_forward.18} parent=0 // loop_footer_branch
    %8 = sbr.rel target = $region3
  $region8: #{net_forward.18} parent=0 // loop_exit
    _

// kernel: net_forward.21
$region0: #{net_forward.21}
  #allocation0 [shape = 'u32[]', space=smem, size = 0x4, offset = 0x4, fixed_abs, tag = 'smem constant byte address 0x4 - core index']
  #allocation1 [shape = 'u32[144,128]{1,0:T(1,128)}', space=vmem, size = 0x12000, scoped, tag = 'internal scratch']
  %s0 = inlined_call_operand.vmem [shape: bf16[32,128], index: 0, kind: input, shape index: {}]
  %s1 = inlined_call_operand.vmem [shape: bf16[128,256], index: 1, kind: input, shape index: {}]
  %s2 = inlined_call_operand.vmem [shape: f32[1,256], index: 2, kind: input, shape index: {}]
  %s3 = inlined_call_operand.vmem [shape: f32[32,256], index: 3, kind: input, shape index: {}]
  %s4 = inlined_call_operand.vmem [shape: f32[32,256], index: 4, kind: output, shape index: {}]
  %s5 = sld [smem:[#allocation0]]
  $region49: #{net_forward.21} parent=0
    _
  %s7 = ssub.s32 1, %s5
  %s8 = scalar_select 0, %s7, %s5
  loop: start=0, step=1, limit=4
  $region2: #{net_forward.21} parent=0 // loop_pre_header
    _
  $region3: #{net_forward.21} parent=0 // loop_header
    %s10 = sphi 0, %s14
    %p11 = scmp.ge.s32.totalorder %s10, 4
    %s17 = sphi 0, %s29
    %s18 = sphi 0, %s25
    %s19 = sphi 0, %s17
    %s20 = sphi 0, %s18
    %s21 = sphi 0, %s19
    %s22 = sphi 0, %s20
    %s32 = sphi 0, %s34
    %s35 = sphi 0, %s32
    %s36 = sphi 0, %s35
    %s52 = sphi 0, %s36
    %s58 = sphi 0, %s60
    %s61 = sphi 0, %s58
    %s62 = sphi 0, %s61
    %s78 = sphi 0, %s62
    %s84 = sphi 0, %s86
    %s87 = sphi 0, %s84
    %s88 = sphi 0, %s87
    %s104 = sphi 0, %s88
    %s112 = sphi 0, %s114
    %s115 = sphi 0, %s112
    %s116 = sphi 0, %s115
    %s132 = sphi 0, %s116
    %s140 = sphi 0, %s142
    %s143 = sphi 0, %s140
    %s144 = sphi 0, %s143
    %s160 = sphi 0, %s144
  $region4: #{net_forward.21} parent=0 // loop_header_branch
    %13 = sbr.rel (%p11) target = $region8
  $region5: #{net_forward.21} parent=0 // loop_body
    %s15 = ssub.s32 %s10, 1
    %s16 = ssub.s32 %s10, 2
    %s23 = sadd.s32 1, %s18
    %p24 = scmp.ge.s32.totalorder %s23, 1
    %s25 = scalar_select %p24, 0, %s23
    %s26 = sadd.s32 1, %s17
    %s27 = scalar_select %p24, %s26, %s17
    %p28 = scmp.ge.s32.totalorder %s27, 2
    %s29 = scalar_select %p28, 0, %s27
    %s30 = ssub.s32 %s17, %s29
    %p31 = scmp.eq.s32.totalorder %s30, 0
    %s33 = sadd.s32 %s32, 1
    %s34 = scalar_select %p31, %s32, %s33
    %p37 = pneg %p31
    %p38 = scmp.eq.s32.totalorder %s10, 1
    %p39 = por %p37, %p38
    %p40 = scmp.ne.s32.totalorder %s32, %s35
    %p41 = scmp.eq.s32.totalorder %s10, 0
    %p42 = por %p40, %p41
    %p43 = scmp.ne.s32.totalorder %s32, %s35
    %p44 = scmp.eq.s32.totalorder %s15, 1
    %p45 = por %p43, %p44
    %p46 = scmp.ne.s32.totalorder %s35, %s36
    %p47 = scmp.eq.s32.totalorder %s15, 0
    %p48 = por %p46, %p47
    %p49 = scmp.ne.s32.totalorder %s35, %s36
    %p50 = scmp.eq.s32.totalorder %s16, 1
    %p51 = por %p49, %p50
    %p53 = scmp.ne.s32.totalorder %s36, %s52
    %p54 = scmp.eq.s32.totalorder %s16, 0
    %p55 = por %p53, %p54
    %s56 = ssub.s32 %s18, %s25
    %p57 = scmp.eq.s32.totalorder %s56, 0
    %s59 = sadd.s32 %s58, 1
    %s60 = scalar_select %p57, %s58, %s59
    %p63 = pneg %p57
    %p64 = scmp.eq.s32.totalorder %s10, 1
    %p65 = por %p63, %p64
    %p66 = scmp.ne.s32.totalorder %s58, %s61
    %p67 = scmp.eq.s32.totalorder %s10, 0
    %p68 = por %p66, %p67
    %p69 = scmp.ne.s32.totalorder %s58, %s61
    %p70 = scmp.eq.s32.totalorder %s15, 1
    %p71 = por %p69, %p70
    %p72 = scmp.ne.s32.totalorder %s61, %s62
    %p73 = scmp.eq.s32.totalorder %s15, 0
    %p74 = por %p72, %p73
    %p75 = scmp.ne.s32.totalorder %s61, %s62
    %p76 = scmp.eq.s32.totalorder %s16, 1
    %p77 = por %p75, %p76
    %p79 = scmp.ne.s32.totalorder %s62, %s78
    %p80 = scmp.eq.s32.totalorder %s16, 0
    %p81 = por %p79, %p80
    %s82 = ssub.s32 %s18, %s25
    %p83 = scmp.eq.s32.totalorder %s82, 0
    %s85 = sadd.s32 %s84, 1
    %s86 = scalar_select %p83, %s84, %s85
    %p89 = pneg %p83
    %p90 = scmp.eq.s32.totalorder %s10, 1
    %p91 = por %p89, %p90
    %p92 = scmp.ne.s32.totalorder %s84, %s87
    %p93 = scmp.eq.s32.totalorder %s10, 0
    %p94 = por %p92, %p93
    %p95 = scmp.ne.s32.totalorder %s84, %s87
    %p96 = scmp.eq.s32.totalorder %s15, 1
    %p97 = por %p95, %p96
    %p98 = scmp.ne.s32.totalorder %s87, %s88
    %p99 = scmp.eq.s32.totalorder %s15, 0
    %p100 = por %p98, %p99
    %p101 = scmp.ne.s32.totalorder %s87, %s88
    %p102 = scmp.eq.s32.totalorder %s16, 1
    %p103 = por %p101, %p102
    %p105 = scmp.ne.s32.totalorder %s88, %s104
    %p106 = scmp.eq.s32.totalorder %s16, 0
    %p107 = por %p105, %p106
    %s108 = ssub.s32 %s17, %s29
    %s109 = ssub.s32 %s18, %s25
    %s110 = sor.u32 %s108, %s109
    %p111 = scmp.eq.s32.totalorder %s110, 0
    %s113 = sadd.s32 %s112, 1
    %s114 = scalar_select %p111, %s112, %s113
    %p117 = pneg %p111
    %p118 = scmp.eq.s32.totalorder %s10, 1
    %p119 = por %p117, %p118
    %p120 = scmp.ne.s32.totalorder %s112, %s115
    %p121 = scmp.eq.s32.totalorder %s10, 0
    %p122 = por %p120, %p121
    %p123 = scmp.ne.s32.totalorder %s112, %s115
    %p124 = scmp.eq.s32.totalorder %s15, 1
    %p125 = por %p123, %p124
    %p126 = scmp.ne.s32.totalorder %s115, %s116
    %p127 = scmp.eq.s32.totalorder %s15, 0
    %p128 = por %p126, %p127
    %p129 = scmp.ne.s32.totalorder %s115, %s116
    %p130 = scmp.eq.s32.totalorder %s16, 1
    %p131 = por %p129, %p130
    %p133 = scmp.ne.s32.totalorder %s116, %s132
    %p134 = scmp.eq.s32.totalorder %s16, 0
    %p135 = por %p133, %p134
    %s136 = ssub.s32 %s17, %s29
    %s137 = ssub.s32 %s18, %s25
    %s138 = sor.u32 %s136, %s137
    %p139 = scmp.eq.s32.totalorder %s138, 0
    %s141 = sadd.s32 %s140, 1
    %s142 = scalar_select %p139, %s140, %s141
    %p145 = pneg %p139
    %p146 = scmp.eq.s32.totalorder %s10, 1
    %p147 = por %p145, %p146
    %p148 = scmp.ne.s32.totalorder %s140, %s143
    %p149 = scmp.eq.s32.totalorder %s10, 0
    %p150 = por %p148, %p149
    %p151 = scmp.ne.s32.totalorder %s140, %s143
    %p152 = scmp.eq.s32.totalorder %s15, 1
    %p153 = por %p151, %p152
    %p154 = scmp.ne.s32.totalorder %s143, %s144
    %p155 = scmp.eq.s32.totalorder %s15, 0
    %p156 = por %p154, %p155
    %p157 = scmp.ne.s32.totalorder %s143, %s144
    %p158 = scmp.eq.s32.totalorder %s16, 1
    %p159 = por %p157, %p158
    %p161 = scmp.ne.s32.totalorder %s144, %s160
    %p162 = scmp.eq.s32.totalorder %s16, 0
    %p163 = por %p161, %p162
    %p164 = scmp.le.s32.totalorder 1, %s10
    %p165 = scmp.lt.s32.totalorder %s10, 3
    %p166 = pnand %p164, %p165
    %p167 = pneg %p166
    // Predicated region
    $region9: #{net_forward.21} parent=5 // pred_check
      _
    $region10: #{net_forward.21} parent=5 // pred_check_branch
      %169 = sbr.rel (%p166) target = $region12
    $region11: #{net_forward.21} parent=5 // pred_region
      %s170 = ssub.s32 %s10, 1
      // Predicated region
      $region13: #{net_forward.21} parent=11 // pred_check
        %p171 = pneg %p74
      $region14: #{net_forward.21} parent=11 // pred_check_branch
        %173 = sbr.rel (%p171) target = $region16
      $region15: #{net_forward.21} parent=11 // pred_region
        %s174 = smul.u32 2, %s20
        %p175 = scmp.lt.s32.totalorder %s174, 1
        %s176 = scalar_select %p175, %s174, 1
        %s177 = smul.addr %s176, 4
        %s178 = scalar_lea.vmem %s1, %s177
        %s179 = smul.u32 2, %s20
      $region16: #{net_forward.21} parent=11 // pred_fallthru
        _
      // Predicated region
      $region17: #{net_forward.21} parent=11 // pred_check
        %p180 = pneg %p100
      $region18: #{net_forward.21} parent=11 // pred_check_branch
        %182 = sbr.rel (%p180) target = $region20
      $region19: #{net_forward.21} parent=11 // pred_region
        %s183 = smul.u32 2, %s20
        %p184 = scmp.lt.s32.totalorder %s183, 1
        %s185 = scalar_select %p184, %s183, 1
        %s186 = scalar_lea.vmem %s2, %s185
        %s187 = smul.u32 2, %s20
      $region20: #{net_forward.21} parent=11 // pred_fallthru
        _
    $region12: #{net_forward.21} parent=5 // pred_fallthru
      _
    %p188 = scmp.lt.s32.totalorder %s10, 2
    // Predicated region
    $region21: #{net_forward.21} parent=5 // pred_check
      %p189 = pneg %p188
    $region22: #{net_forward.21} parent=5 // pred_check_branch
      %191 = sbr.rel (%p189) target = $region24
    $region23: #{net_forward.21} parent=5 // pred_region
      // Predicated region
      $region25: #{net_forward.21} parent=23 // pred_check
        %p192 = pneg %p42
      $region26: #{net_forward.21} parent=23 // pred_check_branch
        %194 = sbr.rel (%p192) target = $region28
      $region27: #{net_forward.21} parent=23 // pred_region
        %s195 = smul.u32 2, %s17
        %p196 = scmp.lt.s32.totalorder %s195, 3
        %s197 = scalar_select %p196, %s195, 3
        %s198 = smul.addr %s197, 4
        %s199 = scalar_lea.vmem %s0, %s198
        %s200 = smul.u32 2, %s17
      $region28: #{net_forward.21} parent=23 // pred_fallthru
        _
      // Predicated region
      $region29: #{net_forward.21} parent=23 // pred_check
        %p201 = pneg %p122
      $region30: #{net_forward.21} parent=23 // pred_check_branch
        %203 = sbr.rel (%p201) target = $region32
      $region31: #{net_forward.21} parent=23 // pred_region
        %s204 = smul.u32 2, %s17
        %s205 = smul.u32 2, %s18
        %p206 = scmp.lt.s32.totalorder %s204, 3
        %s207 = scalar_select %p206, %s204, 3
        %p208 = scmp.lt.s32.totalorder %s205, 1
        %s209 = scalar_select %p208, %s205, 1
        %s210 = smul.addr %s207, 2
        %s211 = sadd.s32 %s209, %s210
        %s212 = smul.addr %s211, 8
        %s213 = scalar_lea.vmem %s3, %s212
        %s214 = smul.u32 2, %s17
        %s215 = smul.u32 2, %s18
      $region32: #{net_forward.21} parent=23 // pred_fallthru
        _
    $region24: #{net_forward.21} parent=5 // pred_fallthru
      _
    %p216 = scmp.le.s32.totalorder 1, %s10
    %p217 = scmp.lt.s32.totalorder %s10, 3
    %p218 = pnand %p216, %p217
    %p219 = pneg %p218
    // Predicated region
    $region33: #{net_forward.21} parent=5 // pred_check
      _
    $region34: #{net_forward.21} parent=5 // pred_check_branch
      %221 = sbr.rel (%p218) target = $region36
    $region35: #{net_forward.21} parent=5 // pred_region
      %s222 = ssub.s32 %s10, 1
      %s223 = smul.u32 2, %s19
      %p224 = scmp.lt.s32.totalorder %s223, 3
      %s225 = scalar_select %p224, %s223, 3
      %s226 = smul.addr %s225, 4
      %s227 = scalar_lea.vmem %s0, %s226
      %p228 = pneg %p48
      %p229 = pneg %p45
      %s230 = smul.u32 2, %s20
      %p231 = scmp.lt.s32.totalorder %s230, 1
      %s232 = scalar_select %p231, %s230, 1
      %s233 = smul.addr %s232, 4
      %s234 = scalar_lea.vmem %s1, %s233
      %p235 = pneg %p74
      %p236 = pneg %p71
      %s237 = smul.u32 2, %s20
      %p238 = scmp.lt.s32.totalorder %s237, 1
      %s239 = scalar_select %p238, %s237, 1
      %s240 = scalar_lea.vmem %s2, %s239
      %p241 = pneg %p100
      %p242 = pneg %p97
      %s243 = smul.u32 2, %s19
      %s244 = smul.u32 2, %s20
      %p245 = scmp.lt.s32.totalorder %s243, 3
      %s246 = scalar_select %p245, %s243, 3
      %p247 = scmp.lt.s32.totalorder %s244, 1
      %s248 = scalar_select %p247, %s244, 1
      %s249 = smul.addr %s246, 2
      %s250 = sadd.s32 %s248, %s249
      %s251 = smul.addr %s250, 8
      %s252 = scalar_lea.vmem %s3, %s251
      %p253 = pneg %p128
      %p254 = pneg %p125
      %p255 = pneg %p156
      %p256 = pneg %p153
      %s257 = smul.u32 2, %s19
      %s258 = smul.u32 2, %s20
      %p259 = scmp.lt.s32.totalorder %s257, 3
      %s260 = scalar_select %p259, %s257, 3
      %p261 = scmp.lt.s32.totalorder %s258, 1
      %s262 = scalar_select %p261, %s258, 1
      %s263 = smul.addr %s260, 2
      %s264 = sadd.s32 %s262, %s263
      %s265 = smul.addr %s264, 8
      %s266 = scalar_lea.vmem %s4, %s265
      %s267 = smul.u32 2, %s19
      %p268 = scmp.lt.s32.totalorder %s267, 3
      %s269 = scalar_select %p268, %s267, 3
      %s270 = smul.addr %s269, 4
      %s271 = scalar_lea.vmem %s0, %s270
      %s272 = smul.u32 2, %s19
      %s273 = smul.u32 2, %s20
      %p274 = scmp.lt.s32.totalorder %s273, 1
      %s275 = scalar_select %p274, %s273, 1
      %s276 = smul.addr %s275, 4
      %s277 = scalar_lea.vmem %s1, %s276
      %s278 = smul.u32 2, %s20
      %s279 = smul.u32 2, %s20
      %p280 = scmp.lt.s32.totalorder %s279, 1
      %s281 = scalar_select %p280, %s279, 1
      %s282 = scalar_lea.vmem %s2, %s281
      %s283 = smul.u32 2, %s20
      %s284 = smul.u32 2, %s19
      %s285 = smul.u32 2, %s20
      %p286 = scmp.lt.s32.totalorder %s284, 3
      %s287 = scalar_select %p286, %s284, 3
      %p288 = scmp.lt.s32.totalorder %s285, 1
      %s289 = scalar_select %p288, %s285, 1
      %s290 = smul.addr %s287, 2
      %s291 = sadd.s32 %s289, %s290
      %s292 = smul.addr %s291, 8
      %s293 = scalar_lea.vmem %s3, %s292
      %s294 = smul.u32 2, %s19
      %s295 = smul.u32 2, %s20
      %s296 = smul.u32 2, %s19
      %s297 = smul.u32 2, %s20
      %p298 = scmp.lt.s32.totalorder %s296, 3
      %s299 = scalar_select %p298, %s296, 3
      %p300 = scmp.lt.s32.totalorder %s297, 1
      %s301 = scalar_select %p300, %s297, 1
      %s302 = smul.addr %s299, 2
      %s303 = sadd.s32 %s301, %s302
      %s304 = smul.addr %s303, 8
      %s305 = scalar_lea.vmem %s4, %s304
      %s306 = smul.u32 2, %s19
      %s307 = smul.u32 2, %s20
      %v309 = vld [vmem:[%s271] sm:$0xf]
      %v310 = vld [vmem:[%s271 + $0x4] sm:$0xf]
      %v311 = vld [vmem:[%s277] sm:$0xff]
      %v312 = vld [vmem:[%s277 + $0x8] sm:$0xff]
      %v313 = vld [vmem:[%s277 + $0x10] sm:$0xff]
      %v314 = vld [vmem:[%s277 + $0x18] sm:$0xff]
      %v315 = vld [vmem:[%s277 + $0x20] sm:$0xff]
      %v316 = vld [vmem:[%s277 + $0x28] sm:$0xff]
      %v317 = vld [vmem:[%s277 + $0x30] sm:$0xff]
      %v318 = vld [vmem:[%s277 + $0x38] sm:$0xff]
      %v319 = vld [vmem:[%s277 + $0x40] sm:$0xff]
      %v320 = vld [vmem:[%s277 + $0x48] sm:$0xff]
      %v321 = vld [vmem:[%s277 + $0x50] sm:$0xff]
      %v322 = vld [vmem:[%s277 + $0x58] sm:$0xff]
      %v323 = vld [vmem:[%s277 + $0x60] sm:$0xff]
      %v324 = vld [vmem:[%s277 + $0x68] sm:$0xff]
      %v325 = vld [vmem:[%s277 + $0x70] sm:$0xff]
      %v326 = vld [vmem:[%s277 + $0x78] sm:$0xff]
      %v327 = vld [vmem:[%s282] sm:$0x3]
      %v329 = vlaneseq
      %v330 = vshrl.u32 %v329, 7
      %v331 = vsub.s32 0, %v330
      %v332 = vrot.slane %v327, %v331
      %v333 = vlaneseq
      %v334 = vshrl.u32 %v333, 7
      %v335 = vsub.s32 1, %v334
      %v336 = vrot.slane %v327, %v335
      %v341 = vunpack.c.l.b16 %v309
      %v342 = vunpack.c.l.b16 %v310
      %v343 = vpack.c.b16 %v342, %v341
      %v361 = vunpack.c.l.b16 %v311
      %v362 = vunpack.c.h.b16 %v311
      %v363 = vunpack.c.l.b16 %v312
      %v364 = vunpack.c.h.b16 %v312
      %v365 = vunpack.c.l.b16 %v313
      %v366 = vunpack.c.h.b16 %v313
      %v367 = vunpack.c.l.b16 %v314
      %v368 = vunpack.c.h.b16 %v314
      %v369 = vunpack.c.l.b16 %v315
      %v370 = vunpack.c.h.b16 %v315
      %v371 = vunpack.c.l.b16 %v316
      %v372 = vunpack.c.h.b16 %v316
      %v373 = vunpack.c.l.b16 %v317
      %v374 = vunpack.c.h.b16 %v317
      %v375 = vunpack.c.l.b16 %v318
      %v376 = vunpack.c.h.b16 %v318
      %v377 = vunpack.c.l.b16 %v319
      %v378 = vunpack.c.h.b16 %v319
      %v379 = vunpack.c.l.b16 %v320
      %v380 = vunpack.c.h.b16 %v320
      %v381 = vunpack.c.l.b16 %v321
      %v382 = vunpack.c.h.b16 %v321
      %v383 = vunpack.c.l.b16 %v322
      %v384 = vunpack.c.h.b16 %v322
      %v385 = vunpack.c.l.b16 %v323
      %v386 = vunpack.c.h.b16 %v323
      %v387 = vunpack.c.l.b16 %v324
      %v388 = vunpack.c.h.b16 %v324
      %v389 = vunpack.c.l.b16 %v325
      %v390 = vunpack.c.h.b16 %v325
      %v391 = vunpack.c.l.b16 %v326
      %v392 = vunpack.c.h.b16 %v326
      %v393 = vpack.c.b16 %v363, %v361
      %v394 = vpack.c.b16 %v364, %v362
      %v395 = vpack.c.b16 %v367, %v365
      %v396 = vpack.c.b16 %v368, %v366
      %v397 = vpack.c.b16 %v371, %v369
      %v398 = vpack.c.b16 %v372, %v370
      %v399 = vpack.c.b16 %v375, %v373
      %v400 = vpack.c.b16 %v376, %v374
      %v401 = vpack.c.b16 %v379, %v377
      %v402 = vpack.c.b16 %v380, %v378
      %v403 = vpack.c.b16 %v383, %v381
      %v404 = vpack.c.b16 %v384, %v382
      %v405 = vpack.c.b16 %v387, %v385
      %v406 = vpack.c.b16 %v388, %v386
      %v407 = vpack.c.b16 %v391, %v389
      %v408 = vpack.c.b16 %v392, %v390
      %425 = vmatprep.subr.bf16.mxu0 %v408
      %426 = vmatpush1.bf16.msra.mxu0 %v407
      %427 = vmatprep.subr.bf16.mxu0 %v406
      %428 = vmatpush1.bf16.msra.mxu0 %v405
      %429 = vmatprep.subr.bf16.mxu0 %v404
      %430 = vmatpush1.bf16.msra.mxu0 %v403
      %431 = vmatprep.subr.bf16.mxu0 %v402
      %432 = vmatpush1.bf16.msra.mxu0 %v401
      %433 = vmatprep.subr.bf16.mxu0 %v400
      %434 = vmatpush1.bf16.msra.mxu0 %v399
      %435 = vmatprep.subr.bf16.mxu0 %v398
      %436 = vmatpush1.bf16.msra.mxu0 %v397
      %437 = vmatprep.subr.bf16.mxu0 %v396
      %438 = vmatpush1.bf16.msra.mxu0 %v395
      %439 = vmatprep.subr.bf16.mxu0 %v394
      %440 = vmatpush1.bf16.msra.mxu0 %v393
      %441 = vmatprep.subr.bf16.mxu0 0
      %442 = vmatpush2.bf16.msra.mxu0 0
      %443 = vmatprep.subr.bf16.mxu0 0
      %444 = vmatpush2.bf16.msra.mxu0 0
      %445 = vmatprep.subr.bf16.mxu0 0
      %446 = vmatpush2.bf16.msra.mxu0 0
      %447 = vmatprep.subr.bf16.mxu0 0
      %448 = vmatpush2.bf16.msra.mxu0 0
      %449 = vmatprep.subr.bf16.mxu0 0
      %450 = vmatpush2.bf16.msra.mxu0 0
      %451 = vmatprep.subr.bf16.mxu0 0
      %452 = vmatpush2.bf16.msra.mxu0 0
      %453 = vmatprep.subr.bf16.mxu0 0
      %454 = vmatpush2.bf16.msra.mxu0 0
      %455 = vmatprep.subr.bf16.mxu0 0
      %456 = vmatpush2.bf16.msra.mxu0 0
      %457 = vmatprep.mubr.bf16.mxu0 0
      %458 = vmatmul.mubr.bf16.gmra.mxu0 %v343
      %v459 = vpop.f32.mrf.mxu0
      %v460 = vadd.f32 %v332, %v459
      %v461 = vpop.f32.mrf.mxu0
      %v462 = vadd.f32 %v336, %v461
      %v463 = vpop.f32.mrf.mxu0
      %v464 = vadd.f32 %v332, %v463
      %v465 = vpop.f32.mrf.mxu0
      %v466 = vadd.f32 %v336, %v465
      %467 = vdwg.mxu0
      %v468 = vld [vmem:[%s293] sm:$0xff]
      %v469 = vld [vmem:[%s293 + $0x8] sm:$0xff]
      %v470 = vld [vmem:[%s293 + $0x10] sm:$0xff]
      %v471 = vld [vmem:[%s293 + $0x18] sm:$0xff]
      %v472 = vadd.f32 %v460, %v468
      %v473 = vadd.f32 %v462, %v469
      %v474 = vadd.f32 %v464, %v470
      %v475 = vadd.f32 %v466, %v471
      %v476 = vmax.f32 %v472, 0.0
      %v477 = vmax.f32 %v473, 0.0
      %v478 = vmax.f32 %v474, 0.0
      %v479 = vmax.f32 %v475, 0.0
      %480 = vst [vmem:[%s305] sm:$0xff] %v476
      %481 = vst [vmem:[%s305 + $0x8] sm:$0xff] %v477
      %482 = vst [vmem:[%s305 + $0x10] sm:$0xff] %v478
      %483 = vst [vmem:[%s305 + $0x18] sm:$0xff] %v479
      %s484 = smul.u32 2, %s19
      %s485 = smul.u32 2, %s20
      %p486 = scmp.lt.s32.totalorder %s484, 3
      %s487 = scalar_select %p486, %s484, 3
      %p488 = scmp.lt.s32.totalorder %s485, 1
      %s489 = scalar_select %p488, %s485, 1
      %s490 = smul.addr %s487, 2
      %s491 = sadd.s32 %s489, %s490
      %s492 = smul.addr %s491, 8
      %s493 = scalar_lea.vmem %s4, %s492
      // Predicated region
      $region37: #{net_forward.21} parent=35 // pred_check
        %p494 = pneg %p153
      $region38: #{net_forward.21} parent=35 // pred_check_branch
        %496 = sbr.rel (%p494) target = $region40
      $region39: #{net_forward.21} parent=35 // pred_region
        %s497 = smul.u32 2, %s19
        %s498 = smul.u32 2, %s20
      $region40: #{net_forward.21} parent=35 // pred_fallthru
        _
    $region36: #{net_forward.21} parent=5 // pred_fallthru
      _
    %p499 = scmp.le.s32.totalorder 2, %s10
    // Predicated region
    $region41: #{net_forward.21} parent=5 // pred_check
      %p500 = pneg %p499
    $region42: #{net_forward.21} parent=5 // pred_check_branch
      %502 = sbr.rel (%p500) target = $region44
    $region43: #{net_forward.21} parent=5 // pred_region
      %s503 = ssub.s32 %s10, 2
      // Predicated region
      $region45: #{net_forward.21} parent=43 // pred_check
        %p504 = pneg %p159
      $region46: #{net_forward.21} parent=43 // pred_check_branch
        %506 = sbr.rel (%p504) target = $region48
      $region47: #{net_forward.21} parent=43 // pred_region
        %s507 = smul.u32 2, %s21
        %s508 = smul.u32 2, %s22
        %p509 = scmp.lt.s32.totalorder %s507, 3
        %s510 = scalar_select %p509, %s507, 3
        %p511 = scmp.lt.s32.totalorder %s508, 1
        %s512 = scalar_select %p511, %s508, 1
        %s513 = smul.addr %s510, 2
        %s514 = sadd.s32 %s512, %s513
        %s515 = smul.addr %s514, 8
        %s516 = scalar_lea.vmem %s4, %s515
      $region48: #{net_forward.21} parent=43 // pred_fallthru
        _
    $region44: #{net_forward.21} parent=5 // pred_fallthru
      _
  $region6: #{net_forward.21} parent=0 // loop_footer
    %s14 = sadd.s32 1, %s10
  $region7: #{net_forward.21} parent=0 // loop_footer_branch
    %9 = sbr.rel target = $region3
  $region8: #{net_forward.21} parent=0 // loop_exit
    _

// kernel: net_forward.19
$region0: #{net_forward.19}
  #allocation0 [shape = 'u32[]', space=smem, size = 0x4, offset = 0x4, fixed_abs, tag = 'smem constant byte address 0x4 - core index']
  #allocation1 [shape = 'u32[144,128]{1,0:T(1,128)}', space=vmem, size = 0x12000, scoped, tag = 'internal scratch']
  %s0 = inlined_call_operand.vmem [shape: bf16[32,640], index: 0, kind: input, shape index: {}]
  %s1 = inlined_call_operand.vmem [shape: bf16[640,128], index: 1, kind: input, shape index: {}]
  %s2 = inlined_call_operand.vmem [shape: f32[1,128], index: 2, kind: input, shape index: {}]
  %s3 = inlined_call_operand.vmem [shape: f32[32,128], index: 3, kind: output, shape index: {}]
  %s4 = sld [smem:[#allocation0]]
  $region45: #{net_forward.19} parent=0
    _
  %s6 = ssub.s32 1, %s4
  %s7 = scalar_select 0, %s6, %s4
  loop: start=0, step=1, limit=4
  $region2: #{net_forward.19} parent=0 // loop_pre_header
    _
  $region3: #{net_forward.19} parent=0 // loop_header
    %s9 = sphi 0, %s13
    %p10 = scmp.ge.s32.totalorder %s9, 4
    %s16 = sphi 0, %s28
    %s17 = sphi 0, %s24
    %s18 = sphi 0, %s16
    %s19 = sphi 0, %s17
    %s20 = sphi 0, %s18
    %s21 = sphi 0, %s19
    %s31 = sphi 0, %s33
    %s34 = sphi 0, %s31
    %s35 = sphi 0, %s34
    %s51 = sphi 0, %s35
    %s57 = sphi 0, %s59
    %s60 = sphi 0, %s57
    %s61 = sphi 0, %s60
    %s77 = sphi 0, %s61
    %s83 = sphi 0, %s85
    %s86 = sphi 0, %s83
    %s87 = sphi 0, %s86
    %s103 = sphi 0, %s87
    %s111 = sphi 0, %s113
    %s114 = sphi 0, %s111
    %s115 = sphi 0, %s114
    %s131 = sphi 0, %s115
  $region4: #{net_forward.19} parent=0 // loop_header_branch
    %12 = sbr.rel (%p10) target = $region8
  $region5: #{net_forward.19} parent=0 // loop_body
    %s14 = ssub.s32 %s9, 1
    %s15 = ssub.s32 %s9, 2
    %s22 = sadd.s32 1, %s17
    %p23 = scmp.ge.s32.totalorder %s22, 1
    %s24 = scalar_select %p23, 0, %s22
    %s25 = sadd.s32 1, %s16
    %s26 = scalar_select %p23, %s25, %s16
    %p27 = scmp.ge.s32.totalorder %s26, 2
    %s28 = scalar_select %p27, 0, %s26
    %s29 = ssub.s32 %s16, %s28
    %p30 = scmp.eq.s32.totalorder %s29, 0
    %s32 = sadd.s32 %s31, 1
    %s33 = scalar_select %p30, %s31, %s32
    %p36 = pneg %p30
    %p37 = scmp.eq.s32.totalorder %s9, 1
    %p38 = por %p36, %p37
    %p39 = scmp.ne.s32.totalorder %s31, %s34
    %p40 = scmp.eq.s32.totalorder %s9, 0
    %p41 = por %p39, %p40
    %p42 = scmp.ne.s32.totalorder %s31, %s34
    %p43 = scmp.eq.s32.totalorder %s14, 1
    %p44 = por %p42, %p43
    %p45 = scmp.ne.s32.totalorder %s34, %s35
    %p46 = scmp.eq.s32.totalorder %s14, 0
    %p47 = por %p45, %p46
    %p48 = scmp.ne.s32.totalorder %s34, %s35
    %p49 = scmp.eq.s32.totalorder %s15, 1
    %p50 = por %p48, %p49
    %p52 = scmp.ne.s32.totalorder %s35, %s51
    %p53 = scmp.eq.s32.totalorder %s15, 0
    %p54 = por %p52, %p53
    %s55 = ssub.s32 %s17, %s24
    %p56 = scmp.eq.s32.totalorder %s55, 0
    %s58 = sadd.s32 %s57, 1
    %s59 = scalar_select %p56, %s57, %s58
    %p62 = pneg %p56
    %p63 = scmp.eq.s32.totalorder %s9, 1
    %p64 = por %p62, %p63
    %p65 = scmp.ne.s32.totalorder %s57, %s60
    %p66 = scmp.eq.s32.totalorder %s9, 0
    %p67 = por %p65, %p66
    %p68 = scmp.ne.s32.totalorder %s57, %s60
    %p69 = scmp.eq.s32.totalorder %s14, 1
    %p70 = por %p68, %p69
    %p71 = scmp.ne.s32.totalorder %s60, %s61
    %p72 = scmp.eq.s32.totalorder %s14, 0
    %p73 = por %p71, %p72
    %p74 = scmp.ne.s32.totalorder %s60, %s61
    %p75 = scmp.eq.s32.totalorder %s15, 1
    %p76 = por %p74, %p75
    %p78 = scmp.ne.s32.totalorder %s61, %s77
    %p79 = scmp.eq.s32.totalorder %s15, 0
    %p80 = por %p78, %p79
    %s81 = ssub.s32 %s17, %s24
    %p82 = scmp.eq.s32.totalorder %s81, 0
    %s84 = sadd.s32 %s83, 1
    %s85 = scalar_select %p82, %s83, %s84
    %p88 = pneg %p82
    %p89 = scmp.eq.s32.totalorder %s9, 1
    %p90 = por %p88, %p89
    %p91 = scmp.ne.s32.totalorder %s83, %s86
    %p92 = scmp.eq.s32.totalorder %s9, 0
    %p93 = por %p91, %p92
    %p94 = scmp.ne.s32.totalorder %s83, %s86
    %p95 = scmp.eq.s32.totalorder %s14, 1
    %p96 = por %p94, %p95
    %p97 = scmp.ne.s32.totalorder %s86, %s87
    %p98 = scmp.eq.s32.totalorder %s14, 0
    %p99 = por %p97, %p98
    %p100 = scmp.ne.s32.totalorder %s86, %s87
    %p101 = scmp.eq.s32.totalorder %s15, 1
    %p102 = por %p100, %p101
    %p104 = scmp.ne.s32.totalorder %s87, %s103
    %p105 = scmp.eq.s32.totalorder %s15, 0
    %p106 = por %p104, %p105
    %s107 = ssub.s32 %s16, %s28
    %s108 = ssub.s32 %s17, %s24
    %s109 = sor.u32 %s107, %s108
    %p110 = scmp.eq.s32.totalorder %s109, 0
    %s112 = sadd.s32 %s111, 1
    %s113 = scalar_select %p110, %s111, %s112
    %p116 = pneg %p110
    %p117 = scmp.eq.s32.totalorder %s9, 1
    %p118 = por %p116, %p117
    %p119 = scmp.ne.s32.totalorder %s111, %s114
    %p120 = scmp.eq.s32.totalorder %s9, 0
    %p121 = por %p119, %p120
    %p122 = scmp.ne.s32.totalorder %s111, %s114
    %p123 = scmp.eq.s32.totalorder %s14, 1
    %p124 = por %p122, %p123
    %p125 = scmp.ne.s32.totalorder %s114, %s115
    %p126 = scmp.eq.s32.totalorder %s14, 0
    %p127 = por %p125, %p126
    %p128 = scmp.ne.s32.totalorder %s114, %s115
    %p129 = scmp.eq.s32.totalorder %s15, 1
    %p130 = por %p128, %p129
    %p132 = scmp.ne.s32.totalorder %s115, %s131
    %p133 = scmp.eq.s32.totalorder %s15, 0
    %p134 = por %p132, %p133
    %p135 = scmp.le.s32.totalorder 1, %s9
    %p136 = scmp.lt.s32.totalorder %s9, 3
    %p137 = pnand %p135, %p136
    %p138 = pneg %p137
    // Predicated region
    $region9: #{net_forward.19} parent=5 // pred_check
      _
    $region10: #{net_forward.19} parent=5 // pred_check_branch
      %140 = sbr.rel (%p137) target = $region12
    $region11: #{net_forward.19} parent=5 // pred_region
      %s141 = ssub.s32 %s9, 1
      // Predicated region
      $region13: #{net_forward.19} parent=11 // pred_check
        %p142 = pneg %p73
      $region14: #{net_forward.19} parent=11 // pred_check_branch
        %144 = sbr.rel (%p142) target = $region16
      $region15: #{net_forward.19} parent=11 // pred_region
        %p145 = scmp.lt.s32.totalorder %s19, 0
        %s146 = scalar_select %p145, %s19, 0
        %s147 = smul.addr %s146, 4
        %s148 = scalar_lea.vmem %s1, %s147
      $region16: #{net_forward.19} parent=11 // pred_fallthru
        _
      // Predicated region
      $region17: #{net_forward.19} parent=11 // pred_check
        %p149 = pneg %p99
      $region18: #{net_forward.19} parent=11 // pred_check_branch
        %151 = sbr.rel (%p149) target = $region20
      $region19: #{net_forward.19} parent=11 // pred_region
        %p152 = scmp.lt.s32.totalorder %s19, 0
        %s153 = scalar_select %p152, %s19, 0
        %s154 = scalar_lea.vmem %s2, %s153
      $region20: #{net_forward.19} parent=11 // pred_fallthru
        _
    $region12: #{net_forward.19} parent=5 // pred_fallthru
      _
    %p155 = scmp.lt.s32.totalorder %s9, 2
    // Predicated region
    $region21: #{net_forward.19} parent=5 // pred_check
      %p156 = pneg %p155
    $region22: #{net_forward.19} parent=5 // pred_check_branch
      %158 = sbr.rel (%p156) target = $region24
    $region23: #{net_forward.19} parent=5 // pred_region
      // Predicated region
      $region25: #{net_forward.19} parent=23 // pred_check
        %p159 = pneg %p41
      $region26: #{net_forward.19} parent=23 // pred_check_branch
        %161 = sbr.rel (%p159) target = $region28
      $region27: #{net_forward.19} parent=23 // pred_region
        %s162 = smul.u32 2, %s16
        %p163 = scmp.lt.s32.totalorder %s162, 3
        %s164 = scalar_select %p163, %s162, 3
        %s165 = smul.addr %s164, 5
        %s166 = smul.addr %s165, 4
        %s167 = scalar_lea.vmem %s0, %s166
        %s168 = smul.u32 2, %s16
      $region28: #{net_forward.19} parent=23 // pred_fallthru
        _
    $region24: #{net_forward.19} parent=5 // pred_fallthru
      _
    %p169 = scmp.le.s32.totalorder 1, %s9
    %p170 = scmp.lt.s32.totalorder %s9, 3
    %p171 = pnand %p169, %p170
    %p172 = pneg %p171
    // Predicated region
    $region29: #{net_forward.19} parent=5 // pred_check
      _
    $region30: #{net_forward.19} parent=5 // pred_check_branch
      %174 = sbr.rel (%p171) target = $region32
    $region31: #{net_forward.19} parent=5 // pred_region
      %s175 = ssub.s32 %s9, 1
      %s176 = smul.u32 2, %s18
      %p177 = scmp.lt.s32.totalorder %s176, 3
      %s178 = scalar_select %p177, %s176, 3
      %s179 = smul.addr %s178, 5
      %s180 = smul.addr %s179, 4
      %s181 = scalar_lea.vmem %s0, %s180
      %p182 = pneg %p47
      %p183 = pneg %p44
      %p184 = scmp.lt.s32.totalorder %s19, 0
      %s185 = scalar_select %p184, %s19, 0
      %s186 = smul.addr %s185, 4
      %s187 = scalar_lea.vmem %s1, %s186
      %p188 = pneg %p73
      %p189 = pneg %p70
      %p190 = scmp.lt.s32.totalorder %s19, 0
      %s191 = scalar_select %p190, %s19, 0
      %s192 = scalar_lea.vmem %s2, %s191
      %p193 = pneg %p99
      %p194 = pneg %p96
      %p195 = pneg %p127
      %p196 = pneg %p124
      %s197 = smul.u32 2, %s18
      %p198 = scmp.lt.s32.totalorder %s197, 3
      %s199 = scalar_select %p198, %s197, 3
      %p200 = scmp.lt.s32.totalorder %s19, 0
      %s201 = scalar_select %p200, %s19, 0
      %s202 = sadd.s32 %s201, %s199
      %s203 = smul.addr %s202, 8
      %s204 = scalar_lea.vmem %s3, %s203
      %s205 = smul.u32 2, %s18
      %p206 = scmp.lt.s32.totalorder %s205, 3
      %s207 = scalar_select %p206, %s205, 3
      %s208 = smul.addr %s207, 5
      %s209 = smul.addr %s208, 4
      %s210 = scalar_lea.vmem %s0, %s209
      %s211 = smul.u32 2, %s18
      %p212 = scmp.lt.s32.totalorder %s19, 0
      %s213 = scalar_select %p212, %s19, 0
      %s214 = smul.addr %s213, 4
      %s215 = scalar_lea.vmem %s1, %s214
      %p216 = scmp.lt.s32.totalorder %s19, 0
      %s217 = scalar_select %p216, %s19, 0
      %s218 = scalar_lea.vmem %s2, %s217
      %s219 = smul.u32 2, %s18
      %p220 = scmp.lt.s32.totalorder %s219, 3
      %s221 = scalar_select %p220, %s219, 3
      %p222 = scmp.lt.s32.totalorder %s19, 0
      %s223 = scalar_select %p222, %s19, 0
      %s224 = sadd.s32 %s223, %s221
      %s225 = smul.addr %s224, 8
      %s226 = scalar_lea.vmem %s3, %s225
      %s227 = smul.u32 2, %s18
      %v229 = vld [vmem:[%s210] sm:$0xff]
      %v230 = vld [vmem:[%s210 + $0x8] sm:$0xff]
      %v231 = vld [vmem:[%s210 + $0x10] sm:$0xf]
      %v232 = vld [vmem:[%s210 + $0x14] sm:$0xff]
      %v233 = vld [vmem:[%s210 + $0x1c] sm:$0xff]
      %v234 = vld [vmem:[%s210 + $0x24] sm:$0xf]
      %v235 = vld [vmem:[%s215] sm:$0xf]
      %v236 = vld [vmem:[%s215 + $0x4] sm:$0xf]
      %v237 = vld [vmem:[%s215 + $0x8] sm:$0xf]
      %v238 = vld [vmem:[%s215 + $0xc] sm:$0xf]
      %v239 = vld [vmem:[%s215 + $0x10] sm:$0xf]
      %v240 = vld [vmem:[%s215 + $0x14] sm:$0xf]
      %v241 = vld [vmem:[%s215 + $0x18] sm:$0xf]
      %v242 = vld [vmem:[%s215 + $0x1c] sm:$0xf]
      %v243 = vld [vmem:[%s215 + $0x20] sm:$0xf]
      %v244 = vld [vmem:[%s215 + $0x24] sm:$0xf]
      %v245 = vld [vmem:[%s215 + $0x28] sm:$0xf]
      %v246 = vld [vmem:[%s215 + $0x2c] sm:$0xf]
      %v247 = vld [vmem:[%s215 + $0x30] sm:$0xf]
      %v248 = vld [vmem:[%s215 + $0x34] sm:$0xf]
      %v249 = vld [vmem:[%s215 + $0x38] sm:$0xf]
      %v250 = vld [vmem:[%s215 + $0x3c] sm:$0xf]
      %v251 = vld [vmem:[%s215 + $0x40] sm:$0xf]
      %v252 = vld [vmem:[%s215 + $0x44] sm:$0xf]
      %v253 = vld [vmem:[%s215 + $0x48] sm:$0xf]
      %v254 = vld [vmem:[%s215 + $0x4c] sm:$0xf]
      %v255 = vld [vmem:[%s215 + $0x50] sm:$0xf]
      %v256 = vld [vmem:[%s215 + $0x54] sm:$0xf]
      %v257 = vld [vmem:[%s215 + $0x58] sm:$0xf]
      %v258 = vld [vmem:[%s215 + $0x5c] sm:$0xf]
      %v259 = vld [vmem:[%s215 + $0x60] sm:$0xf]
      %v260 = vld [vmem:[%s215 + $0x64] sm:$0xf]
      %v261 = vld [vmem:[%s215 + $0x68] sm:$0xf]
      %v262 = vld [vmem:[%s215 + $0x6c] sm:$0xf]
      %v263 = vld [vmem:[%s215 + $0x70] sm:$0xf]
      %v264 = vld [vmem:[%s215 + $0x74] sm:$0xf]
      %v265 = vld [vmem:[%s215 + $0x78] sm:$0xf]
      %v266 = vld [vmem:[%s215 + $0x7c] sm:$0xf]
      %v267 = vld [vmem:[%s215 + $0x80] sm:$0xf]
      %v268 = vld [vmem:[%s215 + $0x84] sm:$0xf]
      %v269 = vld [vmem:[%s215 + $0x88] sm:$0xf]
      %v270 = vld [vmem:[%s215 + $0x8c] sm:$0xf]
      %v271 = vld [vmem:[%s215 + $0x90] sm:$0xf]
      %v272 = vld [vmem:[%s215 + $0x94] sm:$0xf]
      %v273 = vld [vmem:[%s215 + $0x98] sm:$0xf]
      %v274 = vld [vmem:[%s215 + $0x9c] sm:$0xf]
      %v275 = vld [vmem:[%s215 + $0xa0] sm:$0xf]
      %v276 = vld [vmem:[%s215 + $0xa4] sm:$0xf]
      %v277 = vld [vmem:[%s215 + $0xa8] sm:$0xf]
      %v278 = vld [vmem:[%s215 + $0xac] sm:$0xf]
      %v279 = vld [vmem:[%s215 + $0xb0] sm:$0xf]
      %v280 = vld [vmem:[%s215 + $0xb4] sm:$0xf]
      %v281 = vld [vmem:[%s215 + $0xb8] sm:$0xf]
      %v282 = vld [vmem:[%s215 + $0xbc] sm:$0xf]
      %v283 = vld [vmem:[%s215 + $0xc0] sm:$0xf]
      %v284 = vld [vmem:[%s215 + $0xc4] sm:$0xf]
      %v285 = vld [vmem:[%s215 + $0xc8] sm:$0xf]
      %v286 = vld [vmem:[%s215 + $0xcc] sm:$0xf]
      %v287 = vld [vmem:[%s215 + $0xd0] sm:$0xf]
      %v288 = vld [vmem:[%s215 + $0xd4] sm:$0xf]
      %v289 = vld [vmem:[%s215 + $0xd8] sm:$0xf]
      %v290 = vld [vmem:[%s215 + $0xdc] sm:$0xf]
      %v291 = vld [vmem:[%s215 + $0xe0] sm:$0xf]
      %v292 = vld [vmem:[%s215 + $0xe4] sm:$0xf]
      %v293 = vld [vmem:[%s215 + $0xe8] sm:$0xf]
      %v294 = vld [vmem:[%s215 + $0xec] sm:$0xf]
      %v295 = vld [vmem:[%s215 + $0xf0] sm:$0xf]
      %v296 = vld [vmem:[%s215 + $0xf4] sm:$0xf]
      %v297 = vld [vmem:[%s215 + $0xf8] sm:$0xf]
      %v298 = vld [vmem:[%s215 + $0xfc] sm:$0xf]
      %v299 = vld [vmem:[%s215 + $0x100] sm:$0xf]
      %v300 = vld [vmem:[%s215 + $0x104] sm:$0xf]
      %v301 = vld [vmem:[%s215 + $0x108] sm:$0xf]
      %v302 = vld [vmem:[%s215 + $0x10c] sm:$0xf]
      %v303 = vld [vmem:[%s215 + $0x110] sm:$0xf]
      %v304 = vld [vmem:[%s215 + $0x114] sm:$0xf]
      %v305 = vld [vmem:[%s215 + $0x118] sm:$0xf]
      %v306 = vld [vmem:[%s215 + $0x11c] sm:$0xf]
      %v307 = vld [vmem:[%s215 + $0x120] sm:$0xf]
      %v308 = vld [vmem:[%s215 + $0x124] sm:$0xf]
      %v309 = vld [vmem:[%s215 + $0x128] sm:$0xf]
      %v310 = vld [vmem:[%s215 + $0x12c] sm:$0xf]
      %v311 = vld [vmem:[%s215 + $0x130] sm:$0xf]
      %v312 = vld [vmem:[%s215 + $0x134] sm:$0xf]
      %v313 = vld [vmem:[%s215 + $0x138] sm:$0xf]
      %v314 = vld [vmem:[%s215 + $0x13c] sm:$0xf]
      %v315 = vld [vmem:[%s218] sm:$0x1]
      %v317 = vlaneseq
      %v318 = vshrl.u32 %v317, 7
      %v319 = vsub.s32 0, %v318
      %v320 = vrot.slane %v315, %v319
      %v328 = vunpack.c.l.b16 %v229
      %v329 = vunpack.c.h.b16 %v229
      %v330 = vunpack.c.l.b16 %v230
      %v331 = vunpack.c.h.b16 %v230
      %v332 = vunpack.c.l.b16 %v231
      %v333 = vunpack.c.l.b16 %v232
      %v334 = vunpack.c.h.b16 %v232
      %v335 = vunpack.c.l.b16 %v233
      %v336 = vunpack.c.h.b16 %v233
      %v337 = vunpack.c.l.b16 %v234
      %v338 = vpack.c.b16 %v333, %v328
      %v339 = vpack.c.b16 %v334, %v329
      %v340 = vpack.c.b16 %v335, %v330
      %v341 = vpack.c.b16 %v336, %v331
      %v342 = vpack.c.b16 %v337, %v332
      %v428 = vunpack.c.l.b16 %v235
      %v429 = vunpack.c.l.b16 %v236
      %v430 = vunpack.c.l.b16 %v237
      %v431 = vunpack.c.l.b16 %v238
      %v432 = vunpack.c.l.b16 %v239
      %v433 = vunpack.c.l.b16 %v240
      %v434 = vunpack.c.l.b16 %v241
      %v435 = vunpack.c.l.b16 %v242
      %v436 = vunpack.c.l.b16 %v243
      %v437 = vunpack.c.l.b16 %v244
      %v438 = vunpack.c.l.b16 %v245
      %v439 = vunpack.c.l.b16 %v246
      %v440 = vunpack.c.l.b16 %v247
      %v441 = vunpack.c.l.b16 %v248
      %v442 = vunpack.c.l.b16 %v249
      %v443 = vunpack.c.l.b16 %v250
      %v444 = vunpack.c.l.b16 %v251
      %v445 = vunpack.c.l.b16 %v252
      %v446 = vunpack.c.l.b16 %v253
      %v447 = vunpack.c.l.b16 %v254
      %v448 = vunpack.c.l.b16 %v255
      %v449 = vunpack.c.l.b16 %v256
      %v450 = vunpack.c.l.b16 %v257
      %v451 = vunpack.c.l.b16 %v258
      %v452 = vunpack.c.l.b16 %v259
      %v453 = vunpack.c.l.b16 %v260
      %v454 = vunpack.c.l.b16 %v261
      %v455 = vunpack.c.l.b16 %v262
      %v456 = vunpack.c.l.b16 %v263
      %v457 = vunpack.c.l.b16 %v264
      %v458 = vunpack.c.l.b16 %v265
      %v459 = vunpack.c.l.b16 %v266
      %v460 = vunpack.c.l.b16 %v267
      %v461 = vunpack.c.l.b16 %v268
      %v462 = vunpack.c.l.b16 %v269
      %v463 = vunpack.c.l.b16 %v270
      %v464 = vunpack.c.l.b16 %v271
      %v465 = vunpack.c.l.b16 %v272
      %v466 = vunpack.c.l.b16 %v273
      %v467 = vunpack.c.l.b16 %v274
      %v468 = vunpack.c.l.b16 %v275
      %v469 = vunpack.c.l.b16 %v276
      %v470 = vunpack.c.l.b16 %v277
      %v471 = vunpack.c.l.b16 %v278
      %v472 = vunpack.c.l.b16 %v279
      %v473 = vunpack.c.l.b16 %v280
      %v474 = vunpack.c.l.b16 %v281
      %v475 = vunpack.c.l.b16 %v282
      %v476 = vunpack.c.l.b16 %v283
      %v477 = vunpack.c.l.b16 %v284
      %v478 = vunpack.c.l.b16 %v285
      %v479 = vunpack.c.l.b16 %v286
      %v480 = vunpack.c.l.b16 %v287
      %v481 = vunpack.c.l.b16 %v288
      %v482 = vunpack.c.l.b16 %v289
      %v483 = vunpack.c.l.b16 %v290
      %v484 = vunpack.c.l.b16 %v291
      %v485 = vunpack.c.l.b16 %v292
      %v486 = vunpack.c.l.b16 %v293
      %v487 = vunpack.c.l.b16 %v294
      %v488 = vunpack.c.l.b16 %v295
      %v489 = vunpack.c.l.b16 %v296
      %v490 = vunpack.c.l.b16 %v297
      %v491 = vunpack.c.l.b16 %v298
      %v492 = vunpack.c.l.b16 %v299
      %v493 = vunpack.c.l.b16 %v300
      %v494 = vunpack.c.l.b16 %v301
      %v495 = vunpack.c.l.b16 %v302
      %v496 = vunpack.c.l.b16 %v303
      %v497 = vunpack.c.l.b16 %v304
      %v498 = vunpack.c.l.b16 %v305
      %v499 = vunpack.c.l.b16 %v306
      %v500 = vunpack.c.l.b16 %v307
      %v501 = vunpack.c.l.b16 %v308
      %v502 = vunpack.c.l.b16 %v309
      %v503 = vunpack.c.l.b16 %v310
      %v504 = vunpack.c.l.b16 %v311
      %v505 = vunpack.c.l.b16 %v312
      %v506 = vunpack.c.l.b16 %v313
      %v507 = vunpack.c.l.b16 %v314
      %v508 = vpack.c.b16 %v429, %v428
      %v509 = vpack.c.b16 %v431, %v430
      %v510 = vpack.c.b16 %v433, %v432
      %v511 = vpack.c.b16 %v435, %v434
      %v512 = vpack.c.b16 %v437, %v436
      %v513 = vpack.c.b16 %v439, %v438
      %v514 = vpack.c.b16 %v441, %v440
      %v515 = vpack.c.b16 %v443, %v442
      %v516 = vpack.c.b16 %v445, %v444
      %v517 = vpack.c.b16 %v447, %v446
      %v518 = vpack.c.b16 %v449, %v448
      %v519 = vpack.c.b16 %v451, %v450
      %v520 = vpack.c.b16 %v453, %v452
      %v521 = vpack.c.b16 %v455, %v454
      %v522 = vpack.c.b16 %v457, %v456
      %v523 = vpack.c.b16 %v459, %v458
      %v524 = vpack.c.b16 %v461, %v460
      %v525 = vpack.c.b16 %v463, %v462
      %v526 = vpack.c.b16 %v465, %v464
      %v527 = vpack.c.b16 %v467, %v466
      %v528 = vpack.c.b16 %v469, %v468
      %v529 = vpack.c.b16 %v471, %v470
      %v530 = vpack.c.b16 %v473, %v472
      %v531 = vpack.c.b16 %v475, %v474
      %v532 = vpack.c.b16 %v477, %v476
      %v533 = vpack.c.b16 %v479, %v478
      %v534 = vpack.c.b16 %v481, %v480
      %v535 = vpack.c.b16 %v483, %v482
      %v536 = vpack.c.b16 %v485, %v484
      %v537 = vpack.c.b16 %v487, %v486
      %v538 = vpack.c.b16 %v489, %v488
      %v539 = vpack.c.b16 %v491, %v490
      %v540 = vpack.c.b16 %v493, %v492
      %v541 = vpack.c.b16 %v495, %v494
      %v542 = vpack.c.b16 %v497, %v496
      %v543 = vpack.c.b16 %v499, %v498
      %v544 = vpack.c.b16 %v501, %v500
      %v545 = vpack.c.b16 %v503, %v502
      %v546 = vpack.c.b16 %v505, %v504
      %v547 = vpack.c.b16 %v507, %v506
      %588 = vmatprep.subr.bf16.mxu0 0
      %589 = vmatpush1.bf16.msra.mxu0 %v515
      %590 = vmatprep.subr.bf16.mxu0 0
      %591 = vmatpush1.bf16.msra.mxu0 %v514
      %592 = vmatprep.subr.bf16.mxu0 0
      %593 = vmatpush1.bf16.msra.mxu0 %v513
      %594 = vmatprep.subr.bf16.mxu0 0
      %595 = vmatpush1.bf16.msra.mxu0 %v512
      %596 = vmatprep.subr.bf16.mxu0 0
      %597 = vmatpush1.bf16.msra.mxu0 %v511
      %598 = vmatprep.subr.bf16.mxu0 0
      %599 = vmatpush1.bf16.msra.mxu0 %v510
      %600 = vmatprep.subr.bf16.mxu0 0
      %601 = vmatpush1.bf16.msra.mxu0 %v509
      %602 = vmatprep.subr.bf16.mxu0 0
      %603 = vmatpush1.bf16.msra.mxu0 %v508
      %604 = vmatprep.subr.bf16.mxu0 0
      %605 = vmatpush2.bf16.msra.mxu0 %v523
      %606 = vmatprep.subr.bf16.mxu0 0
      %607 = vmatpush2.bf16.msra.mxu0 %v522
      %608 = vmatprep.subr.bf16.mxu0 0
      %609 = vmatpush2.bf16.msra.mxu0 %v521
      %610 = vmatprep.subr.bf16.mxu0 0
      %611 = vmatpush2.bf16.msra.mxu0 %v520
      %612 = vmatprep.subr.bf16.mxu0 0
      %613 = vmatpush2.bf16.msra.mxu0 %v519
      %614 = vmatprep.subr.bf16.mxu0 0
      %615 = vmatpush2.bf16.msra.mxu0 %v518
      %616 = vmatprep.subr.bf16.mxu0 0
      %617 = vmatpush2.bf16.msra.mxu0 %v517
      %618 = vmatprep.subr.bf16.mxu0 0
      %619 = vmatpush2.bf16.msra.mxu0 %v516
      %620 = vmatprep.mubr.bf16.mxu0 %v339
      %621 = vmatmul.mubr.bf16.gmra.mxu0 %v338
      %v622 = vpop.f32.mrf.mxu0
      %v623 = vadd.f32 %v320, %v622
      %v624 = vpop.f32.mrf.mxu0
      %v625 = vpop.f32.mrf.mxu0
      %v626 = vadd.f32 %v320, %v625
      %v627 = vpop.f32.mrf.mxu0
      %628 = vdwg.mxu0
      %629 = vmatprep.subr.bf16.mxu0 0
      %630 = vmatpush1.bf16.msra.mxu0 %v531
      %631 = vmatprep.subr.bf16.mxu0 0
      %632 = vmatpush1.bf16.msra.mxu0 %v530
      %633 = vmatprep.subr.bf16.mxu0 0
      %634 = vmatpush1.bf16.msra.mxu0 %v529
      %635 = vmatprep.subr.bf16.mxu0 0
      %636 = vmatpush1.bf16.msra.mxu0 %v528
      %637 = vmatprep.subr.bf16.mxu0 0
      %638 = vmatpush1.bf16.msra.mxu0 %v527
      %639 = vmatprep.subr.bf16.mxu0 0
      %640 = vmatpush1.bf16.msra.mxu0 %v526
      %641 = vmatprep.subr.bf16.mxu0 0
      %642 = vmatpush1.bf16.msra.mxu0 %v525
      %643 = vmatprep.subr.bf16.mxu0 0
      %644 = vmatpush1.bf16.msra.mxu0 %v524
      %645 = vmatprep.subr.bf16.mxu0 0
      %646 = vmatpush2.bf16.msra.mxu0 %v539
      %647 = vmatprep.subr.bf16.mxu0 0
      %648 = vmatpush2.bf16.msra.mxu0 %v538
      %649 = vmatprep.subr.bf16.mxu0 0
      %650 = vmatpush2.bf16.msra.mxu0 %v537
      %651 = vmatprep.subr.bf16.mxu0 0
      %652 = vmatpush2.bf16.msra.mxu0 %v536
      %653 = vmatprep.subr.bf16.mxu0 0
      %654 = vmatpush2.bf16.msra.mxu0 %v535
      %655 = vmatprep.subr.bf16.mxu0 0
      %656 = vmatpush2.bf16.msra.mxu0 %v534
      %657 = vmatprep.subr.bf16.mxu0 0
      %658 = vmatpush2.bf16.msra.mxu0 %v533
      %659 = vmatprep.subr.bf16.mxu0 0
      %660 = vmatpush2.bf16.msra.mxu0 %v532
      %661 = vmatprep.mubr.bf16.mxu0 %v341
      %662 = vmatmul.mubr.bf16.gmra.mxu0 %v340
      %v663 = vpop.f32.mrf.mxu0
      %v664 = vadd.f32 %v623, %v663
      %v665 = vpop.f32.mrf.mxu0
      %v666 = vpop.f32.mrf.mxu0
      %v667 = vadd.f32 %v626, %v666
      %v668 = vpop.f32.mrf.mxu0
      %669 = vdwg.mxu0
      %670 = vmatprep.subr.bf16.mxu0 0
      %671 = vmatpush1.bf16.msra.mxu0 %v547
      %672 = vmatprep.subr.bf16.mxu0 0
      %673 = vmatpush1.bf16.msra.mxu0 %v546
      %674 = vmatprep.subr.bf16.mxu0 0
      %675 = vmatpush1.bf16.msra.mxu0 %v545
      %676 = vmatprep.subr.bf16.mxu0 0
      %677 = vmatpush1.bf16.msra.mxu0 %v544
      %678 = vmatprep.subr.bf16.mxu0 0
      %679 = vmatpush1.bf16.msra.mxu0 %v543
      %680 = vmatprep.subr.bf16.mxu0 0
      %681 = vmatpush1.bf16.msra.mxu0 %v542
      %682 = vmatprep.subr.bf16.mxu0 0
      %683 = vmatpush1.bf16.msra.mxu0 %v541
      %684 = vmatprep.subr.bf16.mxu0 0
      %685 = vmatpush1.bf16.msra.mxu0 %v540
      %686 = vmatprep.subr.bf16.mxu0 0
      %687 = vmatpush2.bf16.msra.mxu0 0
      %688 = vmatprep.subr.bf16.mxu0 0
      %689 = vmatpush2.bf16.msra.mxu0 0
      %690 = vmatprep.subr.bf16.mxu0 0
      %691 = vmatpush2.bf16.msra.mxu0 0
      %692 = vmatprep.subr.bf16.mxu0 0
      %693 = vmatpush2.bf16.msra.mxu0 0
      %694 = vmatprep.subr.bf16.mxu0 0
      %695 = vmatpush2.bf16.msra.mxu0 0
      %696 = vmatprep.subr.bf16.mxu0 0
      %697 = vmatpush2.bf16.msra.mxu0 0
      %698 = vmatprep.subr.bf16.mxu0 0
      %699 = vmatpush2.bf16.msra.mxu0 0
      %700 = vmatprep.subr.bf16.mxu0 0
      %701 = vmatpush2.bf16.msra.mxu0 0
      %702 = vmatprep.mubr.bf16.mxu0 0
      %703 = vmatmul.mubr.bf16.gmra.mxu0 %v342
      %v704 = vpop.f32.mrf.mxu0
      %v705 = vadd.f32 %v664, %v704
      %v706 = vpop.f32.mrf.mxu0
      %v707 = vpop.f32.mrf.mxu0
      %v708 = vadd.f32 %v667, %v707
      %v709 = vpop.f32.mrf.mxu0
      %710 = vdwg.mxu0
      %v711 = vmax.f32 %v705, 0.0
      %v712 = vmax.f32 %v708, 0.0
      %713 = vst [vmem:[%s226] sm:$0xff] %v711
      %714 = vst [vmem:[%s226 + $0x8] sm:$0xff] %v712
      %s715 = smul.u32 2, %s18
      %p716 = scmp.lt.s32.totalorder %s715, 3
      %s717 = scalar_select %p716, %s715, 3
      %p718 = scmp.lt.s32.totalorder %s19, 0
      %s719 = scalar_select %p718, %s19, 0
      %s720 = sadd.s32 %s719, %s717
      %s721 = smul.addr %s720, 8
      %s722 = scalar_lea.vmem %s3, %s721
      // Predicated region
      $region33: #{net_forward.19} parent=31 // pred_check
        %p723 = pneg %p124
      $region34: #{net_forward.19} parent=31 // pred_check_branch
        %725 = sbr.rel (%p723) target = $region36
      $region35: #{net_forward.19} parent=31 // pred_region
        %s726 = smul.u32 2, %s18
      $region36: #{net_forward.19} parent=31 // pred_fallthru
        _
    $region32: #{net_forward.19} parent=5 // pred_fallthru
      _
    %p727 = scmp.le.s32.totalorder 2, %s9
    // Predicated region
    $region37: #{net_forward.19} parent=5 // pred_check
      %p728 = pneg %p727
    $region38: #{net_forward.19} parent=5 // pred_check_branch
      %730 = sbr.rel (%p728) target = $region40
    $region39: #{net_forward.19} parent=5 // pred_region
      %s731 = ssub.s32 %s9, 2
      // Predicated region
      $region41: #{net_forward.19} parent=39 // pred_check
        %p732 = pneg %p130
      $region42: #{net_forward.19} parent=39 // pred_check_branch
        %734 = sbr.rel (%p732) target = $region44
      $region43: #{net_forward.19} parent=39 // pred_region
        %s735 = smul.u32 2, %s20
        %p736 = scmp.lt.s32.totalorder %s735, 3
        %s737 = scalar_select %p736, %s735, 3
        %p738 = scmp.lt.s32.totalorder %s21, 0
        %s739 = scalar_select %p738, %s21, 0
        %s740 = sadd.s32 %s739, %s737
        %s741 = smul.addr %s740, 8
        %s742 = scalar_lea.vmem %s3, %s741
      $region44: #{net_forward.19} parent=39 // pred_fallthru
        _
    $region40: #{net_forward.19} parent=5 // pred_fallthru
      _
  $region6: #{net_forward.19} parent=0 // loop_footer
    %s13 = sadd.s32 1, %s9
  $region7: #{net_forward.19} parent=0 // loop_footer_branch
    %8 = sbr.rel target = $region3
  $region8: #{net_forward.19} parent=0 // loop_exit
    _

// kernel: net_forward.20
$region0: #{net_forward.20}
  #allocation0 [shape = 'u32[]', space=smem, size = 0x4, offset = 0x4, fixed_abs, tag = 'smem constant byte address 0x4 - core index']
  #allocation1 [shape = 'u32[144,128]{1,0:T(1,128)}', space=vmem, size = 0x12000, scoped, tag = 'internal scratch']
  %s0 = inlined_call_operand.vmem [shape: bf16[32,128], index: 0, kind: input, shape index: {}]
  %s1 = inlined_call_operand.vmem [shape: bf16[128,256], index: 1, kind: input, shape index: {}]
  %s2 = inlined_call_operand.vmem [shape: f32[1,256], index: 2, kind: input, shape index: {}]
  %s3 = inlined_call_operand.vmem [shape: f32[32,256], index: 3, kind: output, shape index: {}]
  %s4 = sld [smem:[#allocation0]]
  $region45: #{net_forward.20} parent=0
    _
  %s6 = ssub.s32 1, %s4
  %s7 = scalar_select 0, %s6, %s4
  loop: start=0, step=1, limit=4
  $region2: #{net_forward.20} parent=0 // loop_pre_header
    _
  $region3: #{net_forward.20} parent=0 // loop_header
    %s9 = sphi 0, %s13
    %p10 = scmp.ge.s32.totalorder %s9, 4
    %s16 = sphi 0, %s28
    %s17 = sphi 0, %s24
    %s18 = sphi 0, %s16
    %s19 = sphi 0, %s17
    %s20 = sphi 0, %s18
    %s21 = sphi 0, %s19
    %s31 = sphi 0, %s33
    %s34 = sphi 0, %s31
    %s35 = sphi 0, %s34
    %s51 = sphi 0, %s35
    %s57 = sphi 0, %s59
    %s60 = sphi 0, %s57
    %s61 = sphi 0, %s60
    %s77 = sphi 0, %s61
    %s83 = sphi 0, %s85
    %s86 = sphi 0, %s83
    %s87 = sphi 0, %s86
    %s103 = sphi 0, %s87
    %s111 = sphi 0, %s113
    %s114 = sphi 0, %s111
    %s115 = sphi 0, %s114
    %s131 = sphi 0, %s115
  $region4: #{net_forward.20} parent=0 // loop_header_branch
    %12 = sbr.rel (%p10) target = $region8
  $region5: #{net_forward.20} parent=0 // loop_body
    %s14 = ssub.s32 %s9, 1
    %s15 = ssub.s32 %s9, 2
    %s22 = sadd.s32 1, %s17
    %p23 = scmp.ge.s32.totalorder %s22, 1
    %s24 = scalar_select %p23, 0, %s22
    %s25 = sadd.s32 1, %s16
    %s26 = scalar_select %p23, %s25, %s16
    %p27 = scmp.ge.s32.totalorder %s26, 2
    %s28 = scalar_select %p27, 0, %s26
    %s29 = ssub.s32 %s16, %s28
    %p30 = scmp.eq.s32.totalorder %s29, 0
    %s32 = sadd.s32 %s31, 1
    %s33 = scalar_select %p30, %s31, %s32
    %p36 = pneg %p30
    %p37 = scmp.eq.s32.totalorder %s9, 1
    %p38 = por %p36, %p37
    %p39 = scmp.ne.s32.totalorder %s31, %s34
    %p40 = scmp.eq.s32.totalorder %s9, 0
    %p41 = por %p39, %p40
    %p42 = scmp.ne.s32.totalorder %s31, %s34
    %p43 = scmp.eq.s32.totalorder %s14, 1
    %p44 = por %p42, %p43
    %p45 = scmp.ne.s32.totalorder %s34, %s35
    %p46 = scmp.eq.s32.totalorder %s14, 0
    %p47 = por %p45, %p46
    %p48 = scmp.ne.s32.totalorder %s34, %s35
    %p49 = scmp.eq.s32.totalorder %s15, 1
    %p50 = por %p48, %p49
    %p52 = scmp.ne.s32.totalorder %s35, %s51
    %p53 = scmp.eq.s32.totalorder %s15, 0
    %p54 = por %p52, %p53
    %s55 = ssub.s32 %s17, %s24
    %p56 = scmp.eq.s32.totalorder %s55, 0
    %s58 = sadd.s32 %s57, 1
    %s59 = scalar_select %p56, %s57, %s58
    %p62 = pneg %p56
    %p63 = scmp.eq.s32.totalorder %s9, 1
    %p64 = por %p62, %p63
    %p65 = scmp.ne.s32.totalorder %s57, %s60
    %p66 = scmp.eq.s32.totalorder %s9, 0
    %p67 = por %p65, %p66
    %p68 = scmp.ne.s32.totalorder %s57, %s60
    %p69 = scmp.eq.s32.totalorder %s14, 1
    %p70 = por %p68, %p69
    %p71 = scmp.ne.s32.totalorder %s60, %s61
    %p72 = scmp.eq.s32.totalorder %s14, 0
    %p73 = por %p71, %p72
    %p74 = scmp.ne.s32.totalorder %s60, %s61
    %p75 = scmp.eq.s32.totalorder %s15, 1
    %p76 = por %p74, %p75
    %p78 = scmp.ne.s32.totalorder %s61, %s77
    %p79 = scmp.eq.s32.totalorder %s15, 0
    %p80 = por %p78, %p79
    %s81 = ssub.s32 %s17, %s24
    %p82 = scmp.eq.s32.totalorder %s81, 0
    %s84 = sadd.s32 %s83, 1
    %s85 = scalar_select %p82, %s83, %s84
    %p88 = pneg %p82
    %p89 = scmp.eq.s32.totalorder %s9, 1
    %p90 = por %p88, %p89
    %p91 = scmp.ne.s32.totalorder %s83, %s86
    %p92 = scmp.eq.s32.totalorder %s9, 0
    %p93 = por %p91, %p92
    %p94 = scmp.ne.s32.totalorder %s83, %s86
    %p95 = scmp.eq.s32.totalorder %s14, 1
    %p96 = por %p94, %p95
    %p97 = scmp.ne.s32.totalorder %s86, %s87
    %p98 = scmp.eq.s32.totalorder %s14, 0
    %p99 = por %p97, %p98
    %p100 = scmp.ne.s32.totalorder %s86, %s87
    %p101 = scmp.eq.s32.totalorder %s15, 1
    %p102 = por %p100, %p101
    %p104 = scmp.ne.s32.totalorder %s87, %s103
    %p105 = scmp.eq.s32.totalorder %s15, 0
    %p106 = por %p104, %p105
    %s107 = ssub.s32 %s16, %s28
    %s108 = ssub.s32 %s17, %s24
    %s109 = sor.u32 %s107, %s108
    %p110 = scmp.eq.s32.totalorder %s109, 0
    %s112 = sadd.s32 %s111, 1
    %s113 = scalar_select %p110, %s111, %s112
    %p116 = pneg %p110
    %p117 = scmp.eq.s32.totalorder %s9, 1
    %p118 = por %p116, %p117
    %p119 = scmp.ne.s32.totalorder %s111, %s114
    %p120 = scmp.eq.s32.totalorder %s9, 0
    %p121 = por %p119, %p120
    %p122 = scmp.ne.s32.totalorder %s111, %s114
    %p123 = scmp.eq.s32.totalorder %s14, 1
    %p124 = por %p122, %p123
    %p125 = scmp.ne.s32.totalorder %s114, %s115
    %p126 = scmp.eq.s32.totalorder %s14, 0
    %p127 = por %p125, %p126
    %p128 = scmp.ne.s32.totalorder %s114, %s115
    %p129 = scmp.eq.s32.totalorder %s15, 1
    %p130 = por %p128, %p129
    %p132 = scmp.ne.s32.totalorder %s115, %s131
    %p133 = scmp.eq.s32.totalorder %s15, 0
    %p134 = por %p132, %p133
    %p135 = scmp.le.s32.totalorder 1, %s9
    %p136 = scmp.lt.s32.totalorder %s9, 3
    %p137 = pnand %p135, %p136
    %p138 = pneg %p137
    // Predicated region
    $region9: #{net_forward.20} parent=5 // pred_check
      _
    $region10: #{net_forward.20} parent=5 // pred_check_branch
      %140 = sbr.rel (%p137) target = $region12
    $region11: #{net_forward.20} parent=5 // pred_region
      %s141 = ssub.s32 %s9, 1
      // Predicated region
      $region13: #{net_forward.20} parent=11 // pred_check
        %p142 = pneg %p73
      $region14: #{net_forward.20} parent=11 // pred_check_branch
        %144 = sbr.rel (%p142) target = $region16
      $region15: #{net_forward.20} parent=11 // pred_region
        %s145 = smul.u32 2, %s19
        %p146 = scmp.lt.s32.totalorder %s145, 1
        %s147 = scalar_select %p146, %s145, 1
        %s148 = smul.addr %s147, 4
        %s149 = scalar_lea.vmem %s1, %s148
        %s150 = smul.u32 2, %s19
      $region16: #{net_forward.20} parent=11 // pred_fallthru
        _
      // Predicated region
      $region17: #{net_forward.20} parent=11 // pred_check
        %p151 = pneg %p99
      $region18: #{net_forward.20} parent=11 // pred_check_branch
        %153 = sbr.rel (%p151) target = $region20
      $region19: #{net_forward.20} parent=11 // pred_region
        %s154 = smul.u32 2, %s19
        %p155 = scmp.lt.s32.totalorder %s154, 1
        %s156 = scalar_select %p155, %s154, 1
        %s157 = scalar_lea.vmem %s2, %s156
        %s158 = smul.u32 2, %s19
      $region20: #{net_forward.20} parent=11 // pred_fallthru
        _
    $region12: #{net_forward.20} parent=5 // pred_fallthru
      _
    %p159 = scmp.lt.s32.totalorder %s9, 2
    // Predicated region
    $region21: #{net_forward.20} parent=5 // pred_check
      %p160 = pneg %p159
    $region22: #{net_forward.20} parent=5 // pred_check_branch
      %162 = sbr.rel (%p160) target = $region24
    $region23: #{net_forward.20} parent=5 // pred_region
      // Predicated region
      $region25: #{net_forward.20} parent=23 // pred_check
        %p163 = pneg %p41
      $region26: #{net_forward.20} parent=23 // pred_check_branch
        %165 = sbr.rel (%p163) target = $region28
      $region27: #{net_forward.20} parent=23 // pred_region
        %s166 = smul.u32 2, %s16
        %p167 = scmp.lt.s32.totalorder %s166, 3
        %s168 = scalar_select %p167, %s166, 3
        %s169 = smul.addr %s168, 4
        %s170 = scalar_lea.vmem %s0, %s169
        %s171 = smul.u32 2, %s16
      $region28: #{net_forward.20} parent=23 // pred_fallthru
        _
    $region24: #{net_forward.20} parent=5 // pred_fallthru
      _
    %p172 = scmp.le.s32.totalorder 1, %s9
    %p173 = scmp.lt.s32.totalorder %s9, 3
    %p174 = pnand %p172, %p173
    %p175 = pneg %p174
    // Predicated region
    $region29: #{net_forward.20} parent=5 // pred_check
      _
    $region30: #{net_forward.20} parent=5 // pred_check_branch
      %177 = sbr.rel (%p174) target = $region32
    $region31: #{net_forward.20} parent=5 // pred_region
      %s178 = ssub.s32 %s9, 1
      %s179 = smul.u32 2, %s18
      %p180 = scmp.lt.s32.totalorder %s179, 3
      %s181 = scalar_select %p180, %s179, 3
      %s182 = smul.addr %s181, 4
      %s183 = scalar_lea.vmem %s0, %s182
      %p184 = pneg %p47
      %p185 = pneg %p44
      %s186 = smul.u32 2, %s19
      %p187 = scmp.lt.s32.totalorder %s186, 1
      %s188 = scalar_select %p187, %s186, 1
      %s189 = smul.addr %s188, 4
      %s190 = scalar_lea.vmem %s1, %s189
      %p191 = pneg %p73
      %p192 = pneg %p70
      %s193 = smul.u32 2, %s19
      %p194 = scmp.lt.s32.totalorder %s193, 1
      %s195 = scalar_select %p194, %s193, 1
      %s196 = scalar_lea.vmem %s2, %s195
      %p197 = pneg %p99
      %p198 = pneg %p96
      %p199 = pneg %p127
      %p200 = pneg %p124
      %s201 = smul.u32 2, %s18
      %s202 = smul.u32 2, %s19
      %p203 = scmp.lt.s32.totalorder %s201, 3
      %s204 = scalar_select %p203, %s201, 3
      %p205 = scmp.lt.s32.totalorder %s202, 1
      %s206 = scalar_select %p205, %s202, 1
      %s207 = smul.addr %s204, 2
      %s208 = sadd.s32 %s206, %s207
      %s209 = smul.addr %s208, 8
      %s210 = scalar_lea.vmem %s3, %s209
      %s211 = smul.u32 2, %s18
      %p212 = scmp.lt.s32.totalorder %s211, 3
      %s213 = scalar_select %p212, %s211, 3
      %s214 = smul.addr %s213, 4
      %s215 = scalar_lea.vmem %s0, %s214
      %s216 = smul.u32 2, %s18
      %s217 = smul.u32 2, %s19
      %p218 = scmp.lt.s32.totalorder %s217, 1
      %s219 = scalar_select %p218, %s217, 1
      %s220 = smul.addr %s219, 4
      %s221 = scalar_lea.vmem %s1, %s220
      %s222 = smul.u32 2, %s19
      %s223 = smul.u32 2, %s19
      %p224 = scmp.lt.s32.totalorder %s223, 1
      %s225 = scalar_select %p224, %s223, 1
      %s226 = scalar_lea.vmem %s2, %s225
      %s227 = smul.u32 2, %s19
      %s228 = smul.u32 2, %s18
      %s229 = smul.u32 2, %s19
      %p230 = scmp.lt.s32.totalorder %s228, 3
      %s231 = scalar_select %p230, %s228, 3
      %p232 = scmp.lt.s32.totalorder %s229, 1
      %s233 = scalar_select %p232, %s229, 1
      %s234 = smul.addr %s231, 2
      %s235 = sadd.s32 %s233, %s234
      %s236 = smul.addr %s235, 8
      %s237 = scalar_lea.vmem %s3, %s236
      %s238 = smul.u32 2, %s18
      %s239 = smul.u32 2, %s19
      %v241 = vld [vmem:[%s215] sm:$0xf]
      %v242 = vld [vmem:[%s215 + $0x4] sm:$0xf]
      %v243 = vld [vmem:[%s221] sm:$0xff]
      %v244 = vld [vmem:[%s221 + $0x8] sm:$0xff]
      %v245 = vld [vmem:[%s221 + $0x10] sm:$0xff]
      %v246 = vld [vmem:[%s221 + $0x18] sm:$0xff]
      %v247 = vld [vmem:[%s221 + $0x20] sm:$0xff]
      %v248 = vld [vmem:[%s221 + $0x28] sm:$0xff]
      %v249 = vld [vmem:[%s221 + $0x30] sm:$0xff]
      %v250 = vld [vmem:[%s221 + $0x38] sm:$0xff]
      %v251 = vld [vmem:[%s221 + $0x40] sm:$0xff]
      %v252 = vld [vmem:[%s221 + $0x48] sm:$0xff]
      %v253 = vld [vmem:[%s221 + $0x50] sm:$0xff]
      %v254 = vld [vmem:[%s221 + $0x58] sm:$0xff]
      %v255 = vld [vmem:[%s221 + $0x60] sm:$0xff]
      %v256 = vld [vmem:[%s221 + $0x68] sm:$0xff]
      %v257 = vld [vmem:[%s221 + $0x70] sm:$0xff]
      %v258 = vld [vmem:[%s221 + $0x78] sm:$0xff]
      %v259 = vld [vmem:[%s226] sm:$0x3]
      %v261 = vlaneseq
      %v262 = vshrl.u32 %v261, 7
      %v263 = vsub.s32 0, %v262
      %v264 = vrot.slane %v259, %v263
      %v265 = vlaneseq
      %v266 = vshrl.u32 %v265, 7
      %v267 = vsub.s32 1, %v266
      %v268 = vrot.slane %v259, %v267
      %v273 = vunpack.c.l.b16 %v241
      %v274 = vunpack.c.l.b16 %v242
      %v275 = vpack.c.b16 %v274, %v273
      %v293 = vunpack.c.l.b16 %v243
      %v294 = vunpack.c.h.b16 %v243
      %v295 = vunpack.c.l.b16 %v244
      %v296 = vunpack.c.h.b16 %v244
      %v297 = vunpack.c.l.b16 %v245
      %v298 = vunpack.c.h.b16 %v245
      %v299 = vunpack.c.l.b16 %v246
      %v300 = vunpack.c.h.b16 %v246
      %v301 = vunpack.c.l.b16 %v247
      %v302 = vunpack.c.h.b16 %v247
      %v303 = vunpack.c.l.b16 %v248
      %v304 = vunpack.c.h.b16 %v248
      %v305 = vunpack.c.l.b16 %v249
      %v306 = vunpack.c.h.b16 %v249
      %v307 = vunpack.c.l.b16 %v250
      %v308 = vunpack.c.h.b16 %v250
      %v309 = vunpack.c.l.b16 %v251
      %v310 = vunpack.c.h.b16 %v251
      %v311 = vunpack.c.l.b16 %v252
      %v312 = vunpack.c.h.b16 %v252
      %v313 = vunpack.c.l.b16 %v253
      %v314 = vunpack.c.h.b16 %v253
      %v315 = vunpack.c.l.b16 %v254
      %v316 = vunpack.c.h.b16 %v254
      %v317 = vunpack.c.l.b16 %v255
      %v318 = vunpack.c.h.b16 %v255
      %v319 = vunpack.c.l.b16 %v256
      %v320 = vunpack.c.h.b16 %v256
      %v321 = vunpack.c.l.b16 %v257
      %v322 = vunpack.c.h.b16 %v257
      %v323 = vunpack.c.l.b16 %v258
      %v324 = vunpack.c.h.b16 %v258
      %v325 = vpack.c.b16 %v295, %v293
      %v326 = vpack.c.b16 %v296, %v294
      %v327 = vpack.c.b16 %v299, %v297
      %v328 = vpack.c.b16 %v300, %v298
      %v329 = vpack.c.b16 %v303, %v301
      %v330 = vpack.c.b16 %v304, %v302
      %v331 = vpack.c.b16 %v307, %v305
      %v332 = vpack.c.b16 %v308, %v306
      %v333 = vpack.c.b16 %v311, %v309
      %v334 = vpack.c.b16 %v312, %v310
      %v335 = vpack.c.b16 %v315, %v313
      %v336 = vpack.c.b16 %v316, %v314
      %v337 = vpack.c.b16 %v319, %v317
      %v338 = vpack.c.b16 %v320, %v318
      %v339 = vpack.c.b16 %v323, %v321
      %v340 = vpack.c.b16 %v324, %v322
      %357 = vmatprep.subr.bf16.mxu0 %v340
      %358 = vmatpush1.bf16.msra.mxu0 %v339
      %359 = vmatprep.subr.bf16.mxu0 %v338
      %360 = vmatpush1.bf16.msra.mxu0 %v337
      %361 = vmatprep.subr.bf16.mxu0 %v336
      %362 = vmatpush1.bf16.msra.mxu0 %v335
      %363 = vmatprep.subr.bf16.mxu0 %v334
      %364 = vmatpush1.bf16.msra.mxu0 %v333
      %365 = vmatprep.subr.bf16.mxu0 %v332
      %366 = vmatpush1.bf16.msra.mxu0 %v331
      %367 = vmatprep.subr.bf16.mxu0 %v330
      %368 = vmatpush1.bf16.msra.mxu0 %v329
      %369 = vmatprep.subr.bf16.mxu0 %v328
      %370 = vmatpush1.bf16.msra.mxu0 %v327
      %371 = vmatprep.subr.bf16.mxu0 %v326
      %372 = vmatpush1.bf16.msra.mxu0 %v325
      %373 = vmatprep.subr.bf16.mxu0 0
      %374 = vmatpush2.bf16.msra.mxu0 0
      %375 = vmatprep.subr.bf16.mxu0 0
      %376 = vmatpush2.bf16.msra.mxu0 0
      %377 = vmatprep.subr.bf16.mxu0 0
      %378 = vmatpush2.bf16.msra.mxu0 0
      %379 = vmatprep.subr.bf16.mxu0 0
      %380 = vmatpush2.bf16.msra.mxu0 0
      %381 = vmatprep.subr.bf16.mxu0 0
      %382 = vmatpush2.bf16.msra.mxu0 0
      %383 = vmatprep.subr.bf16.mxu0 0
      %384 = vmatpush2.bf16.msra.mxu0 0
      %385 = vmatprep.subr.bf16.mxu0 0
      %386 = vmatpush2.bf16.msra.mxu0 0
      %387 = vmatprep.subr.bf16.mxu0 0
      %388 = vmatpush2.bf16.msra.mxu0 0
      %389 = vmatprep.mubr.bf16.mxu0 0
      %390 = vmatmul.mubr.bf16.gmra.mxu0 %v275
      %v391 = vpop.f32.mrf.mxu0
      %v392 = vadd.f32 %v264, %v391
      %v393 = vpop.f32.mrf.mxu0
      %v394 = vadd.f32 %v268, %v393
      %v395 = vpop.f32.mrf.mxu0
      %v396 = vadd.f32 %v264, %v395
      %v397 = vpop.f32.mrf.mxu0
      %v398 = vadd.f32 %v268, %v397
      %399 = vdwg.mxu0
      %400 = vst [vmem:[%s237] sm:$0xff] %v392
      %401 = vst [vmem:[%s237 + $0x8] sm:$0xff] %v394
      %402 = vst [vmem:[%s237 + $0x10] sm:$0xff] %v396
      %403 = vst [vmem:[%s237 + $0x18] sm:$0xff] %v398
      %s404 = smul.u32 2, %s18
      %s405 = smul.u32 2, %s19
      %p406 = scmp.lt.s32.totalorder %s404, 3
      %s407 = scalar_select %p406, %s404, 3
      %p408 = scmp.lt.s32.totalorder %s405, 1
      %s409 = scalar_select %p408, %s405, 1
      %s410 = smul.addr %s407, 2
      %s411 = sadd.s32 %s409, %s410
      %s412 = smul.addr %s411, 8
      %s413 = scalar_lea.vmem %s3, %s412
      // Predicated region
      $region33: #{net_forward.20} parent=31 // pred_check
        %p414 = pneg %p124
      $region34: #{net_forward.20} parent=31 // pred_check_branch
        %416 = sbr.rel (%p414) target = $region36
      $region35: #{net_forward.20} parent=31 // pred_region
        %s417 = smul.u32 2, %s18
        %s418 = smul.u32 2, %s19
      $region36: #{net_forward.20} parent=31 // pred_fallthru
        _
    $region32: #{net_forward.20} parent=5 // pred_fallthru
      _
    %p419 = scmp.le.s32.totalorder 2, %s9
    // Predicated region
    $region37: #{net_forward.20} parent=5 // pred_check
      %p420 = pneg %p419
    $region38: #{net_forward.20} parent=5 // pred_check_branch
      %422 = sbr.rel (%p420) target = $region40
    $region39: #{net_forward.20} parent=5 // pred_region
      %s423 = ssub.s32 %s9, 2
      // Predicated region
      $region41: #{net_forward.20} parent=39 // pred_check
        %p424 = pneg %p130
      $region42: #{net_forward.20} parent=39 // pred_check_branch
        %426 = sbr.rel (%p424) target = $region44
      $region43: #{net_forward.20} parent=39 // pred_region
        %s427 = smul.u32 2, %s20
        %s428 = smul.u32 2, %s21
        %p429 = scmp.lt.s32.totalorder %s427, 3
        %s430 = scalar_select %p429, %s427, 3
        %p431 = scmp.lt.s32.totalorder %s428, 1
        %s432 = scalar_select %p431, %s428, 1
        %s433 = smul.addr %s430, 2
        %s434 = sadd.s32 %s432, %s433
        %s435 = smul.addr %s434, 8
        %s436 = scalar_lea.vmem %s3, %s435
      $region44: #{net_forward.20} parent=39 // pred_fallthru
        _
    $region40: #{net_forward.20} parent=5 // pred_fallthru
      _
  $region6: #{net_forward.20} parent=0 // loop_footer
    %s13 = sadd.s32 1, %s9
  $region7: #{net_forward.20} parent=0 // loop_footer_branch
    %8 = sbr.rel target = $region3
  $region8: #{net_forward.20} parent=0 // loop_exit
    _

// kernel: net_forward.22
$region0: #{net_forward.22}
  #allocation0 [shape = 'u32[]', space=smem, size = 0x4, offset = 0x4, fixed_abs, tag = 'smem constant byte address 0x4 - core index']
  #allocation1 [shape = 'u32[144,128]{1,0:T(1,128)}', space=vmem, size = 0x12000, scoped, tag = 'internal scratch']
  %s0 = inlined_call_operand.vmem [shape: bf16[32,256], index: 0, kind: input, shape index: {}]
  %s1 = inlined_call_operand.vmem [shape: bf16[256,128], index: 1, kind: input, shape index: {}]
  %s2 = inlined_call_operand.vmem [shape: f32[1,128], index: 2, kind: input, shape index: {}]
  %s3 = inlined_call_operand.vmem [shape: f32[32,128], index: 3, kind: output, shape index: {}]
  %s4 = sld [smem:[#allocation0]]
  $region45: #{net_forward.22} parent=0
    _
  %s6 = ssub.s32 1, %s4
  %s7 = scalar_select 0, %s6, %s4
  loop: start=0, step=1, limit=4
  $region2: #{net_forward.22} parent=0 // loop_pre_header
    _
  $region3: #{net_forward.22} parent=0 // loop_header
    %s9 = sphi 0, %s13
    %p10 = scmp.ge.s32.totalorder %s9, 4
    %s16 = sphi 0, %s28
    %s17 = sphi 0, %s24
    %s18 = sphi 0, %s16
    %s19 = sphi 0, %s17
    %s20 = sphi 0, %s18
    %s21 = sphi 0, %s19
    %s31 = sphi 0, %s33
    %s34 = sphi 0, %s31
    %s35 = sphi 0, %s34
    %s51 = sphi 0, %s35
    %s57 = sphi 0, %s59
    %s60 = sphi 0, %s57
    %s61 = sphi 0, %s60
    %s77 = sphi 0, %s61
    %s83 = sphi 0, %s85
    %s86 = sphi 0, %s83
    %s87 = sphi 0, %s86
    %s103 = sphi 0, %s87
    %s111 = sphi 0, %s113
    %s114 = sphi 0, %s111
    %s115 = sphi 0, %s114
    %s131 = sphi 0, %s115
  $region4: #{net_forward.22} parent=0 // loop_header_branch
    %12 = sbr.rel (%p10) target = $region8
  $region5: #{net_forward.22} parent=0 // loop_body
    %s14 = ssub.s32 %s9, 1
    %s15 = ssub.s32 %s9, 2
    %s22 = sadd.s32 1, %s17
    %p23 = scmp.ge.s32.totalorder %s22, 1
    %s24 = scalar_select %p23, 0, %s22
    %s25 = sadd.s32 1, %s16
    %s26 = scalar_select %p23, %s25, %s16
    %p27 = scmp.ge.s32.totalorder %s26, 2
    %s28 = scalar_select %p27, 0, %s26
    %s29 = ssub.s32 %s16, %s28
    %p30 = scmp.eq.s32.totalorder %s29, 0
    %s32 = sadd.s32 %s31, 1
    %s33 = scalar_select %p30, %s31, %s32
    %p36 = pneg %p30
    %p37 = scmp.eq.s32.totalorder %s9, 1
    %p38 = por %p36, %p37
    %p39 = scmp.ne.s32.totalorder %s31, %s34
    %p40 = scmp.eq.s32.totalorder %s9, 0
    %p41 = por %p39, %p40
    %p42 = scmp.ne.s32.totalorder %s31, %s34
    %p43 = scmp.eq.s32.totalorder %s14, 1
    %p44 = por %p42, %p43
    %p45 = scmp.ne.s32.totalorder %s34, %s35
    %p46 = scmp.eq.s32.totalorder %s14, 0
    %p47 = por %p45, %p46
    %p48 = scmp.ne.s32.totalorder %s34, %s35
    %p49 = scmp.eq.s32.totalorder %s15, 1
    %p50 = por %p48, %p49
    %p52 = scmp.ne.s32.totalorder %s35, %s51
    %p53 = scmp.eq.s32.totalorder %s15, 0
    %p54 = por %p52, %p53
    %s55 = ssub.s32 %s17, %s24
    %p56 = scmp.eq.s32.totalorder %s55, 0
    %s58 = sadd.s32 %s57, 1
    %s59 = scalar_select %p56, %s57, %s58
    %p62 = pneg %p56
    %p63 = scmp.eq.s32.totalorder %s9, 1
    %p64 = por %p62, %p63
    %p65 = scmp.ne.s32.totalorder %s57, %s60
    %p66 = scmp.eq.s32.totalorder %s9, 0
    %p67 = por %p65, %p66
    %p68 = scmp.ne.s32.totalorder %s57, %s60
    %p69 = scmp.eq.s32.totalorder %s14, 1
    %p70 = por %p68, %p69
    %p71 = scmp.ne.s32.totalorder %s60, %s61
    %p72 = scmp.eq.s32.totalorder %s14, 0
    %p73 = por %p71, %p72
    %p74 = scmp.ne.s32.totalorder %s60, %s61
    %p75 = scmp.eq.s32.totalorder %s15, 1
    %p76 = por %p74, %p75
    %p78 = scmp.ne.s32.totalorder %s61, %s77
    %p79 = scmp.eq.s32.totalorder %s15, 0
    %p80 = por %p78, %p79
    %s81 = ssub.s32 %s17, %s24
    %p82 = scmp.eq.s32.totalorder %s81, 0
    %s84 = sadd.s32 %s83, 1
    %s85 = scalar_select %p82, %s83, %s84
    %p88 = pneg %p82
    %p89 = scmp.eq.s32.totalorder %s9, 1
    %p90 = por %p88, %p89
    %p91 = scmp.ne.s32.totalorder %s83, %s86
    %p92 = scmp.eq.s32.totalorder %s9, 0
    %p93 = por %p91, %p92
    %p94 = scmp.ne.s32.totalorder %s83, %s86
    %p95 = scmp.eq.s32.totalorder %s14, 1
    %p96 = por %p94, %p95
    %p97 = scmp.ne.s32.totalorder %s86, %s87
    %p98 = scmp.eq.s32.totalorder %s14, 0
    %p99 = por %p97, %p98
    %p100 = scmp.ne.s32.totalorder %s86, %s87
    %p101 = scmp.eq.s32.totalorder %s15, 1
    %p102 = por %p100, %p101
    %p104 = scmp.ne.s32.totalorder %s87, %s103
    %p105 = scmp.eq.s32.totalorder %s15, 0
    %p106 = por %p104, %p105
    %s107 = ssub.s32 %s16, %s28
    %s108 = ssub.s32 %s17, %s24
    %s109 = sor.u32 %s107, %s108
    %p110 = scmp.eq.s32.totalorder %s109, 0
    %s112 = sadd.s32 %s111, 1
    %s113 = scalar_select %p110, %s111, %s112
    %p116 = pneg %p110
    %p117 = scmp.eq.s32.totalorder %s9, 1
    %p118 = por %p116, %p117
    %p119 = scmp.ne.s32.totalorder %s111, %s114
    %p120 = scmp.eq.s32.totalorder %s9, 0
    %p121 = por %p119, %p120
    %p122 = scmp.ne.s32.totalorder %s111, %s114
    %p123 = scmp.eq.s32.totalorder %s14, 1
    %p124 = por %p122, %p123
    %p125 = scmp.ne.s32.totalorder %s114, %s115
    %p126 = scmp.eq.s32.totalorder %s14, 0
    %p127 = por %p125, %p126
    %p128 = scmp.ne.s32.totalorder %s114, %s115
    %p129 = scmp.eq.s32.totalorder %s15, 1
    %p130 = por %p128, %p129
    %p132 = scmp.ne.s32.totalorder %s115, %s131
    %p133 = scmp.eq.s32.totalorder %s15, 0
    %p134 = por %p132, %p133
    %p135 = scmp.le.s32.totalorder 1, %s9
    %p136 = scmp.lt.s32.totalorder %s9, 3
    %p137 = pnand %p135, %p136
    %p138 = pneg %p137
    // Predicated region
    $region9: #{net_forward.22} parent=5 // pred_check
      _
    $region10: #{net_forward.22} parent=5 // pred_check_branch
      %140 = sbr.rel (%p137) target = $region12
    $region11: #{net_forward.22} parent=5 // pred_region
      %s141 = ssub.s32 %s9, 1
      // Predicated region
      $region13: #{net_forward.22} parent=11 // pred_check
        %p142 = pneg %p73
      $region14: #{net_forward.22} parent=11 // pred_check_branch
        %144 = sbr.rel (%p142) target = $region16
      $region15: #{net_forward.22} parent=11 // pred_region
        %p145 = scmp.lt.s32.totalorder %s19, 0
        %s146 = scalar_select %p145, %s19, 0
        %s147 = smul.addr %s146, 4
        %s148 = scalar_lea.vmem %s1, %s147
      $region16: #{net_forward.22} parent=11 // pred_fallthru
        _
      // Predicated region
      $region17: #{net_forward.22} parent=11 // pred_check
        %p149 = pneg %p99
      $region18: #{net_forward.22} parent=11 // pred_check_branch
        %151 = sbr.rel (%p149) target = $region20
      $region19: #{net_forward.22} parent=11 // pred_region
        %p152 = scmp.lt.s32.totalorder %s19, 0
        %s153 = scalar_select %p152, %s19, 0
        %s154 = scalar_lea.vmem %s2, %s153
      $region20: #{net_forward.22} parent=11 // pred_fallthru
        _
    $region12: #{net_forward.22} parent=5 // pred_fallthru
      _
    %p155 = scmp.lt.s32.totalorder %s9, 2
    // Predicated region
    $region21: #{net_forward.22} parent=5 // pred_check
      %p156 = pneg %p155
    $region22: #{net_forward.22} parent=5 // pred_check_branch
      %158 = sbr.rel (%p156) target = $region24
    $region23: #{net_forward.22} parent=5 // pred_region
      // Predicated region
      $region25: #{net_forward.22} parent=23 // pred_check
        %p159 = pneg %p41
      $region26: #{net_forward.22} parent=23 // pred_check_branch
        %161 = sbr.rel (%p159) target = $region28
      $region27: #{net_forward.22} parent=23 // pred_region
        %s162 = smul.u32 2, %s16
        %p163 = scmp.lt.s32.totalorder %s162, 3
        %s164 = scalar_select %p163, %s162, 3
        %s165 = smul.addr %s164, 2
        %s166 = smul.addr %s165, 4
        %s167 = scalar_lea.vmem %s0, %s166
        %s168 = smul.u32 2, %s16
      $region28: #{net_forward.22} parent=23 // pred_fallthru
        _
    $region24: #{net_forward.22} parent=5 // pred_fallthru
      _
    %p169 = scmp.le.s32.totalorder 1, %s9
    %p170 = scmp.lt.s32.totalorder %s9, 3
    %p171 = pnand %p169, %p170
    %p172 = pneg %p171
    // Predicated region
    $region29: #{net_forward.22} parent=5 // pred_check
      _
    $region30: #{net_forward.22} parent=5 // pred_check_branch
      %174 = sbr.rel (%p171) target = $region32
    $region31: #{net_forward.22} parent=5 // pred_region
      %s175 = ssub.s32 %s9, 1
      %s176 = smul.u32 2, %s18
      %p177 = scmp.lt.s32.totalorder %s176, 3
      %s178 = scalar_select %p177, %s176, 3
      %s179 = smul.addr %s178, 2
      %s180 = smul.addr %s179, 4
      %s181 = scalar_lea.vmem %s0, %s180
      %p182 = pneg %p47
      %p183 = pneg %p44
      %p184 = scmp.lt.s32.totalorder %s19, 0
      %s185 = scalar_select %p184, %s19, 0
      %s186 = smul.addr %s185, 4
      %s187 = scalar_lea.vmem %s1, %s186
      %p188 = pneg %p73
      %p189 = pneg %p70
      %p190 = scmp.lt.s32.totalorder %s19, 0
      %s191 = scalar_select %p190, %s19, 0
      %s192 = scalar_lea.vmem %s2, %s191
      %p193 = pneg %p99
      %p194 = pneg %p96
      %p195 = pneg %p127
      %p196 = pneg %p124
      %s197 = smul.u32 2, %s18
      %p198 = scmp.lt.s32.totalorder %s197, 3
      %s199 = scalar_select %p198, %s197, 3
      %p200 = scmp.lt.s32.totalorder %s19, 0
      %s201 = scalar_select %p200, %s19, 0
      %s202 = sadd.s32 %s201, %s199
      %s203 = smul.addr %s202, 8
      %s204 = scalar_lea.vmem %s3, %s203
      %s205 = smul.u32 2, %s18
      %p206 = scmp.lt.s32.totalorder %s205, 3
      %s207 = scalar_select %p206, %s205, 3
      %s208 = smul.addr %s207, 2
      %s209 = smul.addr %s208, 4
      %s210 = scalar_lea.vmem %s0, %s209
      %s211 = smul.u32 2, %s18
      %p212 = scmp.lt.s32.totalorder %s19, 0
      %s213 = scalar_select %p212, %s19, 0
      %s214 = smul.addr %s213, 4
      %s215 = scalar_lea.vmem %s1, %s214
      %p216 = scmp.lt.s32.totalorder %s19, 0
      %s217 = scalar_select %p216, %s19, 0
      %s218 = scalar_lea.vmem %s2, %s217
      %s219 = smul.u32 2, %s18
      %p220 = scmp.lt.s32.totalorder %s219, 3
      %s221 = scalar_select %p220, %s219, 3
      %p222 = scmp.lt.s32.totalorder %s19, 0
      %s223 = scalar_select %p222, %s19, 0
      %s224 = sadd.s32 %s223, %s221
      %s225 = smul.addr %s224, 8
      %s226 = scalar_lea.vmem %s3, %s225
      %s227 = smul.u32 2, %s18
      %v229 = vld [vmem:[%s210] sm:$0xff]
      %v230 = vld [vmem:[%s210 + $0x8] sm:$0xff]
      %v231 = vld [vmem:[%s215] sm:$0xf]
      %v232 = vld [vmem:[%s215 + $0x4] sm:$0xf]
      %v233 = vld [vmem:[%s215 + $0x8] sm:$0xf]
      %v234 = vld [vmem:[%s215 + $0xc] sm:$0xf]
      %v235 = vld [vmem:[%s215 + $0x10] sm:$0xf]
      %v236 = vld [vmem:[%s215 + $0x14] sm:$0xf]
      %v237 = vld [vmem:[%s215 + $0x18] sm:$0xf]
      %v238 = vld [vmem:[%s215 + $0x1c] sm:$0xf]
      %v239 = vld [vmem:[%s215 + $0x20] sm:$0xf]
      %v240 = vld [vmem:[%s215 + $0x24] sm:$0xf]
      %v241 = vld [vmem:[%s215 + $0x28] sm:$0xf]
      %v242 = vld [vmem:[%s215 + $0x2c] sm:$0xf]
      %v243 = vld [vmem:[%s215 + $0x30] sm:$0xf]
      %v244 = vld [vmem:[%s215 + $0x34] sm:$0xf]
      %v245 = vld [vmem:[%s215 + $0x38] sm:$0xf]
      %v246 = vld [vmem:[%s215 + $0x3c] sm:$0xf]
      %v247 = vld [vmem:[%s215 + $0x40] sm:$0xf]
      %v248 = vld [vmem:[%s215 + $0x44] sm:$0xf]
      %v249 = vld [vmem:[%s215 + $0x48] sm:$0xf]
      %v250 = vld [vmem:[%s215 + $0x4c] sm:$0xf]
      %v251 = vld [vmem:[%s215 + $0x50] sm:$0xf]
      %v252 = vld [vmem:[%s215 + $0x54] sm:$0xf]
      %v253 = vld [vmem:[%s215 + $0x58] sm:$0xf]
      %v254 = vld [vmem:[%s215 + $0x5c] sm:$0xf]
      %v255 = vld [vmem:[%s215 + $0x60] sm:$0xf]
      %v256 = vld [vmem:[%s215 + $0x64] sm:$0xf]
      %v257 = vld [vmem:[%s215 + $0x68] sm:$0xf]
      %v258 = vld [vmem:[%s215 + $0x6c] sm:$0xf]
      %v259 = vld [vmem:[%s215 + $0x70] sm:$0xf]
      %v260 = vld [vmem:[%s215 + $0x74] sm:$0xf]
      %v261 = vld [vmem:[%s215 + $0x78] sm:$0xf]
      %v262 = vld [vmem:[%s215 + $0x7c] sm:$0xf]
      %v263 = vld [vmem:[%s218] sm:$0x1]
      %v265 = vlaneseq
      %v266 = vshrl.u32 %v265, 7
      %v267 = vsub.s32 0, %v266
      %v268 = vrot.slane %v263, %v267
      %v272 = vunpack.c.l.b16 %v229
      %v273 = vunpack.c.h.b16 %v229
      %v274 = vunpack.c.l.b16 %v230
      %v275 = vunpack.c.h.b16 %v230
      %v276 = vpack.c.b16 %v274, %v272
      %v277 = vpack.c.b16 %v275, %v273
      %v312 = vunpack.c.l.b16 %v231
      %v313 = vunpack.c.l.b16 %v232
      %v314 = vunpack.c.l.b16 %v233
      %v315 = vunpack.c.l.b16 %v234
      %v316 = vunpack.c.l.b16 %v235
      %v317 = vunpack.c.l.b16 %v236
      %v318 = vunpack.c.l.b16 %v237
      %v319 = vunpack.c.l.b16 %v238
      %v320 = vunpack.c.l.b16 %v239
      %v321 = vunpack.c.l.b16 %v240
      %v322 = vunpack.c.l.b16 %v241
      %v323 = vunpack.c.l.b16 %v242
      %v324 = vunpack.c.l.b16 %v243
      %v325 = vunpack.c.l.b16 %v244
      %v326 = vunpack.c.l.b16 %v245
      %v327 = vunpack.c.l.b16 %v246
      %v328 = vunpack.c.l.b16 %v247
      %v329 = vunpack.c.l.b16 %v248
      %v330 = vunpack.c.l.b16 %v249
      %v331 = vunpack.c.l.b16 %v250
      %v332 = vunpack.c.l.b16 %v251
      %v333 = vunpack.c.l.b16 %v252
      %v334 = vunpack.c.l.b16 %v253
      %v335 = vunpack.c.l.b16 %v254
      %v336 = vunpack.c.l.b16 %v255
      %v337 = vunpack.c.l.b16 %v256
      %v338 = vunpack.c.l.b16 %v257
      %v339 = vunpack.c.l.b16 %v258
      %v340 = vunpack.c.l.b16 %v259
      %v341 = vunpack.c.l.b16 %v260
      %v342 = vunpack.c.l.b16 %v261
      %v343 = vunpack.c.l.b16 %v262
      %v344 = vpack.c.b16 %v313, %v312
      %v345 = vpack.c.b16 %v315, %v314
      %v346 = vpack.c.b16 %v317, %v316
      %v347 = vpack.c.b16 %v319, %v318
      %v348 = vpack.c.b16 %v321, %v320
      %v349 = vpack.c.b16 %v323, %v322
      %v350 = vpack.c.b16 %v325, %v324
      %v351 = vpack.c.b16 %v327, %v326
      %v352 = vpack.c.b16 %v329, %v328
      %v353 = vpack.c.b16 %v331, %v330
      %v354 = vpack.c.b16 %v333, %v332
      %v355 = vpack.c.b16 %v335, %v334
      %v356 = vpack.c.b16 %v337, %v336
      %v357 = vpack.c.b16 %v339, %v338
      %v358 = vpack.c.b16 %v341, %v340
      %v359 = vpack.c.b16 %v343, %v342
      %376 = vmatprep.subr.bf16.mxu0 0
      %377 = vmatpush1.bf16.msra.mxu0 %v351
      %378 = vmatprep.subr.bf16.mxu0 0
      %379 = vmatpush1.bf16.msra.mxu0 %v350
      %380 = vmatprep.subr.bf16.mxu0 0
      %381 = vmatpush1.bf16.msra.mxu0 %v349
      %382 = vmatprep.subr.bf16.mxu0 0
      %383 = vmatpush1.bf16.msra.mxu0 %v348
      %384 = vmatprep.subr.bf16.mxu0 0
      %385 = vmatpush1.bf16.msra.mxu0 %v347
      %386 = vmatprep.subr.bf16.mxu0 0
      %387 = vmatpush1.bf16.msra.mxu0 %v346
      %388 = vmatprep.subr.bf16.mxu0 0
      %389 = vmatpush1.bf16.msra.mxu0 %v345
      %390 = vmatprep.subr.bf16.mxu0 0
      %391 = vmatpush1.bf16.msra.mxu0 %v344
      %392 = vmatprep.subr.bf16.mxu0 0
      %393 = vmatpush2.bf16.msra.mxu0 %v359
      %394 = vmatprep.subr.bf16.mxu0 0
      %395 = vmatpush2.bf16.msra.mxu0 %v358
      %396 = vmatprep.subr.bf16.mxu0 0
      %397 = vmatpush2.bf16.msra.mxu0 %v357
      %398 = vmatprep.subr.bf16.mxu0 0
      %399 = vmatpush2.bf16.msra.mxu0 %v356
      %400 = vmatprep.subr.bf16.mxu0 0
      %401 = vmatpush2.bf16.msra.mxu0 %v355
      %402 = vmatprep.subr.bf16.mxu0 0
      %403 = vmatpush2.bf16.msra.mxu0 %v354
      %404 = vmatprep.subr.bf16.mxu0 0
      %405 = vmatpush2.bf16.msra.mxu0 %v353
      %406 = vmatprep.subr.bf16.mxu0 0
      %407 = vmatpush2.bf16.msra.mxu0 %v352
      %408 = vmatprep.mubr.bf16.mxu0 %v277
      %409 = vmatmul.mubr.bf16.gmra.mxu0 %v276
      %v410 = vpop.f32.mrf.mxu0
      %v411 = vadd.f32 %v268, %v410
      %v412 = vpop.f32.mrf.mxu0
      %v413 = vpop.f32.mrf.mxu0
      %v414 = vadd.f32 %v268, %v413
      %v415 = vpop.f32.mrf.mxu0
      %416 = vdwg.mxu0
      %v417 = vmax.f32 %v411, 0.0
      %v418 = vmax.f32 %v414, 0.0
      %419 = vst [vmem:[%s226] sm:$0xff] %v417
      %420 = vst [vmem:[%s226 + $0x8] sm:$0xff] %v418
      %s421 = smul.u32 2, %s18
      %p422 = scmp.lt.s32.totalorder %s421, 3
      %s423 = scalar_select %p422, %s421, 3
      %p424 = scmp.lt.s32.totalorder %s19, 0
      %s425 = scalar_select %p424, %s19, 0
      %s426 = sadd.s32 %s425, %s423
      %s427 = smul.addr %s426, 8
      %s428 = scalar_lea.vmem %s3, %s427
      // Predicated region
      $region33: #{net_forward.22} parent=31 // pred_check
        %p429 = pneg %p124
      $region34: #{net_forward.22} parent=31 // pred_check_branch
        %431 = sbr.rel (%p429) target = $region36
      $region35: #{net_forward.22} parent=31 // pred_region
        %s432 = smul.u32 2, %s18
      $region36: #{net_forward.22} parent=31 // pred_fallthru
        _
    $region32: #{net_forward.22} parent=5 // pred_fallthru
      _
    %p433 = scmp.le.s32.totalorder 2, %s9
    // Predicated region
    $region37: #{net_forward.22} parent=5 // pred_check
      %p434 = pneg %p433
    $region38: #{net_forward.22} parent=5 // pred_check_branch
      %436 = sbr.rel (%p434) target = $region40
    $region39: #{net_forward.22} parent=5 // pred_region
      %s437 = ssub.s32 %s9, 2
      // Predicated region
      $region41: #{net_forward.22} parent=39 // pred_check
        %p438 = pneg %p130
      $region42: #{net_forward.22} parent=39 // pred_check_branch
        %440 = sbr.rel (%p438) target = $region44
      $region43: #{net_forward.22} parent=39 // pred_region
        %s441 = smul.u32 2, %s20
        %p442 = scmp.lt.s32.totalorder %s441, 3
        %s443 = scalar_select %p442, %s441, 3
        %p444 = scmp.lt.s32.totalorder %s21, 0
        %s445 = scalar_select %p444, %s21, 0
        %s446 = sadd.s32 %s445, %s443
        %s447 = smul.addr %s446, 8
        %s448 = scalar_lea.vmem %s3, %s447
      $region44: #{net_forward.22} parent=39 // pred_fallthru
        _
    $region40: #{net_forward.22} parent=5 // pred_fallthru
      _
  $region6: #{net_forward.22} parent=0 // loop_footer
    %s13 = sadd.s32 1, %s9
  $region7: #{net_forward.22} parent=0 // loop_footer_branch
    %8 = sbr.rel target = $region3
  $region8: #{net_forward.22} parent=0 // loop_exit
    _

// kernel: net_forward.29
$region0: #{net_forward.29}
  #allocation0 [shape = 'u32[]', space=smem, size = 0x4, offset = 0x4, fixed_abs, tag = 'smem constant byte address 0x4 - core index']
  #allocation1 [shape = 'u32[144,128]{1,0:T(1,128)}', space=vmem, size = 0x12000, scoped, tag = 'internal scratch']
  %s0 = inlined_call_operand.vmem [shape: f32[32,128], index: 0, kind: input, shape index: {}]
  %s1 = inlined_call_operand.vmem [shape: f32[32,128], index: 1, kind: input, shape index: {}]
  %s2 = inlined_call_operand.vmem [shape: f32[32,128], index: 2, kind: input, shape index: {}]
  %s3 = inlined_call_operand.vmem [shape: f32[32,128], index: 3, kind: input, shape index: {}]
  %s4 = inlined_call_operand.vmem [shape: f32[32,1], index: 4, kind: input, shape index: {}]
  %s5 = inlined_call_operand.vmem [shape: f32[1,128], index: 5, kind: input, shape index: {}]
  %s6 = inlined_call_operand.vmem [shape: f32[32,128], index: 6, kind: output, shape index: {}]
  %s7 = sld [smem:[#allocation0]]
  $region57: #{net_forward.29} parent=0
    _
  %s9 = ssub.s32 1, %s7
  %s10 = scalar_select 0, %s9, %s7
  loop: start=0, step=1, limit=4
  $region2: #{net_forward.29} parent=0 // loop_pre_header
    _
  $region3: #{net_forward.29} parent=0 // loop_header
    %s12 = sphi 0, %s16
    %p13 = scmp.ge.s32.totalorder %s12, 4
    %s22 = sphi 0, %s24
    %s25 = sphi 0, %s22
    %s26 = sphi 0, %s25
    %s42 = sphi 0, %s26
    %s48 = sphi 0, %s50
    %s51 = sphi 0, %s48
    %s52 = sphi 0, %s51
    %s68 = sphi 0, %s52
    %s74 = sphi 0, %s76
    %s77 = sphi 0, %s74
    %s78 = sphi 0, %s77
    %s94 = sphi 0, %s78
    %s100 = sphi 0, %s102
    %s103 = sphi 0, %s100
    %s104 = sphi 0, %s103
    %s120 = sphi 0, %s104
    %s126 = sphi 0, %s128
    %s129 = sphi 0, %s126
    %s130 = sphi 0, %s129
    %s146 = sphi 0, %s130
    %s150 = sphi 0, %s150
    %s152 = sphi 0, %s150
    %s153 = sphi 0, %s152
    %s167 = sphi 0, %s153
    %s173 = sphi 0, %s175
    %s176 = sphi 0, %s173
    %s177 = sphi 0, %s176
    %s193 = sphi 0, %s177
  $region4: #{net_forward.29} parent=0 // loop_header_branch
    %15 = sbr.rel (%p13) target = $region8
  $region5: #{net_forward.29} parent=0 // loop_body
    %s17 = ssub.s32 %s12, 1
    %s18 = ssub.s32 %s12, 2
    %s19 = sadd.s32 %s12, 1
    %s20 = ssub.s32 %s12, %s19
    %p21 = scmp.eq.s32.totalorder %s20, 0
    %s23 = sadd.s32 %s22, 1
    %s24 = scalar_select %p21, %s22, %s23
    %p27 = pneg %p21
    %p28 = scmp.eq.s32.totalorder %s12, 1
    %p29 = por %p27, %p28
    %p30 = scmp.ne.s32.totalorder %s22, %s25
    %p31 = scmp.eq.s32.totalorder %s12, 0
    %p32 = por %p30, %p31
    %p33 = scmp.ne.s32.totalorder %s22, %s25
    %p34 = scmp.eq.s32.totalorder %s17, 1
    %p35 = por %p33, %p34
    %p36 = scmp.ne.s32.totalorder %s25, %s26
    %p37 = scmp.eq.s32.totalorder %s17, 0
    %p38 = por %p36, %p37
    %p39 = scmp.ne.s32.totalorder %s25, %s26
    %p40 = scmp.eq.s32.totalorder %s18, 1
    %p41 = por %p39, %p40
    %p43 = scmp.ne.s32.totalorder %s26, %s42
    %p44 = scmp.eq.s32.totalorder %s18, 0
    %p45 = por %p43, %p44
    %s46 = ssub.s32 %s12, %s19
    %p47 = scmp.eq.s32.totalorder %s46, 0
    %s49 = sadd.s32 %s48, 1
    %s50 = scalar_select %p47, %s48, %s49
    %p53 = pneg %p47
    %p54 = scmp.eq.s32.totalorder %s12, 1
    %p55 = por %p53, %p54
    %p56 = scmp.ne.s32.totalorder %s48, %s51
    %p57 = scmp.eq.s32.totalorder %s12, 0
    %p58 = por %p56, %p57
    %p59 = scmp.ne.s32.totalorder %s48, %s51
    %p60 = scmp.eq.s32.totalorder %s17, 1
    %p61 = por %p59, %p60
    %p62 = scmp.ne.s32.totalorder %s51, %s52
    %p63 = scmp.eq.s32.totalorder %s17, 0
    %p64 = por %p62, %p63
    %p65 = scmp.ne.s32.totalorder %s51, %s52
    %p66 = scmp.eq.s32.totalorder %s18, 1
    %p67 = por %p65, %p66
    %p69 = scmp.ne.s32.totalorder %s52, %s68
    %p70 = scmp.eq.s32.totalorder %s18, 0
    %p71 = por %p69, %p70
    %s72 = ssub.s32 %s12, %s19
    %p73 = scmp.eq.s32.totalorder %s72, 0
    %s75 = sadd.s32 %s74, 1
    %s76 = scalar_select %p73, %s74, %s75
    %p79 = pneg %p73
    %p80 = scmp.eq.s32.totalorder %s12, 1
    %p81 = por %p79, %p80
    %p82 = scmp.ne.s32.totalorder %s74, %s77
    %p83 = scmp.eq.s32.totalorder %s12, 0
    %p84 = por %p82, %p83
    %p85 = scmp.ne.s32.totalorder %s74, %s77
    %p86 = scmp.eq.s32.totalorder %s17, 1
    %p87 = por %p85, %p86
    %p88 = scmp.ne.s32.totalorder %s77, %s78
    %p89 = scmp.eq.s32.totalorder %s17, 0
    %p90 = por %p88, %p89
    %p91 = scmp.ne.s32.totalorder %s77, %s78
    %p92 = scmp.eq.s32.totalorder %s18, 1
    %p93 = por %p91, %p92
    %p95 = scmp.ne.s32.totalorder %s78, %s94
    %p96 = scmp.eq.s32.totalorder %s18, 0
    %p97 = por %p95, %p96
    %s98 = ssub.s32 %s12, %s19
    %p99 = scmp.eq.s32.totalorder %s98, 0
    %s101 = sadd.s32 %s100, 1
    %s102 = scalar_select %p99, %s100, %s101
    %p105 = pneg %p99
    %p106 = scmp.eq.s32.totalorder %s12, 1
    %p107 = por %p105, %p106
    %p108 = scmp.ne.s32.totalorder %s100, %s103
    %p109 = scmp.eq.s32.totalorder %s12, 0
    %p110 = por %p108, %p109
    %p111 = scmp.ne.s32.totalorder %s100, %s103
    %p112 = scmp.eq.s32.totalorder %s17, 1
    %p113 = por %p111, %p112
    %p114 = scmp.ne.s32.totalorder %s103, %s104
    %p115 = scmp.eq.s32.totalorder %s17, 0
    %p116 = por %p114, %p115
    %p117 = scmp.ne.s32.totalorder %s103, %s104
    %p118 = scmp.eq.s32.totalorder %s18, 1
    %p119 = por %p117, %p118
    %p121 = scmp.ne.s32.totalorder %s104, %s120
    %p122 = scmp.eq.s32.totalorder %s18, 0
    %p123 = por %p121, %p122
    %s124 = ssub.s32 %s12, %s19
    %p125 = scmp.eq.s32.totalorder %s124, 0
    %s127 = sadd.s32 %s126, 1
    %s128 = scalar_select %p125, %s126, %s127
    %p131 = pneg %p125
    %p132 = scmp.eq.s32.totalorder %s12, 1
    %p133 = por %p131, %p132
    %p134 = scmp.ne.s32.totalorder %s126, %s129
    %p135 = scmp.eq.s32.totalorder %s12, 0
    %p136 = por %p134, %p135
    %p137 = scmp.ne.s32.totalorder %s126, %s129
    %p138 = scmp.eq.s32.totalorder %s17, 1
    %p139 = por %p137, %p138
    %p140 = scmp.ne.s32.totalorder %s129, %s130
    %p141 = scmp.eq.s32.totalorder %s17, 0
    %p142 = por %p140, %p141
    %p143 = scmp.ne.s32.totalorder %s129, %s130
    %p144 = scmp.eq.s32.totalorder %s18, 1
    %p145 = por %p143, %p144
    %p147 = scmp.ne.s32.totalorder %s130, %s146
    %p148 = scmp.eq.s32.totalorder %s18, 0
    %p149 = por %p147, %p148
    %s151 = sadd.s32 %s150, 1
    %p154 = scmp.eq.s32.totalorder %s12, 1
    %p155 = scmp.ne.s32.totalorder %s150, %s152
    %p156 = scmp.eq.s32.totalorder %s12, 0
    %p157 = por %p155, %p156
    %p158 = scmp.ne.s32.totalorder %s150, %s152
    %p159 = scmp.eq.s32.totalorder %s17, 1
    %p160 = por %p158, %p159
    %p161 = scmp.ne.s32.totalorder %s152, %s153
    %p162 = scmp.eq.s32.totalorder %s17, 0
    %p163 = por %p161, %p162
    %p164 = scmp.ne.s32.totalorder %s152, %s153
    %p165 = scmp.eq.s32.totalorder %s18, 1
    %p166 = por %p164, %p165
    %p168 = scmp.ne.s32.totalorder %s153, %s167
    %p169 = scmp.eq.s32.totalorder %s18, 0
    %p170 = por %p168, %p169
    %s171 = ssub.s32 %s12, %s19
    %p172 = scmp.eq.s32.totalorder %s171, 0
    %s174 = sadd.s32 %s173, 1
    %s175 = scalar_select %p172, %s173, %s174
    %p178 = pneg %p172
    %p179 = scmp.eq.s32.totalorder %s12, 1
    %p180 = por %p178, %p179
    %p181 = scmp.ne.s32.totalorder %s173, %s176
    %p182 = scmp.eq.s32.totalorder %s12, 0
    %p183 = por %p181, %p182
    %p184 = scmp.ne.s32.totalorder %s173, %s176
    %p185 = scmp.eq.s32.totalorder %s17, 1
    %p186 = por %p184, %p185
    %p187 = scmp.ne.s32.totalorder %s176, %s177
    %p188 = scmp.eq.s32.totalorder %s17, 0
    %p189 = por %p187, %p188
    %p190 = scmp.ne.s32.totalorder %s176, %s177
    %p191 = scmp.eq.s32.totalorder %s18, 1
    %p192 = por %p190, %p191
    %p194 = scmp.ne.s32.totalorder %s177, %s193
    %p195 = scmp.eq.s32.totalorder %s18, 0
    %p196 = por %p194, %p195
    %p197 = scmp.le.s32.totalorder 1, %s12
    %p198 = scmp.lt.s32.totalorder %s12, 3
    %p199 = pnand %p197, %p198
    %p200 = pneg %p199
    // Predicated region
    $region9: #{net_forward.29} parent=5 // pred_check
      _
    $region10: #{net_forward.29} parent=5 // pred_check_branch
      %202 = sbr.rel (%p199) target = $region12
    $region11: #{net_forward.29} parent=5 // pred_region
      %s203 = ssub.s32 %s12, 1
      // Predicated region
      $region13: #{net_forward.29} parent=11 // pred_check
        %p204 = pneg %p163
      $region14: #{net_forward.29} parent=11 // pred_check_branch
        %206 = sbr.rel (%p204) target = $region16
      $region15: #{net_forward.29} parent=11 // pred_region
        _
      $region16: #{net_forward.29} parent=11 // pred_fallthru
        _
    $region12: #{net_forward.29} parent=5 // pred_fallthru
      _
    %p207 = scmp.lt.s32.totalorder %s12, 2
    // Predicated region
    $region17: #{net_forward.29} parent=5 // pred_check
      %p208 = pneg %p207
    $region18: #{net_forward.29} parent=5 // pred_check_branch
      %210 = sbr.rel (%p208) target = $region20
    $region19: #{net_forward.29} parent=5 // pred_region
      // Predicated region
      $region21: #{net_forward.29} parent=19 // pred_check
        %p211 = pneg %p32
      $region22: #{net_forward.29} parent=19 // pred_check_branch
        %213 = sbr.rel (%p211) target = $region24
      $region23: #{net_forward.29} parent=19 // pred_region
        %s214 = smul.u32 2, %s12
        %p215 = scmp.lt.s32.totalorder %s214, 3
        %s216 = scalar_select %p215, %s214, 3
        %s217 = smul.addr %s216, 8
        %s218 = scalar_lea.vmem %s0, %s217
        %s219 = smul.u32 2, %s12
      $region24: #{net_forward.29} parent=19 // pred_fallthru
        _
      // Predicated region
      $region25: #{net_forward.29} parent=19 // pred_check
        %p220 = pneg %p58
      $region26: #{net_forward.29} parent=19 // pred_check_branch
        %222 = sbr.rel (%p220) target = $region28
      $region27: #{net_forward.29} parent=19 // pred_region
        %s223 = smul.u32 2, %s12
        %p224 = scmp.lt.s32.totalorder %s223, 3
        %s225 = scalar_select %p224, %s223, 3
        %s226 = smul.addr %s225, 8
        %s227 = scalar_lea.vmem %s1, %s226
        %s228 = smul.u32 2, %s12
      $region28: #{net_forward.29} parent=19 // pred_fallthru
        _
      // Predicated region
      $region29: #{net_forward.29} parent=19 // pred_check
        %p229 = pneg %p84
      $region30: #{net_forward.29} parent=19 // pred_check_branch
        %231 = sbr.rel (%p229) target = $region32
      $region31: #{net_forward.29} parent=19 // pred_region
        %s232 = smul.u32 2, %s12
        %p233 = scmp.lt.s32.totalorder %s232, 3
        %s234 = scalar_select %p233, %s232, 3
        %s235 = smul.addr %s234, 8
        %s236 = scalar_lea.vmem %s2, %s235
        %s237 = smul.u32 2, %s12
      $region32: #{net_forward.29} parent=19 // pred_fallthru
        _
      // Predicated region
      $region33: #{net_forward.29} parent=19 // pred_check
        %p238 = pneg %p110
      $region34: #{net_forward.29} parent=19 // pred_check_branch
        %240 = sbr.rel (%p238) target = $region36
      $region35: #{net_forward.29} parent=19 // pred_region
        %s241 = smul.u32 2, %s12
        %p242 = scmp.lt.s32.totalorder %s241, 3
        %s243 = scalar_select %p242, %s241, 3
        %s244 = smul.addr %s243, 8
        %s245 = scalar_lea.vmem %s3, %s244
        %s246 = smul.u32 2, %s12
      $region36: #{net_forward.29} parent=19 // pred_fallthru
        _
      // Predicated region
      $region37: #{net_forward.29} parent=19 // pred_check
        %p247 = pneg %p136
      $region38: #{net_forward.29} parent=19 // pred_check_branch
        %249 = sbr.rel (%p247) target = $region40
      $region39: #{net_forward.29} parent=19 // pred_region
        %s250 = smul.u32 2, %s12
        %p251 = scmp.lt.s32.totalorder %s250, 3
        %s252 = scalar_select %p251, %s250, 3
        %s253 = smul.addr %s252, 8
        %s254 = scalar_lea.vmem %s4, %s253
        %s255 = smul.u32 2, %s12
      $region40: #{net_forward.29} parent=19 // pred_fallthru
        _
    $region20: #{net_forward.29} parent=5 // pred_fallthru
      _
    %p256 = scmp.le.s32.totalorder 1, %s12
    %p257 = scmp.lt.s32.totalorder %s12, 3
    %p258 = pnand %p256, %p257
    %p259 = pneg %p258
    // Predicated region
    $region41: #{net_forward.29} parent=5 // pred_check
      _
    $region42: #{net_forward.29} parent=5 // pred_check_branch
      %261 = sbr.rel (%p258) target = $region44
    $region43: #{net_forward.29} parent=5 // pred_region
      %s262 = ssub.s32 %s12, 1
      %s263 = smul.u32 2, %s17
      %p264 = scmp.lt.s32.totalorder %s263, 3
      %s265 = scalar_select %p264, %s263, 3
      %s266 = smul.addr %s265, 8
      %s267 = scalar_lea.vmem %s0, %s266
      %p268 = pneg %p38
      %p269 = pneg %p35
      %s270 = smul.u32 2, %s17
      %p271 = scmp.lt.s32.totalorder %s270, 3
      %s272 = scalar_select %p271, %s270, 3
      %s273 = smul.addr %s272, 8
      %s274 = scalar_lea.vmem %s1, %s273
      %p275 = pneg %p64
      %p276 = pneg %p61
      %s277 = smul.u32 2, %s17
      %p278 = scmp.lt.s32.totalorder %s277, 3
      %s279 = scalar_select %p278, %s277, 3
      %s280 = smul.addr %s279, 8
      %s281 = scalar_lea.vmem %s2, %s280
      %p282 = pneg %p90
      %p283 = pneg %p87
      %s284 = smul.u32 2, %s17
      %p285 = scmp.lt.s32.totalorder %s284, 3
      %s286 = scalar_select %p285, %s284, 3
      %s287 = smul.addr %s286, 8
      %s288 = scalar_lea.vmem %s3, %s287
      %p289 = pneg %p116
      %p290 = pneg %p113
      %s291 = smul.u32 2, %s17
      %p292 = scmp.lt.s32.totalorder %s291, 3
      %s293 = scalar_select %p292, %s291, 3
      %s294 = smul.addr %s293, 8
      %s295 = scalar_lea.vmem %s4, %s294
      %p296 = pneg %p142
      %p297 = pneg %p139
      %p298 = pneg %p163
      %p299 = pneg %p160
      %p300 = pneg %p189
      %p301 = pneg %p186
      %s302 = smul.u32 2, %s17
      %p303 = scmp.lt.s32.totalorder %s302, 3
      %s304 = scalar_select %p303, %s302, 3
      %s305 = smul.addr %s304, 8
      %s306 = scalar_lea.vmem %s6, %s305
      %s307 = smul.u32 2, %s17
      %p308 = scmp.lt.s32.totalorder %s307, 3
      %s309 = scalar_select %p308, %s307, 3
      %s310 = smul.addr %s309, 8
      %s311 = scalar_lea.vmem %s0, %s310
      %s312 = smul.u32 2, %s17
      %s313 = smul.u32 2, %s17
      %p314 = scmp.lt.s32.totalorder %s313, 3
      %s315 = scalar_select %p314, %s313, 3
      %s316 = smul.addr %s315, 8
      %s317 = scalar_lea.vmem %s1, %s316
      %s318 = smul.u32 2, %s17
      %s319 = smul.u32 2, %s17
      %p320 = scmp.lt.s32.totalorder %s319, 3
      %s321 = scalar_select %p320, %s319, 3
      %s322 = smul.addr %s321, 8
      %s323 = scalar_lea.vmem %s2, %s322
      %s324 = smul.u32 2, %s17
      %s325 = smul.u32 2, %s17
      %p326 = scmp.lt.s32.totalorder %s325, 3
      %s327 = scalar_select %p326, %s325, 3
      %s328 = smul.addr %s327, 8
      %s329 = scalar_lea.vmem %s3, %s328
      %s330 = smul.u32 2, %s17
      %s331 = smul.u32 2, %s17
      %p332 = scmp.lt.s32.totalorder %s331, 3
      %s333 = scalar_select %p332, %s331, 3
      %s334 = smul.addr %s333, 8
      %s335 = scalar_lea.vmem %s4, %s334
      %s336 = smul.u32 2, %s17
      %s337 = smul.u32 2, %s17
      %p338 = scmp.lt.s32.totalorder %s337, 3
      %s339 = scalar_select %p338, %s337, 3
      %s340 = smul.addr %s339, 8
      %s341 = scalar_lea.vmem %s6, %s340
      %s342 = smul.u32 2, %s17
      %v343 = vld [vmem:[%s335] sm:$0xff]
      %v344 = vld [vmem:[%s335 + $0x8] sm:$0xff]
      %v345 = vld [vmem:[%s5] sm:$0x1]
      %v346 = vld [vmem:[%s311] sm:$0xff]
      %v347 = vld [vmem:[%s311 + $0x8] sm:$0xff]
      %v348 = vld [vmem:[%s317] sm:$0xff]
      %v349 = vld [vmem:[%s317 + $0x8] sm:$0xff]
      %v350 = vld [vmem:[%s323] sm:$0xff]
      %v351 = vld [vmem:[%s323 + $0x8] sm:$0xff]
      %v352 = vld [vmem:[%s329] sm:$0xff]
      %v353 = vld [vmem:[%s329 + $0x8] sm:$0xff]
      %v354 = vsub.f32 %v348, %v346
      %v355 = vsub.f32 %v349, %v347
      %v357 = vlaneseq
      %v358 = vshrl.u32 %v357, 7
      %v359 = vsub.s32 0, %v358
      %v360 = vrot.slane %v345, %v359
      %v362 = vmul.f32 %v360, %v354
      %v363 = vmul.f32 %v360, %v355
      %v364 = vadd.f32 %v346, %v362
      %v365 = vadd.f32 %v347, %v363
      %v366 = vsub.f32 %v352, %v350
      %v367 = vsub.f32 %v353, %v351
      %v368 = vmul.f32 %v360, %v366
      %v369 = vmul.f32 %v360, %v367
      %v370 = vadd.f32 %v350, %v368
      %v371 = vadd.f32 %v351, %v369
      %v372 = vsub.f32 %v370, %v364
      %v373 = vsub.f32 %v371, %v365
      %375 = vset.pattern.permute.xlu0 0
      %376 = vperm.xlu0 %375, %v343
      %v377 = vpop.permute.xlu0 %376
      %380 = vset.pattern.permute.xlu0 0
      %381 = vperm.xlu0 %380, %v344
      %v382 = vpop.permute.xlu0 %381
      %v384 = vmul.f32 %v377, %v372
      %v385 = vmul.f32 %v382, %v373
      %v386 = vadd.f32 %v364, %v384
      %v387 = vadd.f32 %v365, %v385
      %388 = vst [vmem:[%s341] sm:$0xff] %v386
      %389 = vst [vmem:[%s341 + $0x8] sm:$0xff] %v387
      %s390 = smul.u32 2, %s17
      %p391 = scmp.lt.s32.totalorder %s390, 3
      %s392 = scalar_select %p391, %s390, 3
      %s393 = smul.addr %s392, 8
      %s394 = scalar_lea.vmem %s6, %s393
      // Predicated region
      $region45: #{net_forward.29} parent=43 // pred_check
        %p395 = pneg %p186
      $region46: #{net_forward.29} parent=43 // pred_check_branch
        %397 = sbr.rel (%p395) target = $region48
      $region47: #{net_forward.29} parent=43 // pred_region
        %s398 = smul.u32 2, %s17
      $region48: #{net_forward.29} parent=43 // pred_fallthru
        _
    $region44: #{net_forward.29} parent=5 // pred_fallthru
      _
    %p399 = scmp.le.s32.totalorder 2, %s12
    // Predicated region
    $region49: #{net_forward.29} parent=5 // pred_check
      %p400 = pneg %p399
    $region50: #{net_forward.29} parent=5 // pred_check_branch
      %402 = sbr.rel (%p400) target = $region52
    $region51: #{net_forward.29} parent=5 // pred_region
      %s403 = ssub.s32 %s12, 2
      // Predicated region
      $region53: #{net_forward.29} parent=51 // pred_check
        %p404 = pneg %p192
      $region54: #{net_forward.29} parent=51 // pred_check_branch
        %406 = sbr.rel (%p404) target = $region56
      $region55: #{net_forward.29} parent=51 // pred_region
        %s407 = smul.u32 2, %s18
        %p408 = scmp.lt.s32.totalorder %s407, 3
        %s409 = scalar_select %p408, %s407, 3
        %s410 = smul.addr %s409, 8
        %s411 = scalar_lea.vmem %s6, %s410
      $region56: #{net_forward.29} parent=51 // pred_fallthru
        _
    $region52: #{net_forward.29} parent=5 // pred_fallthru
      _
  $region6: #{net_forward.29} parent=0 // loop_footer
    %s16 = sadd.s32 1, %s12
  $region7: #{net_forward.29} parent=0 // loop_footer_branch
    %11 = sbr.rel target = $region3
  $region8: #{net_forward.29} parent=0 // loop_exit
    _

// kernel: net_forward.28
$region0: #{net_forward.28}
  #allocation0 [shape = 'u32[]', space=smem, size = 0x4, offset = 0x4, fixed_abs, tag = 'smem constant byte address 0x4 - core index']
  #allocation1 [shape = 'u32[144,128]{1,0:T(1,128)}', space=vmem, size = 0x12000, scoped, tag = 'internal scratch']
  %s0 = inlined_call_operand.vmem [shape: bf16[32,2304], index: 0, kind: input, shape index: {}]
  %s1 = inlined_call_operand.vmem [shape: bf16[2304,128], index: 1, kind: input, shape index: {}]
  %s2 = inlined_call_operand.vmem [shape: f32[1,128], index: 2, kind: input, shape index: {}]
  %s3 = inlined_call_operand.vmem [shape: f32[32,128], index: 3, kind: output, shape index: {}]
  %s4 = sld [smem:[#allocation0]]
  $region45: #{net_forward.28} parent=0
    _
  %s6 = ssub.s32 1, %s4
  %s7 = scalar_select 0, %s6, %s4
  loop: start=0, step=1, limit=4
  $region2: #{net_forward.28} parent=0 // loop_pre_header
    _
  $region3: #{net_forward.28} parent=0 // loop_header
    %s9 = sphi 0, %s13
    %p10 = scmp.ge.s32.totalorder %s9, 4
    %s16 = sphi 0, %s28
    %s17 = sphi 0, %s24
    %s18 = sphi 0, %s16
    %s19 = sphi 0, %s17
    %s20 = sphi 0, %s18
    %s21 = sphi 0, %s19
    %s31 = sphi 0, %s33
    %s34 = sphi 0, %s31
    %s35 = sphi 0, %s34
    %s51 = sphi 0, %s35
    %s57 = sphi 0, %s59
    %s60 = sphi 0, %s57
    %s61 = sphi 0, %s60
    %s77 = sphi 0, %s61
    %s83 = sphi 0, %s85
    %s86 = sphi 0, %s83
    %s87 = sphi 0, %s86
    %s103 = sphi 0, %s87
    %s111 = sphi 0, %s113
    %s114 = sphi 0, %s111
    %s115 = sphi 0, %s114
    %s131 = sphi 0, %s115
  $region4: #{net_forward.28} parent=0 // loop_header_branch
    %12 = sbr.rel (%p10) target = $region8
  $region5: #{net_forward.28} parent=0 // loop_body
    %s14 = ssub.s32 %s9, 1
    %s15 = ssub.s32 %s9, 2
    %s22 = sadd.s32 1, %s17
    %p23 = scmp.ge.s32.totalorder %s22, 1
    %s24 = scalar_select %p23, 0, %s22
    %s25 = sadd.s32 1, %s16
    %s26 = scalar_select %p23, %s25, %s16
    %p27 = scmp.ge.s32.totalorder %s26, 2
    %s28 = scalar_select %p27, 0, %s26
    %s29 = ssub.s32 %s16, %s28
    %p30 = scmp.eq.s32.totalorder %s29, 0
    %s32 = sadd.s32 %s31, 1
    %s33 = scalar_select %p30, %s31, %s32
    %p36 = pneg %p30
    %p37 = scmp.eq.s32.totalorder %s9, 1
    %p38 = por %p36, %p37
    %p39 = scmp.ne.s32.totalorder %s31, %s34
    %p40 = scmp.eq.s32.totalorder %s9, 0
    %p41 = por %p39, %p40
    %p42 = scmp.ne.s32.totalorder %s31, %s34
    %p43 = scmp.eq.s32.totalorder %s14, 1
    %p44 = por %p42, %p43
    %p45 = scmp.ne.s32.totalorder %s34, %s35
    %p46 = scmp.eq.s32.totalorder %s14, 0
    %p47 = por %p45, %p46
    %p48 = scmp.ne.s32.totalorder %s34, %s35
    %p49 = scmp.eq.s32.totalorder %s15, 1
    %p50 = por %p48, %p49
    %p52 = scmp.ne.s32.totalorder %s35, %s51
    %p53 = scmp.eq.s32.totalorder %s15, 0
    %p54 = por %p52, %p53
    %s55 = ssub.s32 %s17, %s24
    %p56 = scmp.eq.s32.totalorder %s55, 0
    %s58 = sadd.s32 %s57, 1
    %s59 = scalar_select %p56, %s57, %s58
    %p62 = pneg %p56
    %p63 = scmp.eq.s32.totalorder %s9, 1
    %p64 = por %p62, %p63
    %p65 = scmp.ne.s32.totalorder %s57, %s60
    %p66 = scmp.eq.s32.totalorder %s9, 0
    %p67 = por %p65, %p66
    %p68 = scmp.ne.s32.totalorder %s57, %s60
    %p69 = scmp.eq.s32.totalorder %s14, 1
    %p70 = por %p68, %p69
    %p71 = scmp.ne.s32.totalorder %s60, %s61
    %p72 = scmp.eq.s32.totalorder %s14, 0
    %p73 = por %p71, %p72
    %p74 = scmp.ne.s32.totalorder %s60, %s61
    %p75 = scmp.eq.s32.totalorder %s15, 1
    %p76 = por %p74, %p75
    %p78 = scmp.ne.s32.totalorder %s61, %s77
    %p79 = scmp.eq.s32.totalorder %s15, 0
    %p80 = por %p78, %p79
    %s81 = ssub.s32 %s17, %s24
    %p82 = scmp.eq.s32.totalorder %s81, 0
    %s84 = sadd.s32 %s83, 1
    %s85 = scalar_select %p82, %s83, %s84
    %p88 = pneg %p82
    %p89 = scmp.eq.s32.totalorder %s9, 1
    %p90 = por %p88, %p89
    %p91 = scmp.ne.s32.totalorder %s83, %s86
    %p92 = scmp.eq.s32.totalorder %s9, 0
    %p93 = por %p91, %p92
    %p94 = scmp.ne.s32.totalorder %s83, %s86
    %p95 = scmp.eq.s32.totalorder %s14, 1
    %p96 = por %p94, %p95
    %p97 = scmp.ne.s32.totalorder %s86, %s87
    %p98 = scmp.eq.s32.totalorder %s14, 0
    %p99 = por %p97, %p98
    %p100 = scmp.ne.s32.totalorder %s86, %s87
    %p101 = scmp.eq.s32.totalorder %s15, 1
    %p102 = por %p100, %p101
    %p104 = scmp.ne.s32.totalorder %s87, %s103
    %p105 = scmp.eq.s32.totalorder %s15, 0
    %p106 = por %p104, %p105
    %s107 = ssub.s32 %s16, %s28
    %s108 = ssub.s32 %s17, %s24
    %s109 = sor.u32 %s107, %s108
    %p110 = scmp.eq.s32.totalorder %s109, 0
    %s112 = sadd.s32 %s111, 1
    %s113 = scalar_select %p110, %s111, %s112
    %p116 = pneg %p110
    %p117 = scmp.eq.s32.totalorder %s9, 1
    %p118 = por %p116, %p117
    %p119 = scmp.ne.s32.totalorder %s111, %s114
    %p120 = scmp.eq.s32.totalorder %s9, 0
    %p121 = por %p119, %p120
    %p122 = scmp.ne.s32.totalorder %s111, %s114
    %p123 = scmp.eq.s32.totalorder %s14, 1
    %p124 = por %p122, %p123
    %p125 = scmp.ne.s32.totalorder %s114, %s115
    %p126 = scmp.eq.s32.totalorder %s14, 0
    %p127 = por %p125, %p126
    %p128 = scmp.ne.s32.totalorder %s114, %s115
    %p129 = scmp.eq.s32.totalorder %s15, 1
    %p130 = por %p128, %p129
    %p132 = scmp.ne.s32.totalorder %s115, %s131
    %p133 = scmp.eq.s32.totalorder %s15, 0
    %p134 = por %p132, %p133
    %p135 = scmp.le.s32.totalorder 1, %s9
    %p136 = scmp.lt.s32.totalorder %s9, 3
    %p137 = pnand %p135, %p136
    %p138 = pneg %p137
    // Predicated region
    $region9: #{net_forward.28} parent=5 // pred_check
      _
    $region10: #{net_forward.28} parent=5 // pred_check_branch
      %140 = sbr.rel (%p137) target = $region12
    $region11: #{net_forward.28} parent=5 // pred_region
      %s141 = ssub.s32 %s9, 1
      // Predicated region
      $region13: #{net_forward.28} parent=11 // pred_check
        %p142 = pneg %p73
      $region14: #{net_forward.28} parent=11 // pred_check_branch
        %144 = sbr.rel (%p142) target = $region16
      $region15: #{net_forward.28} parent=11 // pred_region
        %p145 = scmp.lt.s32.totalorder %s19, 0
        %s146 = scalar_select %p145, %s19, 0
        %s147 = smul.addr %s146, 4
        %s148 = scalar_lea.vmem %s1, %s147
      $region16: #{net_forward.28} parent=11 // pred_fallthru
        _
      // Predicated region
      $region17: #{net_forward.28} parent=11 // pred_check
        %p149 = pneg %p99
      $region18: #{net_forward.28} parent=11 // pred_check_branch
        %151 = sbr.rel (%p149) target = $region20
      $region19: #{net_forward.28} parent=11 // pred_region
        %p152 = scmp.lt.s32.totalorder %s19, 0
        %s153 = scalar_select %p152, %s19, 0
        %s154 = scalar_lea.vmem %s2, %s153
      $region20: #{net_forward.28} parent=11 // pred_fallthru
        _
    $region12: #{net_forward.28} parent=5 // pred_fallthru
      _
    %p155 = scmp.lt.s32.totalorder %s9, 2
    // Predicated region
    $region21: #{net_forward.28} parent=5 // pred_check
      %p156 = pneg %p155
    $region22: #{net_forward.28} parent=5 // pred_check_branch
      %158 = sbr.rel (%p156) target = $region24
    $region23: #{net_forward.28} parent=5 // pred_region
      // Predicated region
      $region25: #{net_forward.28} parent=23 // pred_check
        %p159 = pneg %p41
      $region26: #{net_forward.28} parent=23 // pred_check_branch
        %161 = sbr.rel (%p159) target = $region28
      $region27: #{net_forward.28} parent=23 // pred_region
        %s162 = smul.u32 2, %s16
        %p163 = scmp.lt.s32.totalorder %s162, 3
        %s164 = scalar_select %p163, %s162, 3
        %s165 = smul.addr %s164, 18
        %s166 = smul.addr %s165, 4
        %s167 = scalar_lea.vmem %s0, %s166
        %s168 = smul.u32 2, %s16
      $region28: #{net_forward.28} parent=23 // pred_fallthru
        _
    $region24: #{net_forward.28} parent=5 // pred_fallthru
      _
    %p169 = scmp.le.s32.totalorder 1, %s9
    %p170 = scmp.lt.s32.totalorder %s9, 3
    %p171 = pnand %p169, %p170
    %p172 = pneg %p171
    // Predicated region
    $region29: #{net_forward.28} parent=5 // pred_check
      _
    $region30: #{net_forward.28} parent=5 // pred_check_branch
      %174 = sbr.rel (%p171) target = $region32
    $region31: #{net_forward.28} parent=5 // pred_region
      %s175 = ssub.s32 %s9, 1
      %s176 = smul.u32 2, %s18
      %p177 = scmp.lt.s32.totalorder %s176, 3
      %s178 = scalar_select %p177, %s176, 3
      %s179 = smul.addr %s178, 18
      %s180 = smul.addr %s179, 4
      %s181 = scalar_lea.vmem %s0, %s180
      %p182 = pneg %p47
      %p183 = pneg %p44
      %p184 = scmp.lt.s32.totalorder %s19, 0
      %s185 = scalar_select %p184, %s19, 0
      %s186 = smul.addr %s185, 4
      %s187 = scalar_lea.vmem %s1, %s186
      %p188 = pneg %p73
      %p189 = pneg %p70
      %p190 = scmp.lt.s32.totalorder %s19, 0
      %s191 = scalar_select %p190, %s19, 0
      %s192 = scalar_lea.vmem %s2, %s191
      %p193 = pneg %p99
      %p194 = pneg %p96
      %p195 = pneg %p127
      %p196 = pneg %p124
      %s197 = smul.u32 2, %s18
      %p198 = scmp.lt.s32.totalorder %s197, 3
      %s199 = scalar_select %p198, %s197, 3
      %p200 = scmp.lt.s32.totalorder %s19, 0
      %s201 = scalar_select %p200, %s19, 0
      %s202 = sadd.s32 %s201, %s199
      %s203 = smul.addr %s202, 8
      %s204 = scalar_lea.vmem %s3, %s203
      %s205 = smul.u32 2, %s18
      %p206 = scmp.lt.s32.totalorder %s205, 3
      %s207 = scalar_select %p206, %s205, 3
      %s208 = smul.addr %s207, 18
      %s209 = smul.addr %s208, 4
      %s210 = scalar_lea.vmem %s0, %s209
      %s211 = smul.u32 2, %s18
      %p212 = scmp.lt.s32.totalorder %s19, 0
      %s213 = scalar_select %p212, %s19, 0
      %s214 = smul.addr %s213, 4
      %s215 = scalar_lea.vmem %s1, %s214
      %p216 = scmp.lt.s32.totalorder %s19, 0
      %s217 = scalar_select %p216, %s19, 0
      %s218 = scalar_lea.vmem %s2, %s217
      %s219 = smul.u32 2, %s18
      %p220 = scmp.lt.s32.totalorder %s219, 3
      %s221 = scalar_select %p220, %s219, 3
      %p222 = scmp.lt.s32.totalorder %s19, 0
      %s223 = scalar_select %p222, %s19, 0
      %s224 = sadd.s32 %s223, %s221
      %s225 = smul.addr %s224, 8
      %s226 = scalar_lea.vmem %s3, %s225
      %s227 = smul.u32 2, %s18
      %v229 = vld [vmem:[%s210] sm:$0xff]
      %v230 = vld [vmem:[%s210 + $0x8] sm:$0xff]
      %v231 = vld [vmem:[%s210 + $0x10] sm:$0xff]
      %v232 = vld [vmem:[%s210 + $0x18] sm:$0xff]
      %v233 = vld [vmem:[%s210 + $0x20] sm:$0xff]
      %v234 = vld [vmem:[%s210 + $0x28] sm:$0xff]
      %v235 = vld [vmem:[%s210 + $0x30] sm:$0xff]
      %v236 = vld [vmem:[%s210 + $0x38] sm:$0xff]
      %v237 = vld [vmem:[%s210 + $0x40] sm:$0xff]
      %v238 = vld [vmem:[%s210 + $0x48] sm:$0xff]
      %v239 = vld [vmem:[%s210 + $0x50] sm:$0xff]
      %v240 = vld [vmem:[%s210 + $0x58] sm:$0xff]
      %v241 = vld [vmem:[%s210 + $0x60] sm:$0xff]
      %v242 = vld [vmem:[%s210 + $0x68] sm:$0xff]
      %v243 = vld [vmem:[%s210 + $0x70] sm:$0xff]
      %v244 = vld [vmem:[%s210 + $0x78] sm:$0xff]
      %v245 = vld [vmem:[%s210 + $0x80] sm:$0xff]
      %v246 = vld [vmem:[%s210 + $0x88] sm:$0xff]
      %v247 = vld [vmem:[%s215] sm:$0xf]
      %v248 = vld [vmem:[%s215 + $0x4] sm:$0xf]
      %v249 = vld [vmem:[%s215 + $0x8] sm:$0xf]
      %v250 = vld [vmem:[%s215 + $0xc] sm:$0xf]
      %v251 = vld [vmem:[%s215 + $0x10] sm:$0xf]
      %v252 = vld [vmem:[%s215 + $0x14] sm:$0xf]
      %v253 = vld [vmem:[%s215 + $0x18] sm:$0xf]
      %v254 = vld [vmem:[%s215 + $0x1c] sm:$0xf]
      %v255 = vld [vmem:[%s215 + $0x20] sm:$0xf]
      %v256 = vld [vmem:[%s215 + $0x24] sm:$0xf]
      %v257 = vld [vmem:[%s215 + $0x28] sm:$0xf]
      %v258 = vld [vmem:[%s215 + $0x2c] sm:$0xf]
      %v259 = vld [vmem:[%s215 + $0x30] sm:$0xf]
      %v260 = vld [vmem:[%s215 + $0x34] sm:$0xf]
      %v261 = vld [vmem:[%s215 + $0x38] sm:$0xf]
      %v262 = vld [vmem:[%s215 + $0x3c] sm:$0xf]
      %v263 = vld [vmem:[%s215 + $0x40] sm:$0xf]
      %v264 = vld [vmem:[%s215 + $0x44] sm:$0xf]
      %v265 = vld [vmem:[%s215 + $0x48] sm:$0xf]
      %v266 = vld [vmem:[%s215 + $0x4c] sm:$0xf]
      %v267 = vld [vmem:[%s215 + $0x50] sm:$0xf]
      %v268 = vld [vmem:[%s215 + $0x54] sm:$0xf]
      %v269 = vld [vmem:[%s215 + $0x58] sm:$0xf]
      %v270 = vld [vmem:[%s215 + $0x5c] sm:$0xf]
      %v271 = vld [vmem:[%s215 + $0x60] sm:$0xf]
      %v272 = vld [vmem:[%s215 + $0x64] sm:$0xf]
      %v273 = vld [vmem:[%s215 + $0x68] sm:$0xf]
      %v274 = vld [vmem:[%s215 + $0x6c] sm:$0xf]
      %v275 = vld [vmem:[%s215 + $0x70] sm:$0xf]
      %v276 = vld [vmem:[%s215 + $0x74] sm:$0xf]
      %v277 = vld [vmem:[%s215 + $0x78] sm:$0xf]
      %v278 = vld [vmem:[%s215 + $0x7c] sm:$0xf]
      %v279 = vld [vmem:[%s215 + $0x80] sm:$0xf]
      %v280 = vld [vmem:[%s215 + $0x84] sm:$0xf]
      %v281 = vld [vmem:[%s215 + $0x88] sm:$0xf]
      %v282 = vld [vmem:[%s215 + $0x8c] sm:$0xf]
      %v283 = vld [vmem:[%s215 + $0x90] sm:$0xf]
      %v284 = vld [vmem:[%s215 + $0x94] sm:$0xf]
      %v285 = vld [vmem:[%s215 + $0x98] sm:$0xf]
      %v286 = vld [vmem:[%s215 + $0x9c] sm:$0xf]
      %v287 = vld [vmem:[%s215 + $0xa0] sm:$0xf]
      %v288 = vld [vmem:[%s215 + $0xa4] sm:$0xf]
      %v289 = vld [vmem:[%s215 + $0xa8] sm:$0xf]
      %v290 = vld [vmem:[%s215 + $0xac] sm:$0xf]
      %v291 = vld [vmem:[%s215 + $0xb0] sm:$0xf]
      %v292 = vld [vmem:[%s215 + $0xb4] sm:$0xf]
      %v293 = vld [vmem:[%s215 + $0xb8] sm:$0xf]
      %v294 = vld [vmem:[%s215 + $0xbc] sm:$0xf]
      %v295 = vld [vmem:[%s215 + $0xc0] sm:$0xf]
      %v296 = vld [vmem:[%s215 + $0xc4] sm:$0xf]
      %v297 = vld [vmem:[%s215 + $0xc8] sm:$0xf]
      %v298 = vld [vmem:[%s215 + $0xcc] sm:$0xf]
      %v299 = vld [vmem:[%s215 + $0xd0] sm:$0xf]
      %v300 = vld [vmem:[%s215 + $0xd4] sm:$0xf]
      %v301 = vld [vmem:[%s215 + $0xd8] sm:$0xf]
      %v302 = vld [vmem:[%s215 + $0xdc] sm:$0xf]
      %v303 = vld [vmem:[%s215 + $0xe0] sm:$0xf]
      %v304 = vld [vmem:[%s215 + $0xe4] sm:$0xf]
      %v305 = vld [vmem:[%s215 + $0xe8] sm:$0xf]
      %v306 = vld [vmem:[%s215 + $0xec] sm:$0xf]
      %v307 = vld [vmem:[%s215 + $0xf0] sm:$0xf]
      %v308 = vld [vmem:[%s215 + $0xf4] sm:$0xf]
      %v309 = vld [vmem:[%s215 + $0xf8] sm:$0xf]
      %v310 = vld [vmem:[%s215 + $0xfc] sm:$0xf]
      %v311 = vld [vmem:[%s215 + $0x100] sm:$0xf]
      %v312 = vld [vmem:[%s215 + $0x104] sm:$0xf]
      %v313 = vld [vmem:[%s215 + $0x108] sm:$0xf]
      %v314 = vld [vmem:[%s215 + $0x10c] sm:$0xf]
      %v315 = vld [vmem:[%s215 + $0x110] sm:$0xf]
      %v316 = vld [vmem:[%s215 + $0x114] sm:$0xf]
      %v317 = vld [vmem:[%s215 + $0x118] sm:$0xf]
      %v318 = vld [vmem:[%s215 + $0x11c] sm:$0xf]
      %v319 = vld [vmem:[%s215 + $0x120] sm:$0xf]
      %v320 = vld [vmem:[%s215 + $0x124] sm:$0xf]
      %v321 = vld [vmem:[%s215 + $0x128] sm:$0xf]
      %v322 = vld [vmem:[%s215 + $0x12c] sm:$0xf]
      %v323 = vld [vmem:[%s215 + $0x130] sm:$0xf]
      %v324 = vld [vmem:[%s215 + $0x134] sm:$0xf]
      %v325 = vld [vmem:[%s215 + $0x138] sm:$0xf]
      %v326 = vld [vmem:[%s215 + $0x13c] sm:$0xf]
      %v327 = vld [vmem:[%s215 + $0x140] sm:$0xf]
      %v328 = vld [vmem:[%s215 + $0x144] sm:$0xf]
      %v329 = vld [vmem:[%s215 + $0x148] sm:$0xf]
      %v330 = vld [vmem:[%s215 + $0x14c] sm:$0xf]
      %v331 = vld [vmem:[%s215 + $0x150] sm:$0xf]
      %v332 = vld [vmem:[%s215 + $0x154] sm:$0xf]
      %v333 = vld [vmem:[%s215 + $0x158] sm:$0xf]
      %v334 = vld [vmem:[%s215 + $0x15c] sm:$0xf]
      %v335 = vld [vmem:[%s215 + $0x160] sm:$0xf]
      %v336 = vld [vmem:[%s215 + $0x164] sm:$0xf]
      %v337 = vld [vmem:[%s215 + $0x168] sm:$0xf]
      %v338 = vld [vmem:[%s215 + $0x16c] sm:$0xf]
      %v339 = vld [vmem:[%s215 + $0x170] sm:$0xf]
      %v340 = vld [vmem:[%s215 + $0x174] sm:$0xf]
      %v341 = vld [vmem:[%s215 + $0x178] sm:$0xf]
      %v342 = vld [vmem:[%s215 + $0x17c] sm:$0xf]
      %v343 = vld [vmem:[%s215 + $0x180] sm:$0xf]
      %v344 = vld [vmem:[%s215 + $0x184] sm:$0xf]
      %v345 = vld [vmem:[%s215 + $0x188] sm:$0xf]
      %v346 = vld [vmem:[%s215 + $0x18c] sm:$0xf]
      %v347 = vld [vmem:[%s215 + $0x190] sm:$0xf]
      %v348 = vld [vmem:[%s215 + $0x194] sm:$0xf]
      %v349 = vld [vmem:[%s215 + $0x198] sm:$0xf]
      %v350 = vld [vmem:[%s215 + $0x19c] sm:$0xf]
      %v351 = vld [vmem:[%s215 + $0x1a0] sm:$0xf]
      %v352 = vld [vmem:[%s215 + $0x1a4] sm:$0xf]
      %v353 = vld [vmem:[%s215 + $0x1a8] sm:$0xf]
      %v354 = vld [vmem:[%s215 + $0x1ac] sm:$0xf]
      %v355 = vld [vmem:[%s215 + $0x1b0] sm:$0xf]
      %v356 = vld [vmem:[%s215 + $0x1b4] sm:$0xf]
      %v357 = vld [vmem:[%s215 + $0x1b8] sm:$0xf]
      %v358 = vld [vmem:[%s215 + $0x1bc] sm:$0xf]
      %v359 = vld [vmem:[%s215 + $0x1c0] sm:$0xf]
      %v360 = vld [vmem:[%s215 + $0x1c4] sm:$0xf]
      %v361 = vld [vmem:[%s215 + $0x1c8] sm:$0xf]
      %v362 = vld [vmem:[%s215 + $0x1cc] sm:$0xf]
      %v363 = vld [vmem:[%s215 + $0x1d0] sm:$0xf]
      %v364 = vld [vmem:[%s215 + $0x1d4] sm:$0xf]
      %v365 = vld [vmem:[%s215 + $0x1d8] sm:$0xf]
      %v366 = vld [vmem:[%s215 + $0x1dc] sm:$0xf]
      %v367 = vld [vmem:[%s215 + $0x1e0] sm:$0xf]
      %v368 = vld [vmem:[%s215 + $0x1e4] sm:$0xf]
      %v369 = vld [vmem:[%s215 + $0x1e8] sm:$0xf]
      %v370 = vld [vmem:[%s215 + $0x1ec] sm:$0xf]
      %v371 = vld [vmem:[%s215 + $0x1f0] sm:$0xf]
      %v372 = vld [vmem:[%s215 + $0x1f4] sm:$0xf]
      %v373 = vld [vmem:[%s215 + $0x1f8] sm:$0xf]
      %v374 = vld [vmem:[%s215 + $0x1fc] sm:$0xf]
      %v375 = vld [vmem:[%s215 + $0x200] sm:$0xf]
      %v376 = vld [vmem:[%s215 + $0x204] sm:$0xf]
      %v377 = vld [vmem:[%s215 + $0x208] sm:$0xf]
      %v378 = vld [vmem:[%s215 + $0x20c] sm:$0xf]
      %v379 = vld [vmem:[%s215 + $0x210] sm:$0xf]
      %v380 = vld [vmem:[%s215 + $0x214] sm:$0xf]
      %v381 = vld [vmem:[%s215 + $0x218] sm:$0xf]
      %v382 = vld [vmem:[%s215 + $0x21c] sm:$0xf]
      %v383 = vld [vmem:[%s215 + $0x220] sm:$0xf]
      %v384 = vld [vmem:[%s215 + $0x224] sm:$0xf]
      %v385 = vld [vmem:[%s215 + $0x228] sm:$0xf]
      %v386 = vld [vmem:[%s215 + $0x22c] sm:$0xf]
      %v387 = vld [vmem:[%s215 + $0x230] sm:$0xf]
      %v388 = vld [vmem:[%s215 + $0x234] sm:$0xf]
      %v389 = vld [vmem:[%s215 + $0x238] sm:$0xf]
      %v390 = vld [vmem:[%s215 + $0x23c] sm:$0xf]
      %v391 = vld [vmem:[%s215 + $0x240] sm:$0xf]
      %v392 = vld [vmem:[%s215 + $0x244] sm:$0xf]
      %v393 = vld [vmem:[%s215 + $0x248] sm:$0xf]
      %v394 = vld [vmem:[%s215 + $0x24c] sm:$0xf]
      %v395 = vld [vmem:[%s215 + $0x250] sm:$0xf]
      %v396 = vld [vmem:[%s215 + $0x254] sm:$0xf]
      %v397 = vld [vmem:[%s215 + $0x258] sm:$0xf]
      %v398 = vld [vmem:[%s215 + $0x25c] sm:$0xf]
      %v399 = vld [vmem:[%s215 + $0x260] sm:$0xf]
      %v400 = vld [vmem:[%s215 + $0x264] sm:$0xf]
      %v401 = vld [vmem:[%s215 + $0x268] sm:$0xf]
      %v402 = vld [vmem:[%s215 + $0x26c] sm:$0xf]
      %v403 = vld [vmem:[%s215 + $0x270] sm:$0xf]
      %v404 = vld [vmem:[%s215 + $0x274] sm:$0xf]
      %v405 = vld [vmem:[%s215 + $0x278] sm:$0xf]
      %v406 = vld [vmem:[%s215 + $0x27c] sm:$0xf]
      %v407 = vld [vmem:[%s215 + $0x280] sm:$0xf]
      %v408 = vld [vmem:[%s215 + $0x284] sm:$0xf]
      %v409 = vld [vmem:[%s215 + $0x288] sm:$0xf]
      %v410 = vld [vmem:[%s215 + $0x28c] sm:$0xf]
      %v411 = vld [vmem:[%s215 + $0x290] sm:$0xf]
      %v412 = vld [vmem:[%s215 + $0x294] sm:$0xf]
      %v413 = vld [vmem:[%s215 + $0x298] sm:$0xf]
      %v414 = vld [vmem:[%s215 + $0x29c] sm:$0xf]
      %v415 = vld [vmem:[%s215 + $0x2a0] sm:$0xf]
      %v416 = vld [vmem:[%s215 + $0x2a4] sm:$0xf]
      %v417 = vld [vmem:[%s215 + $0x2a8] sm:$0xf]
      %v418 = vld [vmem:[%s215 + $0x2ac] sm:$0xf]
      %v419 = vld [vmem:[%s215 + $0x2b0] sm:$0xf]
      %v420 = vld [vmem:[%s215 + $0x2b4] sm:$0xf]
      %v421 = vld [vmem:[%s215 + $0x2b8] sm:$0xf]
      %v422 = vld [vmem:[%s215 + $0x2bc] sm:$0xf]
      %v423 = vld [vmem:[%s215 + $0x2c0] sm:$0xf]
      %v424 = vld [vmem:[%s215 + $0x2c4] sm:$0xf]
      %v425 = vld [vmem:[%s215 + $0x2c8] sm:$0xf]
      %v426 = vld [vmem:[%s215 + $0x2cc] sm:$0xf]
      %v427 = vld [vmem:[%s215 + $0x2d0] sm:$0xf]
      %v428 = vld [vmem:[%s215 + $0x2d4] sm:$0xf]
      %v429 = vld [vmem:[%s215 + $0x2d8] sm:$0xf]
      %v430 = vld [vmem:[%s215 + $0x2dc] sm:$0xf]
      %v431 = vld [vmem:[%s215 + $0x2e0] sm:$0xf]
      %v432 = vld [vmem:[%s215 + $0x2e4] sm:$0xf]
      %v433 = vld [vmem:[%s215 + $0x2e8] sm:$0xf]
      %v434 = vld [vmem:[%s215 + $0x2ec] sm:$0xf]
      %v435 = vld [vmem:[%s215 + $0x2f0] sm:$0xf]
      %v436 = vld [vmem:[%s215 + $0x2f4] sm:$0xf]
      %v437 = vld [vmem:[%s215 + $0x2f8] sm:$0xf]
      %v438 = vld [vmem:[%s215 + $0x2fc] sm:$0xf]
      %v439 = vld [vmem:[%s215 + $0x300] sm:$0xf]
      %v440 = vld [vmem:[%s215 + $0x304] sm:$0xf]
      %v441 = vld [vmem:[%s215 + $0x308] sm:$0xf]
      %v442 = vld [vmem:[%s215 + $0x30c] sm:$0xf]
      %v443 = vld [vmem:[%s215 + $0x310] sm:$0xf]
      %v444 = vld [vmem:[%s215 + $0x314] sm:$0xf]
      %v445 = vld [vmem:[%s215 + $0x318] sm:$0xf]
      %v446 = vld [vmem:[%s215 + $0x31c] sm:$0xf]
      %v447 = vld [vmem:[%s215 + $0x320] sm:$0xf]
      %v448 = vld [vmem:[%s215 + $0x324] sm:$0xf]
      %v449 = vld [vmem:[%s215 + $0x328] sm:$0xf]
      %v450 = vld [vmem:[%s215 + $0x32c] sm:$0xf]
      %v451 = vld [vmem:[%s215 + $0x330] sm:$0xf]
      %v452 = vld [vmem:[%s215 + $0x334] sm:$0xf]
      %v453 = vld [vmem:[%s215 + $0x338] sm:$0xf]
      %v454 = vld [vmem:[%s215 + $0x33c] sm:$0xf]
      %v455 = vld [vmem:[%s215 + $0x340] sm:$0xf]
      %v456 = vld [vmem:[%s215 + $0x344] sm:$0xf]
      %v457 = vld [vmem:[%s215 + $0x348] sm:$0xf]
      %v458 = vld [vmem:[%s215 + $0x34c] sm:$0xf]
      %v459 = vld [vmem:[%s215 + $0x350] sm:$0xf]
      %v460 = vld [vmem:[%s215 + $0x354] sm:$0xf]
      %v461 = vld [vmem:[%s215 + $0x358] sm:$0xf]
      %v462 = vld [vmem:[%s215 + $0x35c] sm:$0xf]
      %v463 = vld [vmem:[%s215 + $0x360] sm:$0xf]
      %v464 = vld [vmem:[%s215 + $0x364] sm:$0xf]
      %v465 = vld [vmem:[%s215 + $0x368] sm:$0xf]
      %v466 = vld [vmem:[%s215 + $0x36c] sm:$0xf]
      %v467 = vld [vmem:[%s215 + $0x370] sm:$0xf]
      %v468 = vld [vmem:[%s215 + $0x374] sm:$0xf]
      %v469 = vld [vmem:[%s215 + $0x378] sm:$0xf]
      %v470 = vld [vmem:[%s215 + $0x37c] sm:$0xf]
      %v471 = vld [vmem:[%s215 + $0x380] sm:$0xf]
      %v472 = vld [vmem:[%s215 + $0x384] sm:$0xf]
      %v473 = vld [vmem:[%s215 + $0x388] sm:$0xf]
      %v474 = vld [vmem:[%s215 + $0x38c] sm:$0xf]
      %v475 = vld [vmem:[%s215 + $0x390] sm:$0xf]
      %v476 = vld [vmem:[%s215 + $0x394] sm:$0xf]
      %v477 = vld [vmem:[%s215 + $0x398] sm:$0xf]
      %v478 = vld [vmem:[%s215 + $0x39c] sm:$0xf]
      %v479 = vld [vmem:[%s215 + $0x3a0] sm:$0xf]
      %v480 = vld [vmem:[%s215 + $0x3a4] sm:$0xf]
      %v481 = vld [vmem:[%s215 + $0x3a8] sm:$0xf]
      %v482 = vld [vmem:[%s215 + $0x3ac] sm:$0xf]
      %v483 = vld [vmem:[%s215 + $0x3b0] sm:$0xf]
      %v484 = vld [vmem:[%s215 + $0x3b4] sm:$0xf]
      %v485 = vld [vmem:[%s215 + $0x3b8] sm:$0xf]
      %v486 = vld [vmem:[%s215 + $0x3bc] sm:$0xf]
      %v487 = vld [vmem:[%s215 + $0x3c0] sm:$0xf]
      %v488 = vld [vmem:[%s215 + $0x3c4] sm:$0xf]
      %v489 = vld [vmem:[%s215 + $0x3c8] sm:$0xf]
      %v490 = vld [vmem:[%s215 + $0x3cc] sm:$0xf]
      %v491 = vld [vmem:[%s215 + $0x3d0] sm:$0xf]
      %v492 = vld [vmem:[%s215 + $0x3d4] sm:$0xf]
      %v493 = vld [vmem:[%s215 + $0x3d8] sm:$0xf]
      %v494 = vld [vmem:[%s215 + $0x3dc] sm:$0xf]
      %v495 = vld [vmem:[%s215 + $0x3e0] sm:$0xf]
      %v496 = vld [vmem:[%s215 + $0x3e4] sm:$0xf]
      %v497 = vld [vmem:[%s215 + $0x3e8] sm:$0xf]
      %v498 = vld [vmem:[%s215 + $0x3ec] sm:$0xf]
      %v499 = vld [vmem:[%s215 + $0x3f0] sm:$0xf]
      %v500 = vld [vmem:[%s215 + $0x3f4] sm:$0xf]
      %v501 = vld [vmem:[%s215 + $0x3f8] sm:$0xf]
      %v502 = vld [vmem:[%s215 + $0x3fc] sm:$0xf]
      %v503 = vld [vmem:[%s215 + $0x400] sm:$0xf]
      %v504 = vld [vmem:[%s215 + $0x404] sm:$0xf]
      %v505 = vld [vmem:[%s215 + $0x408] sm:$0xf]
      %v506 = vld [vmem:[%s215 + $0x40c] sm:$0xf]
      %v507 = vld [vmem:[%s215 + $0x410] sm:$0xf]
      %v508 = vld [vmem:[%s215 + $0x414] sm:$0xf]
      %v509 = vld [vmem:[%s215 + $0x418] sm:$0xf]
      %v510 = vld [vmem:[%s215 + $0x41c] sm:$0xf]
      %v511 = vld [vmem:[%s215 + $0x420] sm:$0xf]
      %v512 = vld [vmem:[%s215 + $0x424] sm:$0xf]
      %v513 = vld [vmem:[%s215 + $0x428] sm:$0xf]
      %v514 = vld [vmem:[%s215 + $0x42c] sm:$0xf]
      %v515 = vld [vmem:[%s215 + $0x430] sm:$0xf]
      %v516 = vld [vmem:[%s215 + $0x434] sm:$0xf]
      %v517 = vld [vmem:[%s215 + $0x438] sm:$0xf]
      %v518 = vld [vmem:[%s215 + $0x43c] sm:$0xf]
      %v519 = vld [vmem:[%s215 + $0x440] sm:$0xf]
      %v520 = vld [vmem:[%s215 + $0x444] sm:$0xf]
      %v521 = vld [vmem:[%s215 + $0x448] sm:$0xf]
      %v522 = vld [vmem:[%s215 + $0x44c] sm:$0xf]
      %v523 = vld [vmem:[%s215 + $0x450] sm:$0xf]
      %v524 = vld [vmem:[%s215 + $0x454] sm:$0xf]
      %v525 = vld [vmem:[%s215 + $0x458] sm:$0xf]
      %v526 = vld [vmem:[%s215 + $0x45c] sm:$0xf]
      %v527 = vld [vmem:[%s215 + $0x460] sm:$0xf]
      %v528 = vld [vmem:[%s215 + $0x464] sm:$0xf]
      %v529 = vld [vmem:[%s215 + $0x468] sm:$0xf]
      %v530 = vld [vmem:[%s215 + $0x46c] sm:$0xf]
      %v531 = vld [vmem:[%s215 + $0x470] sm:$0xf]
      %v532 = vld [vmem:[%s215 + $0x474] sm:$0xf]
      %v533 = vld [vmem:[%s215 + $0x478] sm:$0xf]
      %v534 = vld [vmem:[%s215 + $0x47c] sm:$0xf]
      %v535 = vld [vmem:[%s218] sm:$0x1]
      %v537 = vlaneseq
      %v538 = vshrl.u32 %v537, 7
      %v539 = vsub.s32 0, %v538
      %v540 = vrot.slane %v535, %v539
      %v560 = vunpack.c.l.b16 %v229
      %v561 = vunpack.c.h.b16 %v229
      %v562 = vunpack.c.l.b16 %v230
      %v563 = vunpack.c.h.b16 %v230
      %v564 = vunpack.c.l.b16 %v231
      %v565 = vunpack.c.h.b16 %v231
      %v566 = vunpack.c.l.b16 %v232
      %v567 = vunpack.c.h.b16 %v232
      %v568 = vunpack.c.l.b16 %v233
      %v569 = vunpack.c.h.b16 %v233
      %v570 = vunpack.c.l.b16 %v234
      %v571 = vunpack.c.h.b16 %v234
      %v572 = vunpack.c.l.b16 %v235
      %v573 = vunpack.c.h.b16 %v235
      %v574 = vunpack.c.l.b16 %v236
      %v575 = vunpack.c.h.b16 %v236
      %v576 = vunpack.c.l.b16 %v237
      %v577 = vunpack.c.h.b16 %v237
      %v578 = vunpack.c.l.b16 %v238
      %v579 = vunpack.c.h.b16 %v238
      %v580 = vunpack.c.l.b16 %v239
      %v581 = vunpack.c.h.b16 %v239
      %v582 = vunpack.c.l.b16 %v240
      %v583 = vunpack.c.h.b16 %v240
      %v584 = vunpack.c.l.b16 %v241
      %v585 = vunpack.c.h.b16 %v241
      %v586 = vunpack.c.l.b16 %v242
      %v587 = vunpack.c.h.b16 %v242
      %v588 = vunpack.c.l.b16 %v243
      %v589 = vunpack.c.h.b16 %v243
      %v590 = vunpack.c.l.b16 %v244
      %v591 = vunpack.c.h.b16 %v244
      %v592 = vunpack.c.l.b16 %v245
      %v593 = vunpack.c.h.b16 %v245
      %v594 = vunpack.c.l.b16 %v246
      %v595 = vunpack.c.h.b16 %v246
      %v596 = vpack.c.b16 %v578, %v560
      %v597 = vpack.c.b16 %v579, %v561
      %v598 = vpack.c.b16 %v580, %v562
      %v599 = vpack.c.b16 %v581, %v563
      %v600 = vpack.c.b16 %v582, %v564
      %v601 = vpack.c.b16 %v583, %v565
      %v602 = vpack.c.b16 %v584, %v566
      %v603 = vpack.c.b16 %v585, %v567
      %v604 = vpack.c.b16 %v586, %v568
      %v605 = vpack.c.b16 %v587, %v569
      %v606 = vpack.c.b16 %v588, %v570
      %v607 = vpack.c.b16 %v589, %v571
      %v608 = vpack.c.b16 %v590, %v572
      %v609 = vpack.c.b16 %v591, %v573
      %v610 = vpack.c.b16 %v592, %v574
      %v611 = vpack.c.b16 %v593, %v575
      %v612 = vpack.c.b16 %v594, %v576
      %v613 = vpack.c.b16 %v595, %v577
      %v920 = vunpack.c.l.b16 %v247
      %v921 = vunpack.c.l.b16 %v248
      %v922 = vunpack.c.l.b16 %v249
      %v923 = vunpack.c.l.b16 %v250
      %v924 = vunpack.c.l.b16 %v251
      %v925 = vunpack.c.l.b16 %v252
      %v926 = vunpack.c.l.b16 %v253
      %v927 = vunpack.c.l.b16 %v254
      %v928 = vunpack.c.l.b16 %v255
      %v929 = vunpack.c.l.b16 %v256
      %v930 = vunpack.c.l.b16 %v257
      %v931 = vunpack.c.l.b16 %v258
      %v932 = vunpack.c.l.b16 %v259
      %v933 = vunpack.c.l.b16 %v260
      %v934 = vunpack.c.l.b16 %v261
      %v935 = vunpack.c.l.b16 %v262
      %v936 = vunpack.c.l.b16 %v263
      %v937 = vunpack.c.l.b16 %v264
      %v938 = vunpack.c.l.b16 %v265
      %v939 = vunpack.c.l.b16 %v266
      %v940 = vunpack.c.l.b16 %v267
      %v941 = vunpack.c.l.b16 %v268
      %v942 = vunpack.c.l.b16 %v269
      %v943 = vunpack.c.l.b16 %v270
      %v944 = vunpack.c.l.b16 %v271
      %v945 = vunpack.c.l.b16 %v272
      %v946 = vunpack.c.l.b16 %v273
      %v947 = vunpack.c.l.b16 %v274
      %v948 = vunpack.c.l.b16 %v275
      %v949 = vunpack.c.l.b16 %v276
      %v950 = vunpack.c.l.b16 %v277
      %v951 = vunpack.c.l.b16 %v278
      %v952 = vunpack.c.l.b16 %v279
      %v953 = vunpack.c.l.b16 %v280
      %v954 = vunpack.c.l.b16 %v281
      %v955 = vunpack.c.l.b16 %v282
      %v956 = vunpack.c.l.b16 %v283
      %v957 = vunpack.c.l.b16 %v284
      %v958 = vunpack.c.l.b16 %v285
      %v959 = vunpack.c.l.b16 %v286
      %v960 = vunpack.c.l.b16 %v287
      %v961 = vunpack.c.l.b16 %v288
      %v962 = vunpack.c.l.b16 %v289
      %v963 = vunpack.c.l.b16 %v290
      %v964 = vunpack.c.l.b16 %v291
      %v965 = vunpack.c.l.b16 %v292
      %v966 = vunpack.c.l.b16 %v293
      %v967 = vunpack.c.l.b16 %v294
      %v968 = vunpack.c.l.b16 %v295
      %v969 = vunpack.c.l.b16 %v296
      %v970 = vunpack.c.l.b16 %v297
      %v971 = vunpack.c.l.b16 %v298
      %v972 = vunpack.c.l.b16 %v299
      %v973 = vunpack.c.l.b16 %v300
      %v974 = vunpack.c.l.b16 %v301
      %v975 = vunpack.c.l.b16 %v302
      %v976 = vunpack.c.l.b16 %v303
      %v977 = vunpack.c.l.b16 %v304
      %v978 = vunpack.c.l.b16 %v305
      %v979 = vunpack.c.l.b16 %v306
      %v980 = vunpack.c.l.b16 %v307
      %v981 = vunpack.c.l.b16 %v308
      %v982 = vunpack.c.l.b16 %v309
      %v983 = vunpack.c.l.b16 %v310
      %v984 = vunpack.c.l.b16 %v311
      %v985 = vunpack.c.l.b16 %v312
      %v986 = vunpack.c.l.b16 %v313
      %v987 = vunpack.c.l.b16 %v314
      %v988 = vunpack.c.l.b16 %v315
      %v989 = vunpack.c.l.b16 %v316
      %v990 = vunpack.c.l.b16 %v317
      %v991 = vunpack.c.l.b16 %v318
      %v992 = vunpack.c.l.b16 %v319
      %v993 = vunpack.c.l.b16 %v320
      %v994 = vunpack.c.l.b16 %v321
      %v995 = vunpack.c.l.b16 %v322
      %v996 = vunpack.c.l.b16 %v323
      %v997 = vunpack.c.l.b16 %v324
      %v998 = vunpack.c.l.b16 %v325
      %v999 = vunpack.c.l.b16 %v326
      %v1000 = vunpack.c.l.b16 %v327
      %v1001 = vunpack.c.l.b16 %v328
      %v1002 = vunpack.c.l.b16 %v329
      %v1003 = vunpack.c.l.b16 %v330
      %v1004 = vunpack.c.l.b16 %v331
      %v1005 = vunpack.c.l.b16 %v332
      %v1006 = vunpack.c.l.b16 %v333
      %v1007 = vunpack.c.l.b16 %v334
      %v1008 = vunpack.c.l.b16 %v335
      %v1009 = vunpack.c.l.b16 %v336
      %v1010 = vunpack.c.l.b16 %v337
      %v1011 = vunpack.c.l.b16 %v338
      %v1012 = vunpack.c.l.b16 %v339
      %v1013 = vunpack.c.l.b16 %v340
      %v1014 = vunpack.c.l.b16 %v341
      %v1015 = vunpack.c.l.b16 %v342
      %v1016 = vunpack.c.l.b16 %v343
      %v1017 = vunpack.c.l.b16 %v344
      %v1018 = vunpack.c.l.b16 %v345
      %v1019 = vunpack.c.l.b16 %v346
      %v1020 = vunpack.c.l.b16 %v347
      %v1021 = vunpack.c.l.b16 %v348
      %v1022 = vunpack.c.l.b16 %v349
      %v1023 = vunpack.c.l.b16 %v350
      %v1024 = vunpack.c.l.b16 %v351
      %v1025 = vunpack.c.l.b16 %v352
      %v1026 = vunpack.c.l.b16 %v353
      %v1027 = vunpack.c.l.b16 %v354
      %v1028 = vunpack.c.l.b16 %v355
      %v1029 = vunpack.c.l.b16 %v356
      %v1030 = vunpack.c.l.b16 %v357
      %v1031 = vunpack.c.l.b16 %v358
      %v1032 = vunpack.c.l.b16 %v359
      %v1033 = vunpack.c.l.b16 %v360
      %v1034 = vunpack.c.l.b16 %v361
      %v1035 = vunpack.c.l.b16 %v362
      %v1036 = vunpack.c.l.b16 %v363
      %v1037 = vunpack.c.l.b16 %v364
      %v1038 = vunpack.c.l.b16 %v365
      %v1039 = vunpack.c.l.b16 %v366
      %v1040 = vunpack.c.l.b16 %v367
      %v1041 = vunpack.c.l.b16 %v368
      %v1042 = vunpack.c.l.b16 %v369
      %v1043 = vunpack.c.l.b16 %v370
      %v1044 = vunpack.c.l.b16 %v371
      %v1045 = vunpack.c.l.b16 %v372
      %v1046 = vunpack.c.l.b16 %v373
      %v1047 = vunpack.c.l.b16 %v374
      %v1048 = vunpack.c.l.b16 %v375
      %v1049 = vunpack.c.l.b16 %v376
      %v1050 = vunpack.c.l.b16 %v377
      %v1051 = vunpack.c.l.b16 %v378
      %v1052 = vunpack.c.l.b16 %v379
      %v1053 = vunpack.c.l.b16 %v380
      %v1054 = vunpack.c.l.b16 %v381
      %v1055 = vunpack.c.l.b16 %v382
      %v1056 = vunpack.c.l.b16 %v383
      %v1057 = vunpack.c.l.b16 %v384
      %v1058 = vunpack.c.l.b16 %v385
      %v1059 = vunpack.c.l.b16 %v386
      %v1060 = vunpack.c.l.b16 %v387
      %v1061 = vunpack.c.l.b16 %v388
      %v1062 = vunpack.c.l.b16 %v389
      %v1063 = vunpack.c.l.b16 %v390
      %v1064 = vunpack.c.l.b16 %v391
      %v1065 = vunpack.c.l.b16 %v392
      %v1066 = vunpack.c.l.b16 %v393
      %v1067 = vunpack.c.l.b16 %v394
      %v1068 = vunpack.c.l.b16 %v395
      %v1069 = vunpack.c.l.b16 %v396
      %v1070 = vunpack.c.l.b16 %v397
      %v1071 = vunpack.c.l.b16 %v398
      %v1072 = vunpack.c.l.b16 %v399
      %v1073 = vunpack.c.l.b16 %v400
      %v1074 = vunpack.c.l.b16 %v401
      %v1075 = vunpack.c.l.b16 %v402
      %v1076 = vunpack.c.l.b16 %v403
      %v1077 = vunpack.c.l.b16 %v404
      %v1078 = vunpack.c.l.b16 %v405
      %v1079 = vunpack.c.l.b16 %v406
      %v1080 = vunpack.c.l.b16 %v407
      %v1081 = vunpack.c.l.b16 %v408
      %v1082 = vunpack.c.l.b16 %v409
      %v1083 = vunpack.c.l.b16 %v410
      %v1084 = vunpack.c.l.b16 %v411
      %v1085 = vunpack.c.l.b16 %v412
      %v1086 = vunpack.c.l.b16 %v413
      %v1087 = vunpack.c.l.b16 %v414
      %v1088 = vunpack.c.l.b16 %v415
      %v1089 = vunpack.c.l.b16 %v416
      %v1090 = vunpack.c.l.b16 %v417
      %v1091 = vunpack.c.l.b16 %v418
      %v1092 = vunpack.c.l.b16 %v419
      %v1093 = vunpack.c.l.b16 %v420
      %v1094 = vunpack.c.l.b16 %v421
      %v1095 = vunpack.c.l.b16 %v422
      %v1096 = vunpack.c.l.b16 %v423
      %v1097 = vunpack.c.l.b16 %v424
      %v1098 = vunpack.c.l.b16 %v425
      %v1099 = vunpack.c.l.b16 %v426
      %v1100 = vunpack.c.l.b16 %v427
      %v1101 = vunpack.c.l.b16 %v428
      %v1102 = vunpack.c.l.b16 %v429
      %v1103 = vunpack.c.l.b16 %v430
      %v1104 = vunpack.c.l.b16 %v431
      %v1105 = vunpack.c.l.b16 %v432
      %v1106 = vunpack.c.l.b16 %v433
      %v1107 = vunpack.c.l.b16 %v434
      %v1108 = vunpack.c.l.b16 %v435
      %v1109 = vunpack.c.l.b16 %v436
      %v1110 = vunpack.c.l.b16 %v437
      %v1111 = vunpack.c.l.b16 %v438
      %v1112 = vunpack.c.l.b16 %v439
      %v1113 = vunpack.c.l.b16 %v440
      %v1114 = vunpack.c.l.b16 %v441
      %v1115 = vunpack.c.l.b16 %v442
      %v1116 = vunpack.c.l.b16 %v443
      %v1117 = vunpack.c.l.b16 %v444
      %v1118 = vunpack.c.l.b16 %v445
      %v1119 = vunpack.c.l.b16 %v446
      %v1120 = vunpack.c.l.b16 %v447
      %v1121 = vunpack.c.l.b16 %v448
      %v1122 = vunpack.c.l.b16 %v449
      %v1123 = vunpack.c.l.b16 %v450
      %v1124 = vunpack.c.l.b16 %v451
      %v1125 = vunpack.c.l.b16 %v452
      %v1126 = vunpack.c.l.b16 %v453
      %v1127 = vunpack.c.l.b16 %v454
      %v1128 = vunpack.c.l.b16 %v455
      %v1129 = vunpack.c.l.b16 %v456
      %v1130 = vunpack.c.l.b16 %v457
      %v1131 = vunpack.c.l.b16 %v458
      %v1132 = vunpack.c.l.b16 %v459
      %v1133 = vunpack.c.l.b16 %v460
      %v1134 = vunpack.c.l.b16 %v461
      %v1135 = vunpack.c.l.b16 %v462
      %v1136 = vunpack.c.l.b16 %v463
      %v1137 = vunpack.c.l.b16 %v464
      %v1138 = vunpack.c.l.b16 %v465
      %v1139 = vunpack.c.l.b16 %v466
      %v1140 = vunpack.c.l.b16 %v467
      %v1141 = vunpack.c.l.b16 %v468
      %v1142 = vunpack.c.l.b16 %v469
      %v1143 = vunpack.c.l.b16 %v470
      %v1144 = vunpack.c.l.b16 %v471
      %v1145 = vunpack.c.l.b16 %v472
      %v1146 = vunpack.c.l.b16 %v473
      %v1147 = vunpack.c.l.b16 %v474
      %v1148 = vunpack.c.l.b16 %v475
      %v1149 = vunpack.c.l.b16 %v476
      %v1150 = vunpack.c.l.b16 %v477
      %v1151 = vunpack.c.l.b16 %v478
      %v1152 = vunpack.c.l.b16 %v479
      %v1153 = vunpack.c.l.b16 %v480
      %v1154 = vunpack.c.l.b16 %v481
      %v1155 = vunpack.c.l.b16 %v482
      %v1156 = vunpack.c.l.b16 %v483
      %v1157 = vunpack.c.l.b16 %v484
      %v1158 = vunpack.c.l.b16 %v485
      %v1159 = vunpack.c.l.b16 %v486
      %v1160 = vunpack.c.l.b16 %v487
      %v1161 = vunpack.c.l.b16 %v488
      %v1162 = vunpack.c.l.b16 %v489
      %v1163 = vunpack.c.l.b16 %v490
      %v1164 = vunpack.c.l.b16 %v491
      %v1165 = vunpack.c.l.b16 %v492
      %v1166 = vunpack.c.l.b16 %v493
      %v1167 = vunpack.c.l.b16 %v494
      %v1168 = vunpack.c.l.b16 %v495
      %v1169 = vunpack.c.l.b16 %v496
      %v1170 = vunpack.c.l.b16 %v497
      %v1171 = vunpack.c.l.b16 %v498
      %v1172 = vunpack.c.l.b16 %v499
      %v1173 = vunpack.c.l.b16 %v500
      %v1174 = vunpack.c.l.b16 %v501
      %v1175 = vunpack.c.l.b16 %v502
      %v1176 = vunpack.c.l.b16 %v503
      %v1177 = vunpack.c.l.b16 %v504
      %v1178 = vunpack.c.l.b16 %v505
      %v1179 = vunpack.c.l.b16 %v506
      %v1180 = vunpack.c.l.b16 %v507
      %v1181 = vunpack.c.l.b16 %v508
      %v1182 = vunpack.c.l.b16 %v509
      %v1183 = vunpack.c.l.b16 %v510
      %v1184 = vunpack.c.l.b16 %v511
      %v1185 = vunpack.c.l.b16 %v512
      %v1186 = vunpack.c.l.b16 %v513
      %v1187 = vunpack.c.l.b16 %v514
      %v1188 = vunpack.c.l.b16 %v515
      %v1189 = vunpack.c.l.b16 %v516
      %v1190 = vunpack.c.l.b16 %v517
      %v1191 = vunpack.c.l.b16 %v518
      %v1192 = vunpack.c.l.b16 %v519
      %v1193 = vunpack.c.l.b16 %v520
      %v1194 = vunpack.c.l.b16 %v521
      %v1195 = vunpack.c.l.b16 %v522
      %v1196 = vunpack.c.l.b16 %v523
      %v1197 = vunpack.c.l.b16 %v524
      %v1198 = vunpack.c.l.b16 %v525
      %v1199 = vunpack.c.l.b16 %v526
      %v1200 = vunpack.c.l.b16 %v527
      %v1201 = vunpack.c.l.b16 %v528
      %v1202 = vunpack.c.l.b16 %v529
      %v1203 = vunpack.c.l.b16 %v530
      %v1204 = vunpack.c.l.b16 %v531
      %v1205 = vunpack.c.l.b16 %v532
      %v1206 = vunpack.c.l.b16 %v533
      %v1207 = vunpack.c.l.b16 %v534
      %v1208 = vpack.c.b16 %v921, %v920
      %v1209 = vpack.c.b16 %v923, %v922
      %v1210 = vpack.c.b16 %v925, %v924
      %v1211 = vpack.c.b16 %v927, %v926
      %v1212 = vpack.c.b16 %v929, %v928
      %v1213 = vpack.c.b16 %v931, %v930
      %v1214 = vpack.c.b16 %v933, %v932
      %v1215 = vpack.c.b16 %v935, %v934
      %v1216 = vpack.c.b16 %v937, %v936
      %v1217 = vpack.c.b16 %v939, %v938
      %v1218 = vpack.c.b16 %v941, %v940
      %v1219 = vpack.c.b16 %v943, %v942
      %v1220 = vpack.c.b16 %v945, %v944
      %v1221 = vpack.c.b16 %v947, %v946
      %v1222 = vpack.c.b16 %v949, %v948
      %v1223 = vpack.c.b16 %v951, %v950
      %v1224 = vpack.c.b16 %v953, %v952
      %v1225 = vpack.c.b16 %v955, %v954
      %v1226 = vpack.c.b16 %v957, %v956
      %v1227 = vpack.c.b16 %v959, %v958
      %v1228 = vpack.c.b16 %v961, %v960
      %v1229 = vpack.c.b16 %v963, %v962
      %v1230 = vpack.c.b16 %v965, %v964
      %v1231 = vpack.c.b16 %v967, %v966
      %v1232 = vpack.c.b16 %v969, %v968
      %v1233 = vpack.c.b16 %v971, %v970
      %v1234 = vpack.c.b16 %v973, %v972
      %v1235 = vpack.c.b16 %v975, %v974
      %v1236 = vpack.c.b16 %v977, %v976
      %v1237 = vpack.c.b16 %v979, %v978
      %v1238 = vpack.c.b16 %v981, %v980
      %v1239 = vpack.c.b16 %v983, %v982
      %v1240 = vpack.c.b16 %v985, %v984
      %v1241 = vpack.c.b16 %v987, %v986
      %v1242 = vpack.c.b16 %v989, %v988
      %v1243 = vpack.c.b16 %v991, %v990
      %v1244 = vpack.c.b16 %v993, %v992
      %v1245 = vpack.c.b16 %v995, %v994
      %v1246 = vpack.c.b16 %v997, %v996
      %v1247 = vpack.c.b16 %v999, %v998
      %v1248 = vpack.c.b16 %v1001, %v1000
      %v1249 = vpack.c.b16 %v1003, %v1002
      %v1250 = vpack.c.b16 %v1005, %v1004
      %v1251 = vpack.c.b16 %v1007, %v1006
      %v1252 = vpack.c.b16 %v1009, %v1008
      %v1253 = vpack.c.b16 %v1011, %v1010
      %v1254 = vpack.c.b16 %v1013, %v1012
      %v1255 = vpack.c.b16 %v1015, %v1014
      %v1256 = vpack.c.b16 %v1017, %v1016
      %v1257 = vpack.c.b16 %v1019, %v1018
      %v1258 = vpack.c.b16 %v1021, %v1020
      %v1259 = vpack.c.b16 %v1023, %v1022
      %v1260 = vpack.c.b16 %v1025, %v1024
      %v1261 = vpack.c.b16 %v1027, %v1026
      %v1262 = vpack.c.b16 %v1029, %v1028
      %v1263 = vpack.c.b16 %v1031, %v1030
      %v1264 = vpack.c.b16 %v1033, %v1032
      %v1265 = vpack.c.b16 %v1035, %v1034
      %v1266 = vpack.c.b16 %v1037, %v1036
      %v1267 = vpack.c.b16 %v1039, %v1038
      %v1268 = vpack.c.b16 %v1041, %v1040
      %v1269 = vpack.c.b16 %v1043, %v1042
      %v1270 = vpack.c.b16 %v1045, %v1044
      %v1271 = vpack.c.b16 %v1047, %v1046
      %v1272 = vpack.c.b16 %v1049, %v1048
      %v1273 = vpack.c.b16 %v1051, %v1050
      %v1274 = vpack.c.b16 %v1053, %v1052
      %v1275 = vpack.c.b16 %v1055, %v1054
      %v1276 = vpack.c.b16 %v1057, %v1056
      %v1277 = vpack.c.b16 %v1059, %v1058
      %v1278 = vpack.c.b16 %v1061, %v1060
      %v1279 = vpack.c.b16 %v1063, %v1062
      %v1280 = vpack.c.b16 %v1065, %v1064
      %v1281 = vpack.c.b16 %v1067, %v1066
      %v1282 = vpack.c.b16 %v1069, %v1068
      %v1283 = vpack.c.b16 %v1071, %v1070
      %v1284 = vpack.c.b16 %v1073, %v1072
      %v1285 = vpack.c.b16 %v1075, %v1074
      %v1286 = vpack.c.b16 %v1077, %v1076
      %v1287 = vpack.c.b16 %v1079, %v1078
      %v1288 = vpack.c.b16 %v1081, %v1080
      %v1289 = vpack.c.b16 %v1083, %v1082
      %v1290 = vpack.c.b16 %v1085, %v1084
      %v1291 = vpack.c.b16 %v1087, %v1086
      %v1292 = vpack.c.b16 %v1089, %v1088
      %v1293 = vpack.c.b16 %v1091, %v1090
      %v1294 = vpack.c.b16 %v1093, %v1092
      %v1295 = vpack.c.b16 %v1095, %v1094
      %v1296 = vpack.c.b16 %v1097, %v1096
      %v1297 = vpack.c.b16 %v1099, %v1098
      %v1298 = vpack.c.b16 %v1101, %v1100
      %v1299 = vpack.c.b16 %v1103, %v1102
      %v1300 = vpack.c.b16 %v1105, %v1104
      %v1301 = vpack.c.b16 %v1107, %v1106
      %v1302 = vpack.c.b16 %v1109, %v1108
      %v1303 = vpack.c.b16 %v1111, %v1110
      %v1304 = vpack.c.b16 %v1113, %v1112
      %v1305 = vpack.c.b16 %v1115, %v1114
      %v1306 = vpack.c.b16 %v1117, %v1116
      %v1307 = vpack.c.b16 %v1119, %v1118
      %v1308 = vpack.c.b16 %v1121, %v1120
      %v1309 = vpack.c.b16 %v1123, %v1122
      %v1310 = vpack.c.b16 %v1125, %v1124
      %v1311 = vpack.c.b16 %v1127, %v1126
      %v1312 = vpack.c.b16 %v1129, %v1128
      %v1313 = vpack.c.b16 %v1131, %v1130
      %v1314 = vpack.c.b16 %v1133, %v1132
      %v1315 = vpack.c.b16 %v1135, %v1134
      %v1316 = vpack.c.b16 %v1137, %v1136
      %v1317 = vpack.c.b16 %v1139, %v1138
      %v1318 = vpack.c.b16 %v1141, %v1140
      %v1319 = vpack.c.b16 %v1143, %v1142
      %v1320 = vpack.c.b16 %v1145, %v1144
      %v1321 = vpack.c.b16 %v1147, %v1146
      %v1322 = vpack.c.b16 %v1149, %v1148
      %v1323 = vpack.c.b16 %v1151, %v1150
      %v1324 = vpack.c.b16 %v1153, %v1152
      %v1325 = vpack.c.b16 %v1155, %v1154
      %v1326 = vpack.c.b16 %v1157, %v1156
      %v1327 = vpack.c.b16 %v1159, %v1158
      %v1328 = vpack.c.b16 %v1161, %v1160
      %v1329 = vpack.c.b16 %v1163, %v1162
      %v1330 = vpack.c.b16 %v1165, %v1164
      %v1331 = vpack.c.b16 %v1167, %v1166
      %v1332 = vpack.c.b16 %v1169, %v1168
      %v1333 = vpack.c.b16 %v1171, %v1170
      %v1334 = vpack.c.b16 %v1173, %v1172
      %v1335 = vpack.c.b16 %v1175, %v1174
      %v1336 = vpack.c.b16 %v1177, %v1176
      %v1337 = vpack.c.b16 %v1179, %v1178
      %v1338 = vpack.c.b16 %v1181, %v1180
      %v1339 = vpack.c.b16 %v1183, %v1182
      %v1340 = vpack.c.b16 %v1185, %v1184
      %v1341 = vpack.c.b16 %v1187, %v1186
      %v1342 = vpack.c.b16 %v1189, %v1188
      %v1343 = vpack.c.b16 %v1191, %v1190
      %v1344 = vpack.c.b16 %v1193, %v1192
      %v1345 = vpack.c.b16 %v1195, %v1194
      %v1346 = vpack.c.b16 %v1197, %v1196
      %v1347 = vpack.c.b16 %v1199, %v1198
      %v1348 = vpack.c.b16 %v1201, %v1200
      %v1349 = vpack.c.b16 %v1203, %v1202
      %v1350 = vpack.c.b16 %v1205, %v1204
      %v1351 = vpack.c.b16 %v1207, %v1206
      %1496 = vmatprep.subr.bf16.mxu0 0
      %1497 = vmatpush1.bf16.msra.mxu0 %v1215
      %1498 = vmatprep.subr.bf16.mxu0 0
      %1499 = vmatpush1.bf16.msra.mxu0 %v1214
      %1500 = vmatprep.subr.bf16.mxu0 0
      %1501 = vmatpush1.bf16.msra.mxu0 %v1213
      %1502 = vmatprep.subr.bf16.mxu0 0
      %1503 = vmatpush1.bf16.msra.mxu0 %v1212
      %1504 = vmatprep.subr.bf16.mxu0 0
      %1505 = vmatpush1.bf16.msra.mxu0 %v1211
      %1506 = vmatprep.subr.bf16.mxu0 0
      %1507 = vmatpush1.bf16.msra.mxu0 %v1210
      %1508 = vmatprep.subr.bf16.mxu0 0
      %1509 = vmatpush1.bf16.msra.mxu0 %v1209
      %1510 = vmatprep.subr.bf16.mxu0 0
      %1511 = vmatpush1.bf16.msra.mxu0 %v1208
      %1512 = vmatprep.subr.bf16.mxu0 0
      %1513 = vmatpush2.bf16.msra.mxu0 %v1223
      %1514 = vmatprep.subr.bf16.mxu0 0
      %1515 = vmatpush2.bf16.msra.mxu0 %v1222
      %1516 = vmatprep.subr.bf16.mxu0 0
      %1517 = vmatpush2.bf16.msra.mxu0 %v1221
      %1518 = vmatprep.subr.bf16.mxu0 0
      %1519 = vmatpush2.bf16.msra.mxu0 %v1220
      %1520 = vmatprep.subr.bf16.mxu0 0
      %1521 = vmatpush2.bf16.msra.mxu0 %v1219
      %1522 = vmatprep.subr.bf16.mxu0 0
      %1523 = vmatpush2.bf16.msra.mxu0 %v1218
      %1524 = vmatprep.subr.bf16.mxu0 0
      %1525 = vmatpush2.bf16.msra.mxu0 %v1217
      %1526 = vmatprep.subr.bf16.mxu0 0
      %1527 = vmatpush2.bf16.msra.mxu0 %v1216
      %1528 = vmatprep.mubr.bf16.mxu0 %v597
      %1529 = vmatmul.mubr.bf16.gmra.mxu0 %v596
      %v1530 = vpop.f32.mrf.mxu0
      %v1531 = vadd.f32 %v540, %v1530
      %v1532 = vpop.f32.mrf.mxu0
      %v1533 = vpop.f32.mrf.mxu0
      %v1534 = vadd.f32 %v540, %v1533
      %v1535 = vpop.f32.mrf.mxu0
      %1536 = vdwg.mxu0
      %1537 = vmatprep.subr.bf16.mxu0 0
      %1538 = vmatpush1.bf16.msra.mxu0 %v1231
      %1539 = vmatprep.subr.bf16.mxu0 0
      %1540 = vmatpush1.bf16.msra.mxu0 %v1230
      %1541 = vmatprep.subr.bf16.mxu0 0
      %1542 = vmatpush1.bf16.msra.mxu0 %v1229
      %1543 = vmatprep.subr.bf16.mxu0 0
      %1544 = vmatpush1.bf16.msra.mxu0 %v1228
      %1545 = vmatprep.subr.bf16.mxu0 0
      %1546 = vmatpush1.bf16.msra.mxu0 %v1227
      %1547 = vmatprep.subr.bf16.mxu0 0
      %1548 = vmatpush1.bf16.msra.mxu0 %v1226
      %1549 = vmatprep.subr.bf16.mxu0 0
      %1550 = vmatpush1.bf16.msra.mxu0 %v1225
      %1551 = vmatprep.subr.bf16.mxu0 0
      %1552 = vmatpush1.bf16.msra.mxu0 %v1224
      %1553 = vmatprep.subr.bf16.mxu0 0
      %1554 = vmatpush2.bf16.msra.mxu0 %v1239
      %1555 = vmatprep.subr.bf16.mxu0 0
      %1556 = vmatpush2.bf16.msra.mxu0 %v1238
      %1557 = vmatprep.subr.bf16.mxu0 0
      %1558 = vmatpush2.bf16.msra.mxu0 %v1237
      %1559 = vmatprep.subr.bf16.mxu0 0
      %1560 = vmatpush2.bf16.msra.mxu0 %v1236
      %1561 = vmatprep.subr.bf16.mxu0 0
      %1562 = vmatpush2.bf16.msra.mxu0 %v1235
      %1563 = vmatprep.subr.bf16.mxu0 0
      %1564 = vmatpush2.bf16.msra.mxu0 %v1234
      %1565 = vmatprep.subr.bf16.mxu0 0
      %1566 = vmatpush2.bf16.msra.mxu0 %v1233
      %1567 = vmatprep.subr.bf16.mxu0 0
      %1568 = vmatpush2.bf16.msra.mxu0 %v1232
      %1569 = vmatprep.mubr.bf16.mxu0 %v599
      %1570 = vmatmul.mubr.bf16.gmra.mxu0 %v598
      %v1571 = vpop.f32.mrf.mxu0
      %v1572 = vadd.f32 %v1531, %v1571
      %v1573 = vpop.f32.mrf.mxu0
      %v1574 = vpop.f32.mrf.mxu0
      %v1575 = vadd.f32 %v1534, %v1574
      %v1576 = vpop.f32.mrf.mxu0
      %1577 = vdwg.mxu0
      %1578 = vmatprep.subr.bf16.mxu0 0
      %1579 = vmatpush1.bf16.msra.mxu0 %v1247
      %1580 = vmatprep.subr.bf16.mxu0 0
      %1581 = vmatpush1.bf16.msra.mxu0 %v1246
      %1582 = vmatprep.subr.bf16.mxu0 0
      %1583 = vmatpush1.bf16.msra.mxu0 %v1245
      %1584 = vmatprep.subr.bf16.mxu0 0
      %1585 = vmatpush1.bf16.msra.mxu0 %v1244
      %1586 = vmatprep.subr.bf16.mxu0 0
      %1587 = vmatpush1.bf16.msra.mxu0 %v1243
      %1588 = vmatprep.subr.bf16.mxu0 0
      %1589 = vmatpush1.bf16.msra.mxu0 %v1242
      %1590 = vmatprep.subr.bf16.mxu0 0
      %1591 = vmatpush1.bf16.msra.mxu0 %v1241
      %1592 = vmatprep.subr.bf16.mxu0 0
      %1593 = vmatpush1.bf16.msra.mxu0 %v1240
      %1594 = vmatprep.subr.bf16.mxu0 0
      %1595 = vmatpush2.bf16.msra.mxu0 %v1255
      %1596 = vmatprep.subr.bf16.mxu0 0
      %1597 = vmatpush2.bf16.msra.mxu0 %v1254
      %1598 = vmatprep.subr.bf16.mxu0 0
      %1599 = vmatpush2.bf16.msra.mxu0 %v1253
      %1600 = vmatprep.subr.bf16.mxu0 0
      %1601 = vmatpush2.bf16.msra.mxu0 %v1252
      %1602 = vmatprep.subr.bf16.mxu0 0
      %1603 = vmatpush2.bf16.msra.mxu0 %v1251
      %1604 = vmatprep.subr.bf16.mxu0 0
      %1605 = vmatpush2.bf16.msra.mxu0 %v1250
      %1606 = vmatprep.subr.bf16.mxu0 0
      %1607 = vmatpush2.bf16.msra.mxu0 %v1249
      %1608 = vmatprep.subr.bf16.mxu0 0
      %1609 = vmatpush2.bf16.msra.mxu0 %v1248
      %1610 = vmatprep.mubr.bf16.mxu0 %v601
      %1611 = vmatmul.mubr.bf16.gmra.mxu0 %v600
      %v1612 = vpop.f32.mrf.mxu0
      %v1613 = vadd.f32 %v1572, %v1612
      %v1614 = vpop.f32.mrf.mxu0
      %v1615 = vpop.f32.mrf.mxu0
      %v1616 = vadd.f32 %v1575, %v1615
      %v1617 = vpop.f32.mrf.mxu0
      %1618 = vdwg.mxu0
      %1619 = vmatprep.subr.bf16.mxu0 0
      %1620 = vmatpush1.bf16.msra.mxu0 %v1263
      %1621 = vmatprep.subr.bf16.mxu0 0
      %1622 = vmatpush1.bf16.msra.mxu0 %v1262
      %1623 = vmatprep.subr.bf16.mxu0 0
      %1624 = vmatpush1.bf16.msra.mxu0 %v1261
      %1625 = vmatprep.subr.bf16.mxu0 0
      %1626 = vmatpush1.bf16.msra.mxu0 %v1260
      %1627 = vmatprep.subr.bf16.mxu0 0
      %1628 = vmatpush1.bf16.msra.mxu0 %v1259
      %1629 = vmatprep.subr.bf16.mxu0 0
      %1630 = vmatpush1.bf16.msra.mxu0 %v1258
      %1631 = vmatprep.subr.bf16.mxu0 0
      %1632 = vmatpush1.bf16.msra.mxu0 %v1257
      %1633 = vmatprep.subr.bf16.mxu0 0
      %1634 = vmatpush1.bf16.msra.mxu0 %v1256
      %1635 = vmatprep.subr.bf16.mxu0 0
      %1636 = vmatpush2.bf16.msra.mxu0 %v1271
      %1637 = vmatprep.subr.bf16.mxu0 0
      %1638 = vmatpush2.bf16.msra.mxu0 %v1270
      %1639 = vmatprep.subr.bf16.mxu0 0
      %1640 = vmatpush2.bf16.msra.mxu0 %v1269
      %1641 = vmatprep.subr.bf16.mxu0 0
      %1642 = vmatpush2.bf16.msra.mxu0 %v1268
      %1643 = vmatprep.subr.bf16.mxu0 0
      %1644 = vmatpush2.bf16.msra.mxu0 %v1267
      %1645 = vmatprep.subr.bf16.mxu0 0
      %1646 = vmatpush2.bf16.msra.mxu0 %v1266
      %1647 = vmatprep.subr.bf16.mxu0 0
      %1648 = vmatpush2.bf16.msra.mxu0 %v1265
      %1649 = vmatprep.subr.bf16.mxu0 0
      %1650 = vmatpush2.bf16.msra.mxu0 %v1264
      %1651 = vmatprep.mubr.bf16.mxu0 %v603
      %1652 = vmatmul.mubr.bf16.gmra.mxu0 %v602
      %v1653 = vpop.f32.mrf.mxu0
      %v1654 = vadd.f32 %v1613, %v1653
      %v1655 = vpop.f32.mrf.mxu0
      %v1656 = vpop.f32.mrf.mxu0
      %v1657 = vadd.f32 %v1616, %v1656
      %v1658 = vpop.f32.mrf.mxu0
      %1659 = vdwg.mxu0
      %1660 = vmatprep.subr.bf16.mxu0 0
      %1661 = vmatpush1.bf16.msra.mxu0 %v1279
      %1662 = vmatprep.subr.bf16.mxu0 0
      %1663 = vmatpush1.bf16.msra.mxu0 %v1278
      %1664 = vmatprep.subr.bf16.mxu0 0
      %1665 = vmatpush1.bf16.msra.mxu0 %v1277
      %1666 = vmatprep.subr.bf16.mxu0 0
      %1667 = vmatpush1.bf16.msra.mxu0 %v1276
      %1668 = vmatprep.subr.bf16.mxu0 0
      %1669 = vmatpush1.bf16.msra.mxu0 %v1275
      %1670 = vmatprep.subr.bf16.mxu0 0
      %1671 = vmatpush1.bf16.msra.mxu0 %v1274
      %1672 = vmatprep.subr.bf16.mxu0 0
      %1673 = vmatpush1.bf16.msra.mxu0 %v1273
      %1674 = vmatprep.subr.bf16.mxu0 0
      %1675 = vmatpush1.bf16.msra.mxu0 %v1272
      %1676 = vmatprep.subr.bf16.mxu0 0
      %1677 = vmatpush2.bf16.msra.mxu0 %v1287
      %1678 = vmatprep.subr.bf16.mxu0 0
      %1679 = vmatpush2.bf16.msra.mxu0 %v1286
      %1680 = vmatprep.subr.bf16.mxu0 0
      %1681 = vmatpush2.bf16.msra.mxu0 %v1285
      %1682 = vmatprep.subr.bf16.mxu0 0
      %1683 = vmatpush2.bf16.msra.mxu0 %v1284
      %1684 = vmatprep.subr.bf16.mxu0 0
      %1685 = vmatpush2.bf16.msra.mxu0 %v1283
      %1686 = vmatprep.subr.bf16.mxu0 0
      %1687 = vmatpush2.bf16.msra.mxu0 %v1282
      %1688 = vmatprep.subr.bf16.mxu0 0
      %1689 = vmatpush2.bf16.msra.mxu0 %v1281
      %1690 = vmatprep.subr.bf16.mxu0 0
      %1691 = vmatpush2.bf16.msra.mxu0 %v1280
      %1692 = vmatprep.mubr.bf16.mxu0 %v605
      %1693 = vmatmul.mubr.bf16.gmra.mxu0 %v604
      %v1694 = vpop.f32.mrf.mxu0
      %v1695 = vadd.f32 %v1654, %v1694
      %v1696 = vpop.f32.mrf.mxu0
      %v1697 = vpop.f32.mrf.mxu0
      %v1698 = vadd.f32 %v1657, %v1697
      %v1699 = vpop.f32.mrf.mxu0
      %1700 = vdwg.mxu0
      %1701 = vmatprep.subr.bf16.mxu0 0
      %1702 = vmatpush1.bf16.msra.mxu0 %v1295
      %1703 = vmatprep.subr.bf16.mxu0 0
      %1704 = vmatpush1.bf16.msra.mxu0 %v1294
      %1705 = vmatprep.subr.bf16.mxu0 0
      %1706 = vmatpush1.bf16.msra.mxu0 %v1293
      %1707 = vmatprep.subr.bf16.mxu0 0
      %1708 = vmatpush1.bf16.msra.mxu0 %v1292
      %1709 = vmatprep.subr.bf16.mxu0 0
      %1710 = vmatpush1.bf16.msra.mxu0 %v1291
      %1711 = vmatprep.subr.bf16.mxu0 0
      %1712 = vmatpush1.bf16.msra.mxu0 %v1290
      %1713 = vmatprep.subr.bf16.mxu0 0
      %1714 = vmatpush1.bf16.msra.mxu0 %v1289
      %1715 = vmatprep.subr.bf16.mxu0 0
      %1716 = vmatpush1.bf16.msra.mxu0 %v1288
      %1717 = vmatprep.subr.bf16.mxu0 0
      %1718 = vmatpush2.bf16.msra.mxu0 %v1303
      %1719 = vmatprep.subr.bf16.mxu0 0
      %1720 = vmatpush2.bf16.msra.mxu0 %v1302
      %1721 = vmatprep.subr.bf16.mxu0 0
      %1722 = vmatpush2.bf16.msra.mxu0 %v1301
      %1723 = vmatprep.subr.bf16.mxu0 0
      %1724 = vmatpush2.bf16.msra.mxu0 %v1300
      %1725 = vmatprep.subr.bf16.mxu0 0
      %1726 = vmatpush2.bf16.msra.mxu0 %v1299
      %1727 = vmatprep.subr.bf16.mxu0 0
      %1728 = vmatpush2.bf16.msra.mxu0 %v1298
      %1729 = vmatprep.subr.bf16.mxu0 0
      %1730 = vmatpush2.bf16.msra.mxu0 %v1297
      %1731 = vmatprep.subr.bf16.mxu0 0
      %1732 = vmatpush2.bf16.msra.mxu0 %v1296
      %1733 = vmatprep.mubr.bf16.mxu0 %v607
      %1734 = vmatmul.mubr.bf16.gmra.mxu0 %v606
      %v1735 = vpop.f32.mrf.mxu0
      %v1736 = vadd.f32 %v1695, %v1735
      %v1737 = vpop.f32.mrf.mxu0
      %v1738 = vpop.f32.mrf.mxu0
      %v1739 = vadd.f32 %v1698, %v1738
      %v1740 = vpop.f32.mrf.mxu0
      %1741 = vdwg.mxu0
      %1742 = vmatprep.subr.bf16.mxu0 0
      %1743 = vmatpush1.bf16.msra.mxu0 %v1311
      %1744 = vmatprep.subr.bf16.mxu0 0
      %1745 = vmatpush1.bf16.msra.mxu0 %v1310
      %1746 = vmatprep.subr.bf16.mxu0 0
      %1747 = vmatpush1.bf16.msra.mxu0 %v1309
      %1748 = vmatprep.subr.bf16.mxu0 0
      %1749 = vmatpush1.bf16.msra.mxu0 %v1308
      %1750 = vmatprep.subr.bf16.mxu0 0
      %1751 = vmatpush1.bf16.msra.mxu0 %v1307
      %1752 = vmatprep.subr.bf16.mxu0 0
      %1753 = vmatpush1.bf16.msra.mxu0 %v1306
      %1754 = vmatprep.subr.bf16.mxu0 0
      %1755 = vmatpush1.bf16.msra.mxu0 %v1305
      %1756 = vmatprep.subr.bf16.mxu0 0
      %1757 = vmatpush1.bf16.msra.mxu0 %v1304
      %1758 = vmatprep.subr.bf16.mxu0 0
      %1759 = vmatpush2.bf16.msra.mxu0 %v1319
      %1760 = vmatprep.subr.bf16.mxu0 0
      %1761 = vmatpush2.bf16.msra.mxu0 %v1318
      %1762 = vmatprep.subr.bf16.mxu0 0
      %1763 = vmatpush2.bf16.msra.mxu0 %v1317
      %1764 = vmatprep.subr.bf16.mxu0 0
      %1765 = vmatpush2.bf16.msra.mxu0 %v1316
      %1766 = vmatprep.subr.bf16.mxu0 0
      %1767 = vmatpush2.bf16.msra.mxu0 %v1315
      %1768 = vmatprep.subr.bf16.mxu0 0
      %1769 = vmatpush2.bf16.msra.mxu0 %v1314
      %1770 = vmatprep.subr.bf16.mxu0 0
      %1771 = vmatpush2.bf16.msra.mxu0 %v1313
      %1772 = vmatprep.subr.bf16.mxu0 0
      %1773 = vmatpush2.bf16.msra.mxu0 %v1312
      %1774 = vmatprep.mubr.bf16.mxu0 %v609
      %1775 = vmatmul.mubr.bf16.gmra.mxu0 %v608
      %v1776 = vpop.f32.mrf.mxu0
      %v1777 = vadd.f32 %v1736, %v1776
      %v1778 = vpop.f32.mrf.mxu0
      %v1779 = vpop.f32.mrf.mxu0
      %v1780 = vadd.f32 %v1739, %v1779
      %v1781 = vpop.f32.mrf.mxu0
      %1782 = vdwg.mxu0
      %1783 = vmatprep.subr.bf16.mxu0 0
      %1784 = vmatpush1.bf16.msra.mxu0 %v1327
      %1785 = vmatprep.subr.bf16.mxu0 0
      %1786 = vmatpush1.bf16.msra.mxu0 %v1326
      %1787 = vmatprep.subr.bf16.mxu0 0
      %1788 = vmatpush1.bf16.msra.mxu0 %v1325
      %1789 = vmatprep.subr.bf16.mxu0 0
      %1790 = vmatpush1.bf16.msra.mxu0 %v1324
      %1791 = vmatprep.subr.bf16.mxu0 0
      %1792 = vmatpush1.bf16.msra.mxu0 %v1323
      %1793 = vmatprep.subr.bf16.mxu0 0
      %1794 = vmatpush1.bf16.msra.mxu0 %v1322
      %1795 = vmatprep.subr.bf16.mxu0 0
      %1796 = vmatpush1.bf16.msra.mxu0 %v1321
      %1797 = vmatprep.subr.bf16.mxu0 0
      %1798 = vmatpush1.bf16.msra.mxu0 %v1320
      %1799 = vmatprep.subr.bf16.mxu0 0
      %1800 = vmatpush2.bf16.msra.mxu0 %v1335
      %1801 = vmatprep.subr.bf16.mxu0 0
      %1802 = vmatpush2.bf16.msra.mxu0 %v1334
      %1803 = vmatprep.subr.bf16.mxu0 0
      %1804 = vmatpush2.bf16.msra.mxu0 %v1333
      %1805 = vmatprep.subr.bf16.mxu0 0
      %1806 = vmatpush2.bf16.msra.mxu0 %v1332
      %1807 = vmatprep.subr.bf16.mxu0 0
      %1808 = vmatpush2.bf16.msra.mxu0 %v1331
      %1809 = vmatprep.subr.bf16.mxu0 0
      %1810 = vmatpush2.bf16.msra.mxu0 %v1330
      %1811 = vmatprep.subr.bf16.mxu0 0
      %1812 = vmatpush2.bf16.msra.mxu0 %v1329
      %1813 = vmatprep.subr.bf16.mxu0 0
      %1814 = vmatpush2.bf16.msra.mxu0 %v1328
      %1815 = vmatprep.mubr.bf16.mxu0 %v611
      %1816 = vmatmul.mubr.bf16.gmra.mxu0 %v610
      %v1817 = vpop.f32.mrf.mxu0
      %v1818 = vadd.f32 %v1777, %v1817
      %v1819 = vpop.f32.mrf.mxu0
      %v1820 = vpop.f32.mrf.mxu0
      %v1821 = vadd.f32 %v1780, %v1820
      %v1822 = vpop.f32.mrf.mxu0
      %1823 = vdwg.mxu0
      %1824 = vmatprep.subr.bf16.mxu0 0
      %1825 = vmatpush1.bf16.msra.mxu0 %v1343
      %1826 = vmatprep.subr.bf16.mxu0 0
      %1827 = vmatpush1.bf16.msra.mxu0 %v1342
      %1828 = vmatprep.subr.bf16.mxu0 0
      %1829 = vmatpush1.bf16.msra.mxu0 %v1341
      %1830 = vmatprep.subr.bf16.mxu0 0
      %1831 = vmatpush1.bf16.msra.mxu0 %v1340
      %1832 = vmatprep.subr.bf16.mxu0 0
      %1833 = vmatpush1.bf16.msra.mxu0 %v1339
      %1834 = vmatprep.subr.bf16.mxu0 0
      %1835 = vmatpush1.bf16.msra.mxu0 %v1338
      %1836 = vmatprep.subr.bf16.mxu0 0
      %1837 = vmatpush1.bf16.msra.mxu0 %v1337
      %1838 = vmatprep.subr.bf16.mxu0 0
      %1839 = vmatpush1.bf16.msra.mxu0 %v1336
      %1840 = vmatprep.subr.bf16.mxu0 0
      %1841 = vmatpush2.bf16.msra.mxu0 %v1351
      %1842 = vmatprep.subr.bf16.mxu0 0
      %1843 = vmatpush2.bf16.msra.mxu0 %v1350
      %1844 = vmatprep.subr.bf16.mxu0 0
      %1845 = vmatpush2.bf16.msra.mxu0 %v1349
      %1846 = vmatprep.subr.bf16.mxu0 0
      %1847 = vmatpush2.bf16.msra.mxu0 %v1348
      %1848 = vmatprep.subr.bf16.mxu0 0
      %1849 = vmatpush2.bf16.msra.mxu0 %v1347
      %1850 = vmatprep.subr.bf16.mxu0 0
      %1851 = vmatpush2.bf16.msra.mxu0 %v1346
      %1852 = vmatprep.subr.bf16.mxu0 0
      %1853 = vmatpush2.bf16.msra.mxu0 %v1345
      %1854 = vmatprep.subr.bf16.mxu0 0
      %1855 = vmatpush2.bf16.msra.mxu0 %v1344
      %1856 = vmatprep.mubr.bf16.mxu0 %v613
      %1857 = vmatmul.mubr.bf16.gmra.mxu0 %v612
      %v1858 = vpop.f32.mrf.mxu0
      %v1859 = vadd.f32 %v1818, %v1858
      %v1860 = vpop.f32.mrf.mxu0
      %v1861 = vpop.f32.mrf.mxu0
      %v1862 = vadd.f32 %v1821, %v1861
      %v1863 = vpop.f32.mrf.mxu0
      %1864 = vdwg.mxu0
      %1865 = vst [vmem:[%s226] sm:$0xff] %v1859
      %1866 = vst [vmem:[%s226 + $0x8] sm:$0xff] %v1862
      %s1867 = smul.u32 2, %s18
      %p1868 = scmp.lt.s32.totalorder %s1867, 3
      %s1869 = scalar_select %p1868, %s1867, 3
      %p1870 = scmp.lt.s32.totalorder %s19, 0
      %s1871 = scalar_select %p1870, %s19, 0
      %s1872 = sadd.s32 %s1871, %s1869
      %s1873 = smul.addr %s1872, 8
      %s1874 = scalar_lea.vmem %s3, %s1873
      // Predicated region
      $region33: #{net_forward.28} parent=31 // pred_check
        %p1875 = pneg %p124
      $region34: #{net_forward.28} parent=31 // pred_check_branch
        %1877 = sbr.rel (%p1875) target = $region36
      $region35: #{net_forward.28} parent=31 // pred_region
        %s1878 = smul.u32 2, %s18
      $region36: #{net_forward.28} parent=31 // pred_fallthru
        _
    $region32: #{net_forward.28} parent=5 // pred_fallthru
      _
    %p1879 = scmp.le.s32.totalorder 2, %s9
    // Predicated region
    $region37: #{net_forward.28} parent=5 // pred_check
      %p1880 = pneg %p1879
    $region38: #{net_forward.28} parent=5 // pred_check_branch
      %1882 = sbr.rel (%p1880) target = $region40
    $region39: #{net_forward.28} parent=5 // pred_region
      %s1883 = ssub.s32 %s9, 2
      // Predicated region
      $region41: #{net_forward.28} parent=39 // pred_check
        %p1884 = pneg %p130
      $region42: #{net_forward.28} parent=39 // pred_check_branch
        %1886 = sbr.rel (%p1884) target = $region44
      $region43: #{net_forward.28} parent=39 // pred_region
        %s1887 = smul.u32 2, %s20
        %p1888 = scmp.lt.s32.totalorder %s1887, 3
        %s1889 = scalar_select %p1888, %s1887, 3
        %p1890 = scmp.lt.s32.totalorder %s21, 0
        %s1891 = scalar_select %p1890, %s21, 0
        %s1892 = sadd.s32 %s1891, %s1889
        %s1893 = smul.addr %s1892, 8
        %s1894 = scalar_lea.vmem %s3, %s1893
      $region44: #{net_forward.28} parent=39 // pred_fallthru
        _
    $region40: #{net_forward.28} parent=5 // pred_fallthru
      _
  $region6: #{net_forward.28} parent=0 // loop_footer
    %s13 = sadd.s32 1, %s9
  $region7: #{net_forward.28} parent=0 // loop_footer_branch
    %8 = sbr.rel target = $region3
  $region8: #{net_forward.28} parent=0 // loop_exit
    _

</llo_original>
